<compile_context>
chip_gen: v7x
topology: tpu7x:2x2x1
jax: 0.10.0
libtpu: 0.0.40
codegen_flags: <defaults>
</compile_context>

<pallas_src>
import functools

import jax
import jax.numpy as jnp
from jax.experimental import pallas as pl
from jax.experimental.pallas import tpu as pltpu


# ----------------------------------------------------------------------------
# Kernel: one grid step = G graphs packed block-diagonally (M = G*N rows).
# ----------------------------------------------------------------------------
def hgdc_kernel(adj_ref, x_ref, wg_ref, bias_ref, whead_ref, o_ref, *, m):
    f32 = jnp.float32
    bf16 = jnp.bfloat16
    M = m

    a1 = adj_ref[0]        # (M, M) bf16 block-diag normalized adjacency, rel 1
    a2 = adj_ref[1]        # (M, M) bf16 block-diag normalized adjacency, rel 2

    # R0 = relu(linear1(x)); kept zero-padded to 2H lanes (cols H:2H stay 0
    # because wg[0] cols H:2H and bias row 0 cols H:2H are zero).
    r = jnp.maximum(
        jnp.dot(x_ref[...], wg_ref[0], preferred_element_type=f32)
        + bias_ref[0:1, :], 0.0)                                    # (M, 2H) f32

    # Weighted residual head, accumulated eagerly (mix weights folded into
    # whead; only lane 0 of whead is meaningful).
    acc = jnp.dot(r.astype(bf16), whead_ref[0], preferred_element_type=f32)

    for l in (1, 2, 3):
        rb = r.astype(bf16)
        # Propagate first with both relations, then apply lane-extended
        # per-relation weights:
        #   R_l = (A1 @ R_{l-1}) @ [W_l1 | 0] + (A2 @ R_{l-1}) @ [0 | W_l2] + b
        # which equals concat(GCNConv_1, GCNConv_2) without any lane concat.
        p1 = jnp.dot(a1, rb, preferred_element_type=f32)            # (M, 2H)
        p2 = jnp.dot(a2, rb, preferred_element_type=f32)            # (M, 2H)
        r = (jnp.dot(p1.astype(bf16), wg_ref[2 * l - 1],
                     preferred_element_type=f32)
             + jnp.dot(p2.astype(bf16), wg_ref[2 * l],
                       preferred_element_type=f32)
             + bias_ref[l:l + 1, :])                                # (M, 2H) f32
        acc = acc + jnp.dot(r.astype(bf16), whead_ref[l],
                            preferred_element_type=f32)

    # Natural (M, 1) store: tiny HBM write, combined head bias folded in.
    o_ref[...] = acc[:, 0:1] + bias_ref[4:5, 0:1]


# ----------------------------------------------------------------------------
# Parameter packing (3 slabs: weights / biases / head weights)
# ----------------------------------------------------------------------------
def pack_params(p, hidden=32):
    H = hidden
    in_c = p['w_l1'].shape[0]
    assert in_c <= 2 * H, "in_channels must fit in the 2H feature pad"
    assert p['w_k2_1'].shape[0] == 2 * H and p['w_r1'].shape[0] == 2 * H

    # wg[0] = linear1 (padded); wg[2l-1] / wg[2l] = layer-l relation-1/2
    # weights, lane-extended: relation 1 writes cols :H, relation 2 cols H:.
    wg = jnp.zeros((7, 2 * H, 2 * H), jnp.float32)
    wg = wg.at[0, :in_c, :H].set(p['w_l1'])
    wg = wg.at[1, :H, :H].set(p['w_k1_1'])
    wg = wg.at[2, :H, H:].set(p['w_k1_2'])
    wg = wg.at[3, :, :H].set(p['w_k2_1'])
    wg = wg.at[4, :, H:].set(p['w_k2_2'])
    wg = wg.at[5, :, :H].set(p['w_k3_1'])
    wg = wg.at[6, :, H:].set(p['w_k3_2'])

    bias = jnp.zeros((5, 2 * H), jnp.float32)
    bias = bias.at[0, :H].set(p['b_l1'])
    bias = bias.at[1, :H].set(p['b_k1_1']).at[1, H:].set(p['b_k1_2'])
    bias = bias.at[2, :H].set(p['b_k2_1']).at[2, H:].set(p['b_k2_2'])
    bias = bias.at[3, :H].set(p['b_k3_1']).at[3, H:].set(p['b_k3_2'])
    mix = p['mix']
    head_bias = (mix[0] * p['b_r0'][0] + mix[1] * p['b_r1'][0]
                 + mix[2] * p['b_r2'][0] + mix[3] * p['b_r3'][0])
    bias = bias.at[4, 0].set(head_bias)

    # Head weights, mix-scaled, lane 0 meaningful (rest zero).
    whead = jnp.zeros((4, 2 * H, 2 * H), jnp.float32)
    whead = whead.at[0, :H, 0].set(mix[0] * p['w_r0'][:, 0])
    whead = whead.at[1, :, 0].set(mix[1] * p['w_r1'][:, 0])
    whead = whead.at[2, :, 0].set(mix[2] * p['w_r2'][:, 0])
    whead = whead.at[3, :, 0].set(mix[3] * p['w_r3'][:, 0])

    return wg.astype(jnp.bfloat16), bias, whead.astype(jnp.bfloat16)


# ----------------------------------------------------------------------------
# Graph preprocessing (block-diag packing, feature pad, bf16 cast — done once)
# ----------------------------------------------------------------------------
def preprocess_graphs(adj, x, *, hidden=32, graphs_per_step=4):
    """adj: (B, 2, N, N) normalized adjacencies f32; x: (B, N, in_c) f32.

    graphs_per_step (G): 4 matches the 256-deep v6e/v7x MXU at N=64; use 2 on
    v5e (128-deep MXU).  Keep B/G >= 2 so v7x megacore gets >= 2 grid steps.
    """
    B, _, N, _ = adj.shape
    in_c = x.shape[-1]
    G = max(1, min(graphs_per_step, B))
    pad = (-B) % G
    if pad:
        adj = jnp.concatenate([adj, jnp.zeros((pad, 2, N, N), adj.dtype)], 0)
        x = jnp.concatenate([x, jnp.zeros((pad, N, in_c), x.dtype)], 0)
    steps = (B + pad) // G
    M = G * N

    # Block-diagonal packing of G graphs per step (cross-graph blocks are 0).
    eye = jnp.eye(G, dtype=adj.dtype)
    bd = jnp.einsum('sgrij,gh->srgihj', adj.reshape(steps, G, 2, N, N), eye)
    adj_bd = bd.reshape(steps, 2, M, M).astype(jnp.bfloat16)

    # Zero-pad features to 2H lanes and pre-cast to bf16 (once, not per call).
    x_pad = jnp.zeros((steps, M, 2 * hidden), jnp.float32)
    x_pad = x_pad.at[:, :, :in_c].set(x.reshape(steps, M, in_c))
    return adj_bd, x_pad.astype(jnp.bfloat16), B, N


# ----------------------------------------------------------------------------
# Forward wrapper
# ----------------------------------------------------------------------------
def hgdc_forward(adj_bd, x_b, packed, *, num_graphs, nodes):
    wg, bias, whead = packed
    steps, _, M, _ = adj_bd.shape
    H2 = wg.shape[-1]

    kernel = functools.partial(hgdc_kernel, m=M)
    out = pl.pallas_call(
        kernel,
        out_shape=jax.ShapeDtypeStruct((steps, M, 1), jnp.float32),
        grid=(steps,),
        in_specs=[
            pl.BlockSpec((None, 2, M, M), lambda s: (s, 0, 0, 0)),
            pl.BlockSpec((None, M, H2), lambda s: (s, 0, 0)),
            pl.BlockSpec((7, H2, H2), lambda s: (0, 0, 0)),
            pl.BlockSpec((5, H2), lambda s: (0, 0)),
            pl.BlockSpec((4, H2, H2), lambda s: (0, 0, 0)),
        ],
        out_specs=pl.BlockSpec((None, M, 1), lambda s: (s, 0, 0)),
        compiler_params=pltpu.CompilerParams(
            dimension_semantics=("parallel",),
            vmem_limit_bytes=32 * 1024 * 1024,
        ),
    )(adj_bd, x_b, wg, bias, whead)
    return out.reshape(-1, nodes, 1)[:num_graphs]     # drop graph padding


# ----------------------------------------------------------------------------
# References
# ----------------------------------------------------------------------------
def hgdc_reference(a1, a2, x, p):
    """Full-f32 mirror of the PyTorch module forward (eval mode), one graph."""
    relu = jax.nn.relu
    r0 = relu(x @ p['w_l1'] + p['b_l1'])
    r1 = jnp.concatenate([a1 @ (r0 @ p['w_k1_1']) + p['b_k1_1'],
                          a2 @ (r0 @ p['w_k1_2']) + p['b_k1_2']], axis=1)
    r2 = jnp.concatenate([a1 @ (r1 @ p['w_k2_1']) + p['b_k2_1'],
                          a2 @ (r1 @ p['w_k2_2']) + p['b_k2_2']], axis=1)
    r3 = jnp.concatenate([a1 @ (r2 @ p['w_k3_1']) + p['b_k3_1'],
                          a2 @ (r2 @ p['w_k3_2']) + p['b_k3_2']], axis=1)
    return (p['mix'][0] * (r0 @ p['w_r0'] + p['b_r0'])
            + p['mix'][1] * (r1 @ p['w_r1'] + p['b_r1'])
            + p['mix'][2] * (r2 @ p['w_r2'] + p['b_r2'])
            + p['mix'][3] * (r3 @ p['w_r3'] + p['b_r3']))


def hgdc_reference_packed(adj_bd_s, x_s, wg, bias, whead, m):
    """Pure-JAX mirror of the kernel math (same packing / bf16 casts), one step."""
    f32, bf16 = jnp.float32, jnp.bfloat16
    M = m
    a1, a2 = adj_bd_s[0], adj_bd_s[1]
    r = jnp.maximum(
        jnp.dot(x_s, wg[0], preferred_element_type=f32) + bias[0:1, :], 0.0)
    acc = jnp.dot(r.astype(bf16), whead[0], preferred_element_type=f32)
    for l in (1, 2, 3):
        rb = r.astype(bf16)
        p1 = jnp.dot(a1, rb, preferred_element_type=f32)
        p2 = jnp.dot(a2, rb, preferred_element_type=f32)
        r = (jnp.dot(p1.astype(bf16), wg[2 * l - 1], preferred_element_type=f32)
             + jnp.dot(p2.astype(bf16), wg[2 * l], preferred_element_type=f32)
             + bias[l:l + 1, :])
        acc = acc + jnp.dot(r.astype(bf16), whead[l], preferred_element_type=f32)
    return acc[:, 0:1] + bias[4:5, 0:1]


# ----------------------------------------------------------------------------
# Demo / self-test
# ----------------------------------------------------------------------------
def _glorot(key, shape):
    fan_in, fan_out = shape
    limit = jnp.sqrt(6.0 / (fan_in + fan_out))
    return jax.random.uniform(key, shape, jnp.float32, -limit, limit)


def _normalize_adj(adj):
    deg = jnp.sum(adj, axis=-1)
    d = jnp.where(deg > 0, jax.lax.rsqrt(deg), 0.0)
    return adj * d[..., :, None] * d[..., None, :]


if __name__ == "__main__":
    B, N = 8, 64          # batch of graphs, nodes per graph
    IN_C, H = 16, 32      # in_channels, hidden_channels
    G = 4                 # graphs packed per grid step (M = G*N = 256)

    key = jax.random.PRNGKey(0)
    k_adj, k_x, k_par = jax.random.split(key, 3)

    # Two edge sets per graph: random symmetric graphs, no self loops
    # (add_self_loops=False), symmetrically normalized.
    raw = (jax.random.uniform(k_adj, (B, 2, N, N)) > 0.92).astype(jnp.float32)
    raw = jnp.maximum(raw, jnp.swapaxes(raw, -1, -2))
    raw = raw * (1.0 - jnp.eye(N, dtype=jnp.float32))
    adj = _normalize_adj(raw)                         # (B, 2, N, N)

    x = jax.random.normal(k_x, (B, N, IN_C), jnp.float32)

    # Deterministic parameters (glorot weights, small random biases).
    def lin(k, fin, fout):
        kw, kb = jax.random.split(k)
        return _glorot(kw, (fin, fout)), 0.1 * jax.random.normal(kb, (fout,), jnp.float32)

    ks = jax.random.split(k_par, 11)
    p = {}
    p['w_l1'], p['b_l1'] = lin(ks[0], IN_C, H)
    p['w_k1_1'], p['b_k1_1'] = lin(ks[1], H, H)
    p['w_k1_2'], p['b_k1_2'] = lin(ks[2], H, H)
    p['w_k2_1'], p['b_k2_1'] = lin(ks[3], 2 * H, H)
    p['w_k2_2'], p['b_k2_2'] = lin(ks[4], 2 * H, H)
    p['w_k3_1'], p['b_k3_1'] = lin(ks[5], 2 * H, H)
    p['w_k3_2'], p['b_k3_2'] = lin(ks[6], 2 * H, H)
    p['w_r0'], p['b_r0'] = lin(ks[7], H, 1)
    p['w_r1'], p['b_r1'] = lin(ks[8], 2 * H, 1)
    p['w_r2'], p['b_r2'] = lin(ks[9], 2 * H, 1)
    p['w_r3'], p['b_r3'] = lin(ks[10], 2 * H, 1)
    p['mix'] = jnp.array([0.95, 0.9, 0.15, 0.1], jnp.float32)

    packed = pack_params(p, hidden=H)
    adj_bd, x_b, n_graphs, nodes = preprocess_graphs(
        adj, x, hidden=H, graphs_per_step=G)

    out = hgdc_forward(adj_bd, x_b, packed, num_graphs=n_graphs, nodes=nodes)
    out = jax.block_until_ready(out)
    assert out.shape == (B, N, 1)

    wg, bias, whead = packed
    steps, _, M, _ = adj_bd.shape

    # Validation 1: exact math mirror (same packed bf16 operands) — tight.
    if B % G == 0:
        out_steps = out.reshape(steps, M, 1)
        for s in range(steps):
            ref_bf = hgdc_reference_packed(adj_bd[s], x_b[s], wg, bias, whead, M)
            assert jnp.allclose(out_steps[s], ref_bf, atol=1e-2, rtol=1e-2), \
                f"step {s}: mismatch vs packed-bf16 reference"

    # Validation 2: full-f32 module reference — loose (bf16 MXU operands,
    # adjacency quantized to bf16, error compounds over 3 layers).
    for b in range(B):
        ref_f32 = hgdc_reference(adj[b, 0], adj[b, 1], x[b], p)
        assert jnp.allclose(out[b], ref_f32, atol=2.5e-1, rtol=1e-1), \
            f"graph {b}: mismatch vs f32 module reference"

    print("KERNEL_OK")
</pallas_src>

<mosaic_0001>
module attributes {stable_mosaic.version = 11 : i64} {
  func.func @hgdc_kernel(%arg0: i32, %arg1: memref<1x2x256x256xbf16, #tpu.memory_space<vmem>>, %arg2: memref<1x256x64xbf16, #tpu.memory_space<vmem>>, %arg3: memref<7x64x64xbf16, #tpu.memory_space<vmem>>, %arg4: memref<5x64xf32, #tpu.memory_space<vmem>>, %arg5: memref<4x64x64xbf16, #tpu.memory_space<vmem>>, %arg6: memref<1x256x1xf32, #tpu.memory_space<vmem>>) attributes {dimension_semantics = [#tpu.dimension_semantics<parallel>], iteration_bounds = array<i64: 2>, scalar_prefetch = 0 : i64, scratch_operands = 0 : i64, tpu.core_type = #tpu.core_type<tc>, window_params = [{transform_indices = @transform_0, window_bounds = array<i64: 1, 2, 256, 256>}, {transform_indices = @transform_1, window_bounds = array<i64: 1, 256, 64>}, {pipeline_mode = #tpu.pipeline_mode<synchronous>, transform_indices = @transform_2, window_bounds = array<i64: 7, 64, 64>}, {pipeline_mode = #tpu.pipeline_mode<synchronous>, transform_indices = @transform_3, window_bounds = array<i64: 5, 64>}, {pipeline_mode = #tpu.pipeline_mode<synchronous>, transform_indices = @transform_4, window_bounds = array<i64: 4, 64, 64>}, {transform_indices = @transform_5, window_bounds = array<i64: 1, 256, 1>}]} {
    %c0 = arith.constant 0 : index
    %c0_0 = arith.constant 0 : index
    %c0_1 = arith.constant 0 : index
    %c0_2 = arith.constant 0 : index
    %0 = vector.load %arg1[%c0, %c0_0, %c0_1, %c0_2] : memref<1x2x256x256xbf16, #tpu.memory_space<vmem>>, vector<1x1x256x256xbf16>
    %1 = vector.shape_cast %0 : vector<1x1x256x256xbf16> to vector<256x256xbf16>
    %c0_3 = arith.constant 0 : index
    %c1 = arith.constant 1 : index
    %c0_4 = arith.constant 0 : index
    %c0_5 = arith.constant 0 : index
    %2 = vector.load %arg1[%c0_3, %c1, %c0_4, %c0_5] : memref<1x2x256x256xbf16, #tpu.memory_space<vmem>>, vector<1x1x256x256xbf16>
    %3 = vector.shape_cast %2 : vector<1x1x256x256xbf16> to vector<256x256xbf16>
    %c0_6 = arith.constant 0 : index
    %c0_7 = arith.constant 0 : index
    %c0_8 = arith.constant 0 : index
    %4 = vector.load %arg2[%c0_6, %c0_7, %c0_8] : memref<1x256x64xbf16, #tpu.memory_space<vmem>>, vector<1x256x64xbf16>
    %5 = vector.shape_cast %4 : vector<1x256x64xbf16> to vector<256x64xbf16>
    %c0_9 = arith.constant 0 : index
    %c0_10 = arith.constant 0 : index
    %c0_11 = arith.constant 0 : index
    %6 = vector.load %arg3[%c0_9, %c0_10, %c0_11] : memref<7x64x64xbf16, #tpu.memory_space<vmem>>, vector<1x64x64xbf16>
    %7 = vector.shape_cast %6 : vector<1x64x64xbf16> to vector<64x64xbf16>
    %cst = arith.constant dense<0.000000e+00> : vector<256x64xf32>
    %8 = tpu.matmul %5, %7, %cst {dimension_numbers = #tpu.dot_dimension_numbers<[1], [0], [0], [1], [0, 0, 1, 1], [], []>} : vector<256x64xbf16>, vector<64x64xbf16>, vector<256x64xf32> -> vector<256x64xf32>
    %c0_12 = arith.constant 0 : index
    %c0_13 = arith.constant 0 : index
    %9 = vector.load %arg4[%c0_12, %c0_13] : memref<5x64xf32, #tpu.memory_space<vmem>>, vector<1x64xf32>
    %10 = vector.broadcast %9 : vector<1x64xf32> to vector<256x64xf32>
    %11 = arith.addf %8, %10 : vector<256x64xf32>
    %cst_14 = arith.constant 0.000000e+00 : f32
    %12 = vector.broadcast %cst_14 : f32 to vector<256x64xf32>
    %13 = arith.maximumf %11, %12 : vector<256x64xf32>
    %14 = arith.truncf %13 : vector<256x64xf32> to vector<256x64xbf16>
    %c0_15 = arith.constant 0 : index
    %c0_16 = arith.constant 0 : index
    %c0_17 = arith.constant 0 : index
    %15 = vector.load %arg5[%c0_15, %c0_16, %c0_17] : memref<4x64x64xbf16, #tpu.memory_space<vmem>>, vector<1x64x64xbf16>
    %16 = vector.shape_cast %15 : vector<1x64x64xbf16> to vector<64x64xbf16>
    %cst_18 = arith.constant dense<0.000000e+00> : vector<256x64xf32>
    %17 = tpu.matmul %14, %16, %cst_18 {dimension_numbers = #tpu.dot_dimension_numbers<[1], [0], [0], [1], [0, 0, 1, 1], [], []>} : vector<256x64xbf16>, vector<64x64xbf16>, vector<256x64xf32> -> vector<256x64xf32>
    %18 = arith.truncf %13 : vector<256x64xf32> to vector<256x64xbf16>
    %cst_19 = arith.constant dense<0.000000e+00> : vector<256x64xf32>
    %19 = tpu.matmul %1, %18, %cst_19 {dimension_numbers = #tpu.dot_dimension_numbers<[1], [0], [0], [1], [0, 0, 1, 1], [], []>} : vector<256x256xbf16>, vector<256x64xbf16>, vector<256x64xf32> -> vector<256x64xf32>
    %cst_20 = arith.constant dense<0.000000e+00> : vector<256x64xf32>
    %20 = tpu.matmul %3, %18, %cst_20 {dimension_numbers = #tpu.dot_dimension_numbers<[1], [0], [0], [1], [0, 0, 1, 1], [], []>} : vector<256x256xbf16>, vector<256x64xbf16>, vector<256x64xf32> -> vector<256x64xf32>
    %21 = arith.truncf %19 : vector<256x64xf32> to vector<256x64xbf16>
    %c1_21 = arith.constant 1 : index
    %c0_22 = arith.constant 0 : index
    %c0_23 = arith.constant 0 : index
    %22 = vector.load %arg3[%c1_21, %c0_22, %c0_23] : memref<7x64x64xbf16, #tpu.memory_space<vmem>>, vector<1x64x64xbf16>
    %23 = vector.shape_cast %22 : vector<1x64x64xbf16> to vector<64x64xbf16>
    %cst_24 = arith.constant dense<0.000000e+00> : vector<256x64xf32>
    %24 = tpu.matmul %21, %23, %cst_24 {dimension_numbers = #tpu.dot_dimension_numbers<[1], [0], [0], [1], [0, 0, 1, 1], [], []>} : vector<256x64xbf16>, vector<64x64xbf16>, vector<256x64xf32> -> vector<256x64xf32>
    %25 = arith.truncf %20 : vector<256x64xf32> to vector<256x64xbf16>
    %c2 = arith.constant 2 : index
    %c0_25 = arith.constant 0 : index
    %c0_26 = arith.constant 0 : index
    %26 = vector.load %arg3[%c2, %c0_25, %c0_26] : memref<7x64x64xbf16, #tpu.memory_space<vmem>>, vector<1x64x64xbf16>
    %27 = vector.shape_cast %26 : vector<1x64x64xbf16> to vector<64x64xbf16>
    %cst_27 = arith.constant dense<0.000000e+00> : vector<256x64xf32>
    %28 = tpu.matmul %25, %27, %cst_27 {dimension_numbers = #tpu.dot_dimension_numbers<[1], [0], [0], [1], [0, 0, 1, 1], [], []>} : vector<256x64xbf16>, vector<64x64xbf16>, vector<256x64xf32> -> vector<256x64xf32>
    %29 = arith.addf %24, %28 : vector<256x64xf32>
    %c1_28 = arith.constant 1 : index
    %c0_29 = arith.constant 0 : index
    %30 = vector.load %arg4[%c1_28, %c0_29] : memref<5x64xf32, #tpu.memory_space<vmem>>, vector<1x64xf32>
    %31 = vector.broadcast %30 : vector<1x64xf32> to vector<256x64xf32>
    %32 = arith.addf %29, %31 : vector<256x64xf32>
    %33 = arith.truncf %32 : vector<256x64xf32> to vector<256x64xbf16>
    %c1_30 = arith.constant 1 : index
    %c0_31 = arith.constant 0 : index
    %c0_32 = arith.constant 0 : index
    %34 = vector.load %arg5[%c1_30, %c0_31, %c0_32] : memref<4x64x64xbf16, #tpu.memory_space<vmem>>, vector<1x64x64xbf16>
    %35 = vector.shape_cast %34 : vector<1x64x64xbf16> to vector<64x64xbf16>
    %cst_33 = arith.constant dense<0.000000e+00> : vector<256x64xf32>
    %36 = tpu.matmul %33, %35, %cst_33 {dimension_numbers = #tpu.dot_dimension_numbers<[1], [0], [0], [1], [0, 0, 1, 1], [], []>} : vector<256x64xbf16>, vector<64x64xbf16>, vector<256x64xf32> -> vector<256x64xf32>
    %37 = arith.addf %17, %36 : vector<256x64xf32>
    %38 = arith.truncf %32 : vector<256x64xf32> to vector<256x64xbf16>
    %cst_34 = arith.constant dense<0.000000e+00> : vector<256x64xf32>
    %39 = tpu.matmul %1, %38, %cst_34 {dimension_numbers = #tpu.dot_dimension_numbers<[1], [0], [0], [1], [0, 0, 1, 1], [], []>} : vector<256x256xbf16>, vector<256x64xbf16>, vector<256x64xf32> -> vector<256x64xf32>
    %cst_35 = arith.constant dense<0.000000e+00> : vector<256x64xf32>
    %40 = tpu.matmul %3, %38, %cst_35 {dimension_numbers = #tpu.dot_dimension_numbers<[1], [0], [0], [1], [0, 0, 1, 1], [], []>} : vector<256x256xbf16>, vector<256x64xbf16>, vector<256x64xf32> -> vector<256x64xf32>
    %41 = arith.truncf %39 : vector<256x64xf32> to vector<256x64xbf16>
    %c3 = arith.constant 3 : index
    %c0_36 = arith.constant 0 : index
    %c0_37 = arith.constant 0 : index
    %42 = vector.load %arg3[%c3, %c0_36, %c0_37] : memref<7x64x64xbf16, #tpu.memory_space<vmem>>, vector<1x64x64xbf16>
    %43 = vector.shape_cast %42 : vector<1x64x64xbf16> to vector<64x64xbf16>
    %cst_38 = arith.constant dense<0.000000e+00> : vector<256x64xf32>
    %44 = tpu.matmul %41, %43, %cst_38 {dimension_numbers = #tpu.dot_dimension_numbers<[1], [0], [0], [1], [0, 0, 1, 1], [], []>} : vector<256x64xbf16>, vector<64x64xbf16>, vector<256x64xf32> -> vector<256x64xf32>
    %45 = arith.truncf %40 : vector<256x64xf32> to vector<256x64xbf16>
    %c4 = arith.constant 4 : index
    %c0_39 = arith.constant 0 : index
    %c0_40 = arith.constant 0 : index
    %46 = vector.load %arg3[%c4, %c0_39, %c0_40] : memref<7x64x64xbf16, #tpu.memory_space<vmem>>, vector<1x64x64xbf16>
    %47 = vector.shape_cast %46 : vector<1x64x64xbf16> to vector<64x64xbf16>
    %cst_41 = arith.constant dense<0.000000e+00> : vector<256x64xf32>
    %48 = tpu.matmul %45, %47, %cst_41 {dimension_numbers = #tpu.dot_dimension_numbers<[1], [0], [0], [1], [0, 0, 1, 1], [], []>} : vector<256x64xbf16>, vector<64x64xbf16>, vector<256x64xf32> -> vector<256x64xf32>
    %49 = arith.addf %44, %48 : vector<256x64xf32>
    %c2_42 = arith.constant 2 : index
    %c0_43 = arith.constant 0 : index
    %50 = vector.load %arg4[%c2_42, %c0_43] : memref<5x64xf32, #tpu.memory_space<vmem>>, vector<1x64xf32>
    %51 = vector.broadcast %50 : vector<1x64xf32> to vector<256x64xf32>
    %52 = arith.addf %49, %51 : vector<256x64xf32>
    %53 = arith.truncf %52 : vector<256x64xf32> to vector<256x64xbf16>
    %c2_44 = arith.constant 2 : index
    %c0_45 = arith.constant 0 : index
    %c0_46 = arith.constant 0 : index
    %54 = vector.load %arg5[%c2_44, %c0_45, %c0_46] : memref<4x64x64xbf16, #tpu.memory_space<vmem>>, vector<1x64x64xbf16>
    %55 = vector.shape_cast %54 : vector<1x64x64xbf16> to vector<64x64xbf16>
    %cst_47 = arith.constant dense<0.000000e+00> : vector<256x64xf32>
    %56 = tpu.matmul %53, %55, %cst_47 {dimension_numbers = #tpu.dot_dimension_numbers<[1], [0], [0], [1], [0, 0, 1, 1], [], []>} : vector<256x64xbf16>, vector<64x64xbf16>, vector<256x64xf32> -> vector<256x64xf32>
    %57 = arith.addf %37, %56 : vector<256x64xf32>
    %58 = arith.truncf %52 : vector<256x64xf32> to vector<256x64xbf16>
    %cst_48 = arith.constant dense<0.000000e+00> : vector<256x64xf32>
    %59 = tpu.matmul %1, %58, %cst_48 {dimension_numbers = #tpu.dot_dimension_numbers<[1], [0], [0], [1], [0, 0, 1, 1], [], []>} : vector<256x256xbf16>, vector<256x64xbf16>, vector<256x64xf32> -> vector<256x64xf32>
    %cst_49 = arith.constant dense<0.000000e+00> : vector<256x64xf32>
    %60 = tpu.matmul %3, %58, %cst_49 {dimension_numbers = #tpu.dot_dimension_numbers<[1], [0], [0], [1], [0, 0, 1, 1], [], []>} : vector<256x256xbf16>, vector<256x64xbf16>, vector<256x64xf32> -> vector<256x64xf32>
    %61 = arith.truncf %59 : vector<256x64xf32> to vector<256x64xbf16>
    %c5 = arith.constant 5 : index
    %c0_50 = arith.constant 0 : index
    %c0_51 = arith.constant 0 : index
    %62 = vector.load %arg3[%c5, %c0_50, %c0_51] : memref<7x64x64xbf16, #tpu.memory_space<vmem>>, vector<1x64x64xbf16>
    %63 = vector.shape_cast %62 : vector<1x64x64xbf16> to vector<64x64xbf16>
    %cst_52 = arith.constant dense<0.000000e+00> : vector<256x64xf32>
    %64 = tpu.matmul %61, %63, %cst_52 {dimension_numbers = #tpu.dot_dimension_numbers<[1], [0], [0], [1], [0, 0, 1, 1], [], []>} : vector<256x64xbf16>, vector<64x64xbf16>, vector<256x64xf32> -> vector<256x64xf32>
    %65 = arith.truncf %60 : vector<256x64xf32> to vector<256x64xbf16>
    %c6 = arith.constant 6 : index
    %c0_53 = arith.constant 0 : index
    %c0_54 = arith.constant 0 : index
    %66 = vector.load %arg3[%c6, %c0_53, %c0_54] : memref<7x64x64xbf16, #tpu.memory_space<vmem>>, vector<1x64x64xbf16>
    %67 = vector.shape_cast %66 : vector<1x64x64xbf16> to vector<64x64xbf16>
    %cst_55 = arith.constant dense<0.000000e+00> : vector<256x64xf32>
    %68 = tpu.matmul %65, %67, %cst_55 {dimension_numbers = #tpu.dot_dimension_numbers<[1], [0], [0], [1], [0, 0, 1, 1], [], []>} : vector<256x64xbf16>, vector<64x64xbf16>, vector<256x64xf32> -> vector<256x64xf32>
    %69 = arith.addf %64, %68 : vector<256x64xf32>
    %c3_56 = arith.constant 3 : index
    %c0_57 = arith.constant 0 : index
    %70 = vector.load %arg4[%c3_56, %c0_57] : memref<5x64xf32, #tpu.memory_space<vmem>>, vector<1x64xf32>
    %71 = vector.broadcast %70 : vector<1x64xf32> to vector<256x64xf32>
    %72 = arith.addf %69, %71 : vector<256x64xf32>
    %73 = arith.truncf %72 : vector<256x64xf32> to vector<256x64xbf16>
    %c3_58 = arith.constant 3 : index
    %c0_59 = arith.constant 0 : index
    %c0_60 = arith.constant 0 : index
    %74 = vector.load %arg5[%c3_58, %c0_59, %c0_60] : memref<4x64x64xbf16, #tpu.memory_space<vmem>>, vector<1x64x64xbf16>
    %75 = vector.shape_cast %74 : vector<1x64x64xbf16> to vector<64x64xbf16>
    %cst_61 = arith.constant dense<0.000000e+00> : vector<256x64xf32>
    %76 = tpu.matmul %73, %75, %cst_61 {dimension_numbers = #tpu.dot_dimension_numbers<[1], [0], [0], [1], [0, 0, 1, 1], [], []>} : vector<256x64xbf16>, vector<64x64xbf16>, vector<256x64xf32> -> vector<256x64xf32>
    %77 = arith.addf %57, %76 : vector<256x64xf32>
    %78 = vector.extract_strided_slice %77 {offsets = [0, 0], sizes = [256, 1], strides = [1, 1]} : vector<256x64xf32> to vector<256x1xf32>
    %c4_62 = arith.constant 4 : index
    %c0_63 = arith.constant 0 : index
    %79 = vector.load %arg4[%c4_62, %c0_63] : memref<5x64xf32, #tpu.memory_space<vmem>>, vector<1x1xf32>
    %80 = vector.broadcast %79 : vector<1x1xf32> to vector<256x1xf32>
    %81 = arith.addf %78, %80 : vector<256x1xf32>
    %c0_64 = arith.constant 0 : index
    %c0_65 = arith.constant 0 : index
    %c0_66 = arith.constant 0 : index
    %82 = vector.load %arg6[%c0_64, %c0_65, %c0_66] : memref<1x256x1xf32, #tpu.memory_space<vmem>>, vector<1x256x1xf32>
    %83 = vector.shape_cast %82 : vector<1x256x1xf32> to vector<256x1xf32>
    %84 = vector.shape_cast %81 : vector<256x1xf32> to vector<1x256x1xf32>
    tpu.vector_store %arg6[%c0_64, %c0_65, %c0_66], %84 {strides = array<i32>} : memref<1x256x1xf32, #tpu.memory_space<vmem>>, vector<1x256x1xf32>,
    return
  }
  func.func @transform_0(%arg0: i32) -> (i32, i32, i32, i32) {
    %c0_i32 = arith.constant 0 : i32
    %c0_i32_0 = arith.constant 0 : i32
    %c0_i32_1 = arith.constant 0 : i32
    %c0_i32_2 = arith.constant 0 : i32
    return %arg0, %c0_i32, %c0_i32_0, %c0_i32_1 : i32, i32, i32, i32
  }
  func.func @transform_1(%arg0: i32) -> (i32, i32, i32) {
    %c0_i32 = arith.constant 0 : i32
    %c0_i32_0 = arith.constant 0 : i32
    %c0_i32_1 = arith.constant 0 : i32
    return %arg0, %c0_i32, %c0_i32_0 : i32, i32, i32
  }
  func.func @transform_2(%arg0: i32) -> (i32, i32, i32) {
    %c0_i32 = arith.constant 0 : i32
    %c0_i32_0 = arith.constant 0 : i32
    %c0_i32_1 = arith.constant 0 : i32
    %c0_i32_2 = arith.constant 0 : i32
    return %c0_i32, %c0_i32_0, %c0_i32_1 : i32, i32, i32
  }
  func.func @transform_3(%arg0: i32) -> (i32, i32) {
    %c0_i32 = arith.constant 0 : i32
    %c0_i32_0 = arith.constant 0 : i32
    %c0_i32_1 = arith.constant 0 : i32
    return %c0_i32, %c0_i32_0 : i32, i32
  }
  func.func @transform_4(%arg0: i32) -> (i32, i32, i32) {
    %c0_i32 = arith.constant 0 : i32
    %c0_i32_0 = arith.constant 0 : i32
    %c0_i32_1 = arith.constant 0 : i32
    %c0_i32_2 = arith.constant 0 : i32
    return %c0_i32, %c0_i32_0, %c0_i32_1 : i32, i32, i32
  }
  func.func @transform_5(%arg0: i32) -> (i32, i32, i32) {
    %c0_i32 = arith.constant 0 : i32
    %c0_i32_0 = arith.constant 0 : i32
    %c0_i32_1 = arith.constant 0 : i32
    return %arg0, %c0_i32, %c0_i32_0 : i32, i32, i32
  }
}

</mosaic_0001>

<llo_original>
// kernel: tpu_custom_call.1
$region0: #{tpu_custom_call.1}
  #allocation0 [shape = 'u32[]', space=smem, size = 0x4, offset = 0x4, fixed_abs, tag = 'smem constant byte address 0x4 - core index']
  #allocation1 [shape = 'u32[144,128]{1,0:T(1,128)}', space=vmem, size = 0x12000, scoped, tag = 'internal scratch']
  %s0 = inlined_call_operand.hbm [shape: bf16[2,2,256,256], index: 0, kind: input, shape index: {}]
  %s1 = inlined_call_operand.vmem [shape: bf16[2,256,64], index: 1, kind: input, shape index: {}]
  %s2 = inlined_call_operand.vmem [shape: bf16[7,64,64], index: 2, kind: input, shape index: {}]
  %s3 = inlined_call_operand.vmem [shape: f32[5,64], index: 3, kind: input, shape index: {}]
  %s4 = inlined_call_operand.vmem [shape: bf16[4,64,64], index: 4, kind: input, shape index: {}]
  %s5 = inlined_call_operand.vmem [shape: f32[2,256,1], index: 5, kind: output, shape index: {}]
  %s6 = sld [smem:[#allocation0]]
  $region57: #{tpu_custom_call.1} parent=0
    _
  %s8 = ssub.s32 1, %s6
  %s9 = scalar_select 0, %s8, %s6
  $region1: #{tpu_custom_call.1} parent=0
    #allocation2 [shape = 'u8[524288]{0}', space=vmem, size = 0x80000, scoped, tag = 'input window, operand 0']
    #allocation3 [shape = 's32[2]{0}', space=sflag, size = 0x8, scoped, tag = 'scoped memory for tpu_custom_call.1']
    %10 = vsyncpa [#allocation3], 0
    %s11 = scalar_lea.sflag [#allocation3], 1
    %12 = vsyncpa %s11, 0
    loop: start=0, step=1, limit=4
    $region2: #{tpu_custom_call.1} parent=1 // loop_pre_header
      _
    $region3: #{tpu_custom_call.1} parent=1 // loop_header
      %s14 = sphi 0, %s18
      %p15 = scmp.ge.s32.totalorder %s14, 4
      %s24 = sphi 0, %s26
      %s27 = sphi 0, %s24
      %s28 = sphi 0, %s27
      %s44 = sphi 0, %s28
      %s50 = sphi 0, %s52
      %s53 = sphi 0, %s50
      %s54 = sphi 0, %s53
      %s70 = sphi 0, %s54
      %s74 = sphi 0, %s74
      %s76 = sphi 0, %s74
      %s77 = sphi 0, %s76
      %s91 = sphi 0, %s77
      %s95 = sphi 0, %s95
      %s97 = sphi 0, %s95
      %s98 = sphi 0, %s97
      %s112 = sphi 0, %s98
      %s116 = sphi 0, %s116
      %s118 = sphi 0, %s116
      %s119 = sphi 0, %s118
      %s133 = sphi 0, %s119
      %s139 = sphi 0, %s141
      %s142 = sphi 0, %s139
      %s143 = sphi 0, %s142
      %s159 = sphi 0, %s143
    $region4: #{tpu_custom_call.1} parent=1 // loop_header_branch
      %17 = sbr.rel (%p15) target = $region8
    $region5: #{tpu_custom_call.1} parent=1 // loop_body
      %s19 = ssub.s32 %s14, 1
      %s20 = ssub.s32 %s14, 2
      %s21 = sadd.s32 %s14, 1
      %s22 = ssub.s32 %s14, %s21
      %p23 = scmp.eq.s32.totalorder %s22, 0
      %s25 = sadd.s32 %s24, 1
      %s26 = scalar_select %p23, %s24, %s25
      %p29 = pneg %p23
      %p30 = scmp.eq.s32.totalorder %s14, 1
      %p31 = por %p29, %p30
      %p32 = scmp.ne.s32.totalorder %s24, %s27
      %p33 = scmp.eq.s32.totalorder %s14, 0
      %p34 = por %p32, %p33
      %p35 = scmp.ne.s32.totalorder %s24, %s27
      %p36 = scmp.eq.s32.totalorder %s19, 1
      %p37 = por %p35, %p36
      %p38 = scmp.ne.s32.totalorder %s27, %s28
      %p39 = scmp.eq.s32.totalorder %s19, 0
      %p40 = por %p38, %p39
      %p41 = scmp.ne.s32.totalorder %s27, %s28
      %p42 = scmp.eq.s32.totalorder %s20, 1
      %p43 = por %p41, %p42
      %p45 = scmp.ne.s32.totalorder %s28, %s44
      %p46 = scmp.eq.s32.totalorder %s20, 0
      %p47 = por %p45, %p46
      %s48 = ssub.s32 %s14, %s21
      %p49 = scmp.eq.s32.totalorder %s48, 0
      %s51 = sadd.s32 %s50, 1
      %s52 = scalar_select %p49, %s50, %s51
      %p55 = pneg %p49
      %p56 = scmp.eq.s32.totalorder %s14, 1
      %p57 = por %p55, %p56
      %p58 = scmp.ne.s32.totalorder %s50, %s53
      %p59 = scmp.eq.s32.totalorder %s14, 0
      %p60 = por %p58, %p59
      %p61 = scmp.ne.s32.totalorder %s50, %s53
      %p62 = scmp.eq.s32.totalorder %s19, 1
      %p63 = por %p61, %p62
      %p64 = scmp.ne.s32.totalorder %s53, %s54
      %p65 = scmp.eq.s32.totalorder %s19, 0
      %p66 = por %p64, %p65
      %p67 = scmp.ne.s32.totalorder %s53, %s54
      %p68 = scmp.eq.s32.totalorder %s20, 1
      %p69 = por %p67, %p68
      %p71 = scmp.ne.s32.totalorder %s54, %s70
      %p72 = scmp.eq.s32.totalorder %s20, 0
      %p73 = por %p71, %p72
      %s75 = sadd.s32 %s74, 1
      %p78 = scmp.eq.s32.totalorder %s14, 1
      %p79 = scmp.ne.s32.totalorder %s74, %s76
      %p80 = scmp.eq.s32.totalorder %s14, 0
      %p81 = por %p79, %p80
      %p82 = scmp.ne.s32.totalorder %s74, %s76
      %p83 = scmp.eq.s32.totalorder %s19, 1
      %p84 = por %p82, %p83
      %p85 = scmp.ne.s32.totalorder %s76, %s77
      %p86 = scmp.eq.s32.totalorder %s19, 0
      %p87 = por %p85, %p86
      %p88 = scmp.ne.s32.totalorder %s76, %s77
      %p89 = scmp.eq.s32.totalorder %s20, 1
      %p90 = por %p88, %p89
      %p92 = scmp.ne.s32.totalorder %s77, %s91
      %p93 = scmp.eq.s32.totalorder %s20, 0
      %p94 = por %p92, %p93
      %s96 = sadd.s32 %s95, 1
      %p99 = scmp.eq.s32.totalorder %s14, 1
      %p100 = scmp.ne.s32.totalorder %s95, %s97
      %p101 = scmp.eq.s32.totalorder %s14, 0
      %p102 = por %p100, %p101
      %p103 = scmp.ne.s32.totalorder %s95, %s97
      %p104 = scmp.eq.s32.totalorder %s19, 1
      %p105 = por %p103, %p104
      %p106 = scmp.ne.s32.totalorder %s97, %s98
      %p107 = scmp.eq.s32.totalorder %s19, 0
      %p108 = por %p106, %p107
      %p109 = scmp.ne.s32.totalorder %s97, %s98
      %p110 = scmp.eq.s32.totalorder %s20, 1
      %p111 = por %p109, %p110
      %p113 = scmp.ne.s32.totalorder %s98, %s112
      %p114 = scmp.eq.s32.totalorder %s20, 0
      %p115 = por %p113, %p114
      %s117 = sadd.s32 %s116, 1
      %p120 = scmp.eq.s32.totalorder %s14, 1
      %p121 = scmp.ne.s32.totalorder %s116, %s118
      %p122 = scmp.eq.s32.totalorder %s14, 0
      %p123 = por %p121, %p122
      %p124 = scmp.ne.s32.totalorder %s116, %s118
      %p125 = scmp.eq.s32.totalorder %s19, 1
      %p126 = por %p124, %p125
      %p127 = scmp.ne.s32.totalorder %s118, %s119
      %p128 = scmp.eq.s32.totalorder %s19, 0
      %p129 = por %p127, %p128
      %p130 = scmp.ne.s32.totalorder %s118, %s119
      %p131 = scmp.eq.s32.totalorder %s20, 1
      %p132 = por %p130, %p131
      %p134 = scmp.ne.s32.totalorder %s119, %s133
      %p135 = scmp.eq.s32.totalorder %s20, 0
      %p136 = por %p134, %p135
      %s137 = ssub.s32 %s14, %s21
      %p138 = scmp.eq.s32.totalorder %s137, 0
      %s140 = sadd.s32 %s139, 1
      %s141 = scalar_select %p138, %s139, %s140
      %p144 = pneg %p138
      %p145 = scmp.eq.s32.totalorder %s14, 1
      %p146 = por %p144, %p145
      %p147 = scmp.ne.s32.totalorder %s139, %s142
      %p148 = scmp.eq.s32.totalorder %s14, 0
      %p149 = por %p147, %p148
      %p150 = scmp.ne.s32.totalorder %s139, %s142
      %p151 = scmp.eq.s32.totalorder %s19, 1
      %p152 = por %p150, %p151
      %p153 = scmp.ne.s32.totalorder %s142, %s143
      %p154 = scmp.eq.s32.totalorder %s19, 0
      %p155 = por %p153, %p154
      %p156 = scmp.ne.s32.totalorder %s142, %s143
      %p157 = scmp.eq.s32.totalorder %s20, 1
      %p158 = por %p156, %p157
      %p160 = scmp.ne.s32.totalorder %s143, %s159
      %p161 = scmp.eq.s32.totalorder %s20, 0
      %p162 = por %p160, %p161
      %p163 = scmp.le.s32.totalorder 1, %s14
      %p164 = scmp.lt.s32.totalorder %s14, 3
      %p165 = pnand %p163, %p164
      %p166 = pneg %p165
      // Predicated region
      $region9: #{tpu_custom_call.1} parent=5 // pred_check
        _
      $region10: #{tpu_custom_call.1} parent=5 // pred_check_branch
        %168 = sbr.rel (%p165) target = $region12
      $region11: #{tpu_custom_call.1} parent=5 // pred_region
        %s169 = ssub.s32 %s14, 1
        // Predicated region
        $region13: #{tpu_custom_call.1} parent=11 // pred_check
          %p170 = pneg %p87
        $region14: #{tpu_custom_call.1} parent=11 // pred_check_branch
          %172 = sbr.rel (%p170) target = $region16
        $region15: #{tpu_custom_call.1} parent=11 // pred_region
          _
        $region16: #{tpu_custom_call.1} parent=11 // pred_fallthru
          _
        // Predicated region
        $region17: #{tpu_custom_call.1} parent=11 // pred_check
          %p173 = pneg %p108
        $region18: #{tpu_custom_call.1} parent=11 // pred_check_branch
          %175 = sbr.rel (%p173) target = $region20
        $region19: #{tpu_custom_call.1} parent=11 // pred_region
          _
        $region20: #{tpu_custom_call.1} parent=11 // pred_fallthru
          _
        // Predicated region
        $region21: #{tpu_custom_call.1} parent=11 // pred_check
          %p176 = pneg %p129
        $region22: #{tpu_custom_call.1} parent=11 // pred_check_branch
          %178 = sbr.rel (%p176) target = $region24
        $region23: #{tpu_custom_call.1} parent=11 // pred_region
          _
        $region24: #{tpu_custom_call.1} parent=11 // pred_fallthru
          _
      $region12: #{tpu_custom_call.1} parent=5 // pred_fallthru
        _
      %p179 = scmp.lt.s32.totalorder %s14, 2
      // Predicated region
      $region25: #{tpu_custom_call.1} parent=5 // pred_check
        %p180 = pneg %p179
      $region26: #{tpu_custom_call.1} parent=5 // pred_check_branch
        %182 = sbr.rel (%p180) target = $region28
      $region27: #{tpu_custom_call.1} parent=5 // pred_region
        // Predicated region
        $region29: #{tpu_custom_call.1} parent=27 // pred_check
          %p183 = pneg %p34
        $region30: #{tpu_custom_call.1} parent=27 // pred_check_branch
          %185 = sbr.rel (%p183) target = $region32
        $region31: #{tpu_custom_call.1} parent=27 // pred_region
          %s186 = sand.u32 %s24, 1
          %s187 = scalar_lea.sflag [#allocation3], %s186
          %s188 = sand.u32 %s24, 1
          %s189 = smul.addr %s188, 512
          %s190 = scalar_lea.vmem [#allocation2], %s189
          %s192 = ssub.s32 8192, 8192
          %193 = vsyncadd %s187, %s192
          %s194 = smul.addr %s14, 128
          %s195 = smul.addr %s194, 64
          %s196 = scalar_lea.hbm %s0, %s195
          %s197 = sshll.u32 %s190, 4
          %s198 = int_to_ptr.vmem [resolvable:$true] %s197
          %203 = dma.hbm_to_vmem [thread:$0]  %s196, 8192, %s198, %s187, 128, 128, 8
        $region32: #{tpu_custom_call.1} parent=27 // pred_fallthru
          _
        // Predicated region
        $region33: #{tpu_custom_call.1} parent=27 // pred_check
          %p204 = pneg %p60
        $region34: #{tpu_custom_call.1} parent=27 // pred_check_branch
          %206 = sbr.rel (%p204) target = $region36
        $region35: #{tpu_custom_call.1} parent=27 // pred_region
          %p207 = scmp.lt.s32.totalorder %s14, 1
          %s208 = scalar_select %p207, %s14, 1
          %s209 = smul.addr %s208, 32
          %s210 = smul.addr %s209, 4
          %s211 = scalar_lea.vmem %s1, %s210
        $region36: #{tpu_custom_call.1} parent=27 // pred_fallthru
          _
      $region28: #{tpu_custom_call.1} parent=5 // pred_fallthru
        _
      %p212 = scmp.le.s32.totalorder 1, %s14
      %p213 = scmp.lt.s32.totalorder %s14, 3
      %p214 = pnand %p212, %p213
      %p215 = pneg %p214
      // Predicated region
      $region37: #{tpu_custom_call.1} parent=5 // pred_check
        _
      $region38: #{tpu_custom_call.1} parent=5 // pred_check_branch
        %217 = sbr.rel (%p214) target = $region40
      $region39: #{tpu_custom_call.1} parent=5 // pred_region
        %s218 = ssub.s32 %s14, 1
        %s219 = sand.u32 %s27, 1
        %s220 = scalar_lea.sflag [#allocation3], %s219
        %s221 = sand.u32 %s27, 1
        %s222 = smul.addr %s221, 512
        %s223 = scalar_lea.vmem [#allocation2], %s222
        // Predicated region
        $region41: #{tpu_custom_call.1} parent=39 // pred_check
          %p224 = pneg %p40
        $region42: #{tpu_custom_call.1} parent=39 // pred_check_branch
          %226 = sbr.rel (%p224) target = $region44
        $region43: #{tpu_custom_call.1} parent=39 // pred_region
          %227 = dma.done %s220, 8192
        $region44: #{tpu_custom_call.1} parent=39 // pred_fallthru
          _
        %s228 = sand.u32 %s27, 1
        %s229 = scalar_lea.sflag [#allocation3], %s228
        %s230 = sand.u32 %s27, 1
        %s231 = smul.addr %s230, 512
        %s232 = scalar_lea.vmem [#allocation2], %s231
        %p233 = pneg %p40
        %p234 = pneg %p37
        %p235 = scmp.lt.s32.totalorder %s19, 1
        %s236 = scalar_select %p235, %s19, 1
        %s237 = smul.addr %s236, 32
        %s238 = smul.addr %s237, 4
        %s239 = scalar_lea.vmem %s1, %s238
        %p240 = pneg %p66
        %p241 = pneg %p63
        %p242 = pneg %p87
        %p243 = pneg %p84
        %p244 = pneg %p108
        %p245 = pneg %p105
        %p246 = pneg %p129
        %p247 = pneg %p126
        %p248 = pneg %p155
        %p249 = pneg %p152
        %p250 = scmp.lt.s32.totalorder %s19, 1
        %s251 = scalar_select %p250, %s19, 1
        %s252 = smul.addr %s251, 32
        %s253 = smul.addr %s252, 8
        %s254 = scalar_lea.vmem %s5, %s253
        %p255 = scmp.lt.s32.totalorder %s19, 1
        %s256 = scalar_select %p255, %s19, 1
        %s257 = smul.addr %s256, 32
        %s258 = smul.addr %s257, 4
        %s259 = scalar_lea.vmem %s1, %s258
        %p260 = scmp.lt.s32.totalorder %s19, 1
        %s261 = scalar_select %p260, %s19, 1
        %s262 = smul.addr %s261, 32
        %s263 = smul.addr %s262, 8
        %s264 = scalar_lea.vmem %s5, %s263
        %v266 = vld [vmem:[%s223] sm:$0xff]
        %v267 = vld [vmem:[%s223 + $0x8] sm:$0xff]
        %v268 = vld [vmem:[%s223 + $0x10] sm:$0xff]
        %v269 = vld [vmem:[%s223 + $0x18] sm:$0xff]
        %v270 = vld [vmem:[%s223 + $0x20] sm:$0xff]
        %v271 = vld [vmem:[%s223 + $0x28] sm:$0xff]
        %v272 = vld [vmem:[%s223 + $0x30] sm:$0xff]
        %v273 = vld [vmem:[%s223 + $0x38] sm:$0xff]
        %v274 = vld [vmem:[%s223 + $0x40] sm:$0xff]
        %v275 = vld [vmem:[%s223 + $0x48] sm:$0xff]
        %v276 = vld [vmem:[%s223 + $0x50] sm:$0xff]
        %v277 = vld [vmem:[%s223 + $0x58] sm:$0xff]
        %v278 = vld [vmem:[%s223 + $0x60] sm:$0xff]
        %v279 = vld [vmem:[%s223 + $0x68] sm:$0xff]
        %v280 = vld [vmem:[%s223 + $0x70] sm:$0xff]
        %v281 = vld [vmem:[%s223 + $0x78] sm:$0xff]
        %v282 = vld [vmem:[%s223 + $0x80] sm:$0xff]
        %v283 = vld [vmem:[%s223 + $0x88] sm:$0xff]
        %v284 = vld [vmem:[%s223 + $0x90] sm:$0xff]
        %v285 = vld [vmem:[%s223 + $0x98] sm:$0xff]
        %v286 = vld [vmem:[%s223 + $0xa0] sm:$0xff]
        %v287 = vld [vmem:[%s223 + $0xa8] sm:$0xff]
        %v288 = vld [vmem:[%s223 + $0xb0] sm:$0xff]
        %v289 = vld [vmem:[%s223 + $0xb8] sm:$0xff]
        %v290 = vld [vmem:[%s223 + $0xc0] sm:$0xff]
        %v291 = vld [vmem:[%s223 + $0xc8] sm:$0xff]
        %v292 = vld [vmem:[%s223 + $0xd0] sm:$0xff]
        %v293 = vld [vmem:[%s223 + $0xd8] sm:$0xff]
        %v294 = vld [vmem:[%s223 + $0xe0] sm:$0xff]
        %v295 = vld [vmem:[%s223 + $0xe8] sm:$0xff]
        %v296 = vld [vmem:[%s223 + $0xf0] sm:$0xff]
        %v297 = vld [vmem:[%s223 + $0xf8] sm:$0xff]
        %s298 = scalar_lea.vmem %s223, 256 [#allocation2]
        %v299 = vld [vmem:[%s298] sm:$0xff]
        %v300 = vld [vmem:[%s298 + $0x8] sm:$0xff]
        %v301 = vld [vmem:[%s298 + $0x10] sm:$0xff]
        %v302 = vld [vmem:[%s298 + $0x18] sm:$0xff]
        %v303 = vld [vmem:[%s298 + $0x20] sm:$0xff]
        %v304 = vld [vmem:[%s298 + $0x28] sm:$0xff]
        %v305 = vld [vmem:[%s298 + $0x30] sm:$0xff]
        %v306 = vld [vmem:[%s298 + $0x38] sm:$0xff]
        %v307 = vld [vmem:[%s298 + $0x40] sm:$0xff]
        %v308 = vld [vmem:[%s298 + $0x48] sm:$0xff]
        %v309 = vld [vmem:[%s298 + $0x50] sm:$0xff]
        %v310 = vld [vmem:[%s298 + $0x58] sm:$0xff]
        %v311 = vld [vmem:[%s298 + $0x60] sm:$0xff]
        %v312 = vld [vmem:[%s298 + $0x68] sm:$0xff]
        %v313 = vld [vmem:[%s298 + $0x70] sm:$0xff]
        %v314 = vld [vmem:[%s298 + $0x78] sm:$0xff]
        %v315 = vld [vmem:[%s298 + $0x80] sm:$0xff]
        %v316 = vld [vmem:[%s298 + $0x88] sm:$0xff]
        %v317 = vld [vmem:[%s298 + $0x90] sm:$0xff]
        %v318 = vld [vmem:[%s298 + $0x98] sm:$0xff]
        %v319 = vld [vmem:[%s298 + $0xa0] sm:$0xff]
        %v320 = vld [vmem:[%s298 + $0xa8] sm:$0xff]
        %v321 = vld [vmem:[%s298 + $0xb0] sm:$0xff]
        %v322 = vld [vmem:[%s298 + $0xb8] sm:$0xff]
        %v323 = vld [vmem:[%s298 + $0xc0] sm:$0xff]
        %v324 = vld [vmem:[%s298 + $0xc8] sm:$0xff]
        %v325 = vld [vmem:[%s298 + $0xd0] sm:$0xff]
        %v326 = vld [vmem:[%s298 + $0xd8] sm:$0xff]
        %v327 = vld [vmem:[%s298 + $0xe0] sm:$0xff]
        %v328 = vld [vmem:[%s298 + $0xe8] sm:$0xff]
        %v329 = vld [vmem:[%s298 + $0xf0] sm:$0xff]
        %v330 = vld [vmem:[%s298 + $0xf8] sm:$0xff]
        %v331 = vld [vmem:[%s259] sm:$0xf]
        %v332 = vld [vmem:[%s259 + $0x4] sm:$0xf]
        %v333 = vld [vmem:[%s259 + $0x8] sm:$0xf]
        %v334 = vld [vmem:[%s259 + $0xc] sm:$0xf]
        %v335 = vld [vmem:[%s259 + $0x10] sm:$0xf]
        %v336 = vld [vmem:[%s259 + $0x14] sm:$0xf]
        %v337 = vld [vmem:[%s259 + $0x18] sm:$0xf]
        %v338 = vld [vmem:[%s259 + $0x1c] sm:$0xf]
        %v339 = vld [vmem:[%s259 + $0x20] sm:$0xf]
        %v340 = vld [vmem:[%s259 + $0x24] sm:$0xf]
        %v341 = vld [vmem:[%s259 + $0x28] sm:$0xf]
        %v342 = vld [vmem:[%s259 + $0x2c] sm:$0xf]
        %v343 = vld [vmem:[%s259 + $0x30] sm:$0xf]
        %v344 = vld [vmem:[%s259 + $0x34] sm:$0xf]
        %v345 = vld [vmem:[%s259 + $0x38] sm:$0xf]
        %v346 = vld [vmem:[%s259 + $0x3c] sm:$0xf]
        %v347 = vld [vmem:[%s259 + $0x40] sm:$0xf]
        %v348 = vld [vmem:[%s259 + $0x44] sm:$0xf]
        %v349 = vld [vmem:[%s259 + $0x48] sm:$0xf]
        %v350 = vld [vmem:[%s259 + $0x4c] sm:$0xf]
        %v351 = vld [vmem:[%s259 + $0x50] sm:$0xf]
        %v352 = vld [vmem:[%s259 + $0x54] sm:$0xf]
        %v353 = vld [vmem:[%s259 + $0x58] sm:$0xf]
        %v354 = vld [vmem:[%s259 + $0x5c] sm:$0xf]
        %v355 = vld [vmem:[%s259 + $0x60] sm:$0xf]
        %v356 = vld [vmem:[%s259 + $0x64] sm:$0xf]
        %v357 = vld [vmem:[%s259 + $0x68] sm:$0xf]
        %v358 = vld [vmem:[%s259 + $0x6c] sm:$0xf]
        %v359 = vld [vmem:[%s259 + $0x70] sm:$0xf]
        %v360 = vld [vmem:[%s259 + $0x74] sm:$0xf]
        %v361 = vld [vmem:[%s259 + $0x78] sm:$0xf]
        %v362 = vld [vmem:[%s259 + $0x7c] sm:$0xf]
        %v363 = vld [vmem:[%s2] sm:$0xf]
        %v364 = vld [vmem:[%s2 + $0x4] sm:$0xf]
        %v365 = vld [vmem:[%s2 + $0x8] sm:$0xf]
        %v366 = vld [vmem:[%s2 + $0xc] sm:$0xf]
        %v367 = vld [vmem:[%s2 + $0x10] sm:$0xf]
        %v368 = vld [vmem:[%s2 + $0x14] sm:$0xf]
        %v369 = vld [vmem:[%s2 + $0x18] sm:$0xf]
        %v370 = vld [vmem:[%s2 + $0x1c] sm:$0xf]
        %v371 = vld [vmem:[%s3] sm:$0x1]
        %v372 = vlaneseq
        %v373 = vshrl.u32 %v372, 7
        %v374 = vsub.s32 0, %v373
        %v375 = vrot.slane %v371, %v374
        %v408 = vunpack.c.l.b16 %v331
        %v409 = vunpack.c.l.b16 %v332
        %v410 = vunpack.c.l.b16 %v333
        %v411 = vunpack.c.l.b16 %v334
        %v412 = vunpack.c.l.b16 %v335
        %v413 = vunpack.c.l.b16 %v336
        %v414 = vunpack.c.l.b16 %v337
        %v415 = vunpack.c.l.b16 %v338
        %v416 = vunpack.c.l.b16 %v339
        %v417 = vunpack.c.l.b16 %v340
        %v418 = vunpack.c.l.b16 %v341
        %v419 = vunpack.c.l.b16 %v342
        %v420 = vunpack.c.l.b16 %v343
        %v421 = vunpack.c.l.b16 %v344
        %v422 = vunpack.c.l.b16 %v345
        %v423 = vunpack.c.l.b16 %v346
        %v424 = vunpack.c.l.b16 %v347
        %v425 = vunpack.c.l.b16 %v348
        %v426 = vunpack.c.l.b16 %v349
        %v427 = vunpack.c.l.b16 %v350
        %v428 = vunpack.c.l.b16 %v351
        %v429 = vunpack.c.l.b16 %v352
        %v430 = vunpack.c.l.b16 %v353
        %v431 = vunpack.c.l.b16 %v354
        %v432 = vunpack.c.l.b16 %v355
        %v433 = vunpack.c.l.b16 %v356
        %v434 = vunpack.c.l.b16 %v357
        %v435 = vunpack.c.l.b16 %v358
        %v436 = vunpack.c.l.b16 %v359
        %v437 = vunpack.c.l.b16 %v360
        %v438 = vunpack.c.l.b16 %v361
        %v439 = vunpack.c.l.b16 %v362
        %v440 = vpack.c.b16 %v409, %v408
        %v441 = vpack.c.b16 %v411, %v410
        %v442 = vpack.c.b16 %v413, %v412
        %v443 = vpack.c.b16 %v415, %v414
        %v444 = vpack.c.b16 %v417, %v416
        %v445 = vpack.c.b16 %v419, %v418
        %v446 = vpack.c.b16 %v421, %v420
        %v447 = vpack.c.b16 %v423, %v422
        %v448 = vpack.c.b16 %v425, %v424
        %v449 = vpack.c.b16 %v427, %v426
        %v450 = vpack.c.b16 %v429, %v428
        %v451 = vpack.c.b16 %v431, %v430
        %v452 = vpack.c.b16 %v433, %v432
        %v453 = vpack.c.b16 %v435, %v434
        %v454 = vpack.c.b16 %v437, %v436
        %v455 = vpack.c.b16 %v439, %v438
        %v464 = vunpack.c.l.b16 %v363
        %v465 = vunpack.c.l.b16 %v364
        %v466 = vunpack.c.l.b16 %v365
        %v467 = vunpack.c.l.b16 %v366
        %v468 = vunpack.c.l.b16 %v367
        %v469 = vunpack.c.l.b16 %v368
        %v470 = vunpack.c.l.b16 %v369
        %v471 = vunpack.c.l.b16 %v370
        %v472 = vpack.c.b16 %v465, %v464
        %v473 = vpack.c.b16 %v467, %v466
        %v474 = vpack.c.b16 %v469, %v468
        %v475 = vpack.c.b16 %v471, %v470
        %vm480 = vcmask 523264
        %v482 = vsel %vm480, %v440, 0
        %v485 = vsel %vm480, %v441, 0
        %v488 = vsel %vm480, %v442, 0
        %v491 = vsel %vm480, %v443, 0
        %v494 = vsel %vm480, %v444, 0
        %v497 = vsel %vm480, %v445, 0
        %v500 = vsel %vm480, %v446, 0
        %v503 = vsel %vm480, %v447, 0
        %v506 = vsel %vm480, %v448, 0
        %v509 = vsel %vm480, %v449, 0
        %v512 = vsel %vm480, %v450, 0
        %v515 = vsel %vm480, %v451, 0
        %v518 = vsel %vm480, %v452, 0
        %v521 = vsel %vm480, %v453, 0
        %v524 = vsel %vm480, %v454, 0
        %v527 = vsel %vm480, %v455, 0
        %529 = vmatprep.subr.bf16.mxu0 0
        %530 = vmatpush1.bf16.msra.mxu0 %v472
        %531 = vmatprep.subr.bf16.mxu0 0
        %532 = vmatpush1.bf16.msra.mxu0 %v473
        %533 = vmatprep.subr.bf16.mxu0 0
        %534 = vmatpush1.bf16.msra.mxu0 %v474
        %535 = vmatprep.subr.bf16.mxu0 0
        %536 = vmatpush1.bf16.msra.mxu0 %v475
        %537 = vmatprep.subr.bf16.mxu0 0
        %538 = vmatpush1.bf16.msra.mxu0 0
        %539 = vmatprep.subr.bf16.mxu0 0
        %540 = vmatpush1.bf16.msra.mxu0 0
        %541 = vmatprep.subr.bf16.mxu0 0
        %542 = vmatpush1.bf16.msra.mxu0 0
        %543 = vmatprep.subr.bf16.mxu0 0
        %544 = vmatpush1.bf16.msra.mxu0 0
        %545 = vmatprep.subr.bf16.mxu0 0
        %546 = vmatpush1.bf16.msra.mxu0 0
        %547 = vmatprep.subr.bf16.mxu0 0
        %548 = vmatpush1.bf16.msra.mxu0 0
        %549 = vmatprep.subr.bf16.mxu0 0
        %550 = vmatpush1.bf16.msra.mxu0 0
        %551 = vmatprep.subr.bf16.mxu0 0
        %552 = vmatpush1.bf16.msra.mxu0 0
        %553 = vmatprep.subr.bf16.mxu0 0
        %554 = vmatpush1.bf16.msra.mxu0 0
        %555 = vmatprep.subr.bf16.mxu0 0
        %556 = vmatpush1.bf16.msra.mxu0 0
        %557 = vmatprep.subr.bf16.mxu0 0
        %558 = vmatpush1.bf16.msra.mxu0 0
        %559 = vmatprep.subr.bf16.mxu0 0
        %560 = vmatpush1.bf16.msra.mxu0 0
        %561 = vmatprep.mubr.bf16.mxu0 0
        %562 = vmatmul.mubr.bf16.gmra.mrb[0].mxu0 %v482
        %v563 = vpop.f32.mrb[0].mxu0
        %v564 = vadd.f32 %v375, %v563
        %v565 = vpop.f32.mrb[0].mxu0
        %v566 = vpop.f32.mrb[0].mxu0
        %v567 = vadd.f32 %v375, %v566
        %v568 = vpop.f32.mrb[0].mxu0
        %569 = vmatprep.mubr.bf16.mxu0 0
        %570 = vmatmul.mubr.bf16.gmra.mrb[0].mxu0 %v485
        %v571 = vpop.f32.mrb[0].mxu0
        %v572 = vadd.f32 %v375, %v571
        %v573 = vpop.f32.mrb[0].mxu0
        %v574 = vpop.f32.mrb[0].mxu0
        %v575 = vadd.f32 %v375, %v574
        %v576 = vpop.f32.mrb[0].mxu0
        %577 = vmatprep.mubr.bf16.mxu0 0
        %578 = vmatmul.mubr.bf16.gmra.mrb[0].mxu0 %v488
        %v579 = vpop.f32.mrb[0].mxu0
        %v580 = vadd.f32 %v375, %v579
        %v581 = vpop.f32.mrb[0].mxu0
        %v582 = vpop.f32.mrb[0].mxu0
        %v583 = vadd.f32 %v375, %v582
        %v584 = vpop.f32.mrb[0].mxu0
        %585 = vmatprep.mubr.bf16.mxu0 0
        %586 = vmatmul.mubr.bf16.gmra.mrb[0].mxu0 %v491
        %v587 = vpop.f32.mrb[0].mxu0
        %v588 = vadd.f32 %v375, %v587
        %v589 = vpop.f32.mrb[0].mxu0
        %v590 = vpop.f32.mrb[0].mxu0
        %v591 = vadd.f32 %v375, %v590
        %v592 = vpop.f32.mrb[0].mxu0
        %593 = vmatprep.mubr.bf16.mxu0 0
        %594 = vmatmul.mubr.bf16.gmra.mrb[0].mxu0 %v494
        %v595 = vpop.f32.mrb[0].mxu0
        %v596 = vadd.f32 %v375, %v595
        %v597 = vpop.f32.mrb[0].mxu0
        %v598 = vpop.f32.mrb[0].mxu0
        %v599 = vadd.f32 %v375, %v598
        %v600 = vpop.f32.mrb[0].mxu0
        %601 = vmatprep.mubr.bf16.mxu0 0
        %602 = vmatmul.mubr.bf16.gmra.mrb[0].mxu0 %v497
        %v603 = vpop.f32.mrb[0].mxu0
        %v604 = vadd.f32 %v375, %v603
        %v605 = vpop.f32.mrb[0].mxu0
        %v606 = vpop.f32.mrb[0].mxu0
        %v607 = vadd.f32 %v375, %v606
        %v608 = vpop.f32.mrb[0].mxu0
        %609 = vmatprep.mubr.bf16.mxu0 0
        %610 = vmatmul.mubr.bf16.gmra.mrb[0].mxu0 %v500
        %v611 = vpop.f32.mrb[0].mxu0
        %v612 = vadd.f32 %v375, %v611
        %v613 = vpop.f32.mrb[0].mxu0
        %v614 = vpop.f32.mrb[0].mxu0
        %v615 = vadd.f32 %v375, %v614
        %v616 = vpop.f32.mrb[0].mxu0
        %617 = vmatprep.mubr.bf16.mxu0 0
        %618 = vmatmul.mubr.bf16.gmra.mrb[0].mxu0 %v503
        %v619 = vpop.f32.mrb[0].mxu0
        %v620 = vadd.f32 %v375, %v619
        %v621 = vpop.f32.mrb[0].mxu0
        %v622 = vpop.f32.mrb[0].mxu0
        %v623 = vadd.f32 %v375, %v622
        %v624 = vpop.f32.mrb[0].mxu0
        %625 = vmatprep.mubr.bf16.mxu0 0
        %626 = vmatmul.mubr.bf16.gmra.mrb[0].mxu0 %v506
        %v627 = vpop.f32.mrb[0].mxu0
        %v628 = vadd.f32 %v375, %v627
        %v629 = vpop.f32.mrb[0].mxu0
        %v630 = vpop.f32.mrb[0].mxu0
        %v631 = vadd.f32 %v375, %v630
        %v632 = vpop.f32.mrb[0].mxu0
        %633 = vmatprep.mubr.bf16.mxu0 0
        %634 = vmatmul.mubr.bf16.gmra.mrb[0].mxu0 %v509
        %v635 = vpop.f32.mrb[0].mxu0
        %v636 = vadd.f32 %v375, %v635
        %v637 = vpop.f32.mrb[0].mxu0
        %v638 = vpop.f32.mrb[0].mxu0
        %v639 = vadd.f32 %v375, %v638
        %v640 = vpop.f32.mrb[0].mxu0
        %641 = vmatprep.mubr.bf16.mxu0 0
        %642 = vmatmul.mubr.bf16.gmra.mrb[0].mxu0 %v512
        %v643 = vpop.f32.mrb[0].mxu0
        %v644 = vadd.f32 %v375, %v643
        %v645 = vpop.f32.mrb[0].mxu0
        %v646 = vpop.f32.mrb[0].mxu0
        %v647 = vadd.f32 %v375, %v646
        %v648 = vpop.f32.mrb[0].mxu0
        %649 = vmatprep.mubr.bf16.mxu0 0
        %650 = vmatmul.mubr.bf16.gmra.mrb[0].mxu0 %v515
        %v651 = vpop.f32.mrb[0].mxu0
        %v652 = vadd.f32 %v375, %v651
        %v653 = vpop.f32.mrb[0].mxu0
        %v654 = vpop.f32.mrb[0].mxu0
        %v655 = vadd.f32 %v375, %v654
        %v656 = vpop.f32.mrb[0].mxu0
        %657 = vmatprep.mubr.bf16.mxu0 0
        %658 = vmatmul.mubr.bf16.gmra.mrb[0].mxu0 %v518
        %v659 = vpop.f32.mrb[0].mxu0
        %v660 = vadd.f32 %v375, %v659
        %v661 = vpop.f32.mrb[0].mxu0
        %v662 = vpop.f32.mrb[0].mxu0
        %v663 = vadd.f32 %v375, %v662
        %v664 = vpop.f32.mrb[0].mxu0
        %665 = vmatprep.mubr.bf16.mxu0 0
        %666 = vmatmul.mubr.bf16.gmra.mrb[0].mxu0 %v521
        %v667 = vpop.f32.mrb[0].mxu0
        %v668 = vadd.f32 %v375, %v667
        %v669 = vpop.f32.mrb[0].mxu0
        %v670 = vpop.f32.mrb[0].mxu0
        %v671 = vadd.f32 %v375, %v670
        %v672 = vpop.f32.mrb[0].mxu0
        %673 = vmatprep.mubr.bf16.mxu0 0
        %674 = vmatmul.mubr.bf16.gmra.mrb[0].mxu0 %v524
        %v675 = vpop.f32.mrb[0].mxu0
        %v676 = vadd.f32 %v375, %v675
        %v677 = vpop.f32.mrb[0].mxu0
        %v678 = vpop.f32.mrb[0].mxu0
        %v679 = vadd.f32 %v375, %v678
        %v680 = vpop.f32.mrb[0].mxu0
        %681 = vmatprep.mubr.bf16.mxu0 0
        %682 = vmatmul.mubr.bf16.gmra.mrb[0].mxu0 %v527
        %v683 = vpop.f32.mrb[0].mxu0
        %v684 = vadd.f32 %v375, %v683
        %v685 = vpop.f32.mrb[0].mxu0
        %v686 = vpop.f32.mrb[0].mxu0
        %v687 = vadd.f32 %v375, %v686
        %v688 = vpop.f32.mrb[0].mxu0
        %689 = vdwg.mxu0
        %v690 = vmax.f32 %v564, 0.0
        %v691 = vmax.f32 %v567, 0.0
        %v692 = vmax.f32 %v572, 0.0
        %v693 = vmax.f32 %v575, 0.0
        %v694 = vmax.f32 %v580, 0.0
        %v695 = vmax.f32 %v583, 0.0
        %v696 = vmax.f32 %v588, 0.0
        %v697 = vmax.f32 %v591, 0.0
        %v698 = vmax.f32 %v596, 0.0
        %v699 = vmax.f32 %v599, 0.0
        %v700 = vmax.f32 %v604, 0.0
        %v701 = vmax.f32 %v607, 0.0
        %v702 = vmax.f32 %v612, 0.0
        %v703 = vmax.f32 %v615, 0.0
        %v704 = vmax.f32 %v620, 0.0
        %v705 = vmax.f32 %v623, 0.0
        %v706 = vmax.f32 %v628, 0.0
        %v707 = vmax.f32 %v631, 0.0
        %v708 = vmax.f32 %v636, 0.0
        %v709 = vmax.f32 %v639, 0.0
        %v710 = vmax.f32 %v644, 0.0
        %v711 = vmax.f32 %v647, 0.0
        %v712 = vmax.f32 %v652, 0.0
        %v713 = vmax.f32 %v655, 0.0
        %v714 = vmax.f32 %v660, 0.0
        %v715 = vmax.f32 %v663, 0.0
        %v716 = vmax.f32 %v668, 0.0
        %v717 = vmax.f32 %v671, 0.0
        %v718 = vmax.f32 %v676, 0.0
        %v719 = vmax.f32 %v679, 0.0
        %v720 = vmax.f32 %v684, 0.0
        %v721 = vmax.f32 %v687, 0.0
        %v722 = vpack.c.bf16 %v691, %v690
        %v723 = vpack.c.bf16 %v693, %v692
        %v724 = vpack.c.bf16 %v695, %v694
        %v725 = vpack.c.bf16 %v697, %v696
        %v726 = vpack.c.bf16 %v699, %v698
        %v727 = vpack.c.bf16 %v701, %v700
        %v728 = vpack.c.bf16 %v703, %v702
        %v729 = vpack.c.bf16 %v705, %v704
        %v730 = vpack.c.bf16 %v707, %v706
        %v731 = vpack.c.bf16 %v709, %v708
        %v732 = vpack.c.bf16 %v711, %v710
        %v733 = vpack.c.bf16 %v713, %v712
        %v734 = vpack.c.bf16 %v715, %v714
        %v735 = vpack.c.bf16 %v717, %v716
        %v736 = vpack.c.bf16 %v719, %v718
        %v737 = vpack.c.bf16 %v721, %v720
        %v738 = vld [vmem:[%s4] sm:$0xf]
        %v739 = vld [vmem:[%s4 + $0x4] sm:$0xf]
        %v740 = vld [vmem:[%s4 + $0x8] sm:$0xf]
        %v741 = vld [vmem:[%s4 + $0xc] sm:$0xf]
        %v742 = vld [vmem:[%s4 + $0x10] sm:$0xf]
        %v743 = vld [vmem:[%s4 + $0x14] sm:$0xf]
        %v744 = vld [vmem:[%s4 + $0x18] sm:$0xf]
        %v745 = vld [vmem:[%s4 + $0x1c] sm:$0xf]
        %v778 = vunpack.c.l.b16 %v266
        %v779 = vunpack.c.h.b16 %v266
        %v780 = vunpack.c.l.b16 %v267
        %v781 = vunpack.c.h.b16 %v267
        %v782 = vunpack.c.l.b16 %v268
        %v783 = vunpack.c.h.b16 %v268
        %v784 = vunpack.c.l.b16 %v269
        %v785 = vunpack.c.h.b16 %v269
        %v786 = vunpack.c.l.b16 %v270
        %v787 = vunpack.c.h.b16 %v270
        %v788 = vunpack.c.l.b16 %v271
        %v789 = vunpack.c.h.b16 %v271
        %v790 = vunpack.c.l.b16 %v272
        %v791 = vunpack.c.h.b16 %v272
        %v792 = vunpack.c.l.b16 %v273
        %v793 = vunpack.c.h.b16 %v273
        %v794 = vunpack.c.l.b16 %v274
        %v795 = vunpack.c.h.b16 %v274
        %v796 = vunpack.c.l.b16 %v275
        %v797 = vunpack.c.h.b16 %v275
        %v798 = vunpack.c.l.b16 %v276
        %v799 = vunpack.c.h.b16 %v276
        %v800 = vunpack.c.l.b16 %v277
        %v801 = vunpack.c.h.b16 %v277
        %v802 = vunpack.c.l.b16 %v278
        %v803 = vunpack.c.h.b16 %v278
        %v804 = vunpack.c.l.b16 %v279
        %v805 = vunpack.c.h.b16 %v279
        %v806 = vunpack.c.l.b16 %v280
        %v807 = vunpack.c.h.b16 %v280
        %v808 = vunpack.c.l.b16 %v281
        %v809 = vunpack.c.h.b16 %v281
        %v810 = vunpack.c.l.b16 %v282
        %v811 = vunpack.c.h.b16 %v282
        %v812 = vunpack.c.l.b16 %v283
        %v813 = vunpack.c.h.b16 %v283
        %v814 = vunpack.c.l.b16 %v284
        %v815 = vunpack.c.h.b16 %v284
        %v816 = vunpack.c.l.b16 %v285
        %v817 = vunpack.c.h.b16 %v285
        %v818 = vunpack.c.l.b16 %v286
        %v819 = vunpack.c.h.b16 %v286
        %v820 = vunpack.c.l.b16 %v287
        %v821 = vunpack.c.h.b16 %v287
        %v822 = vunpack.c.l.b16 %v288
        %v823 = vunpack.c.h.b16 %v288
        %v824 = vunpack.c.l.b16 %v289
        %v825 = vunpack.c.h.b16 %v289
        %v826 = vunpack.c.l.b16 %v290
        %v827 = vunpack.c.h.b16 %v290
        %v828 = vunpack.c.l.b16 %v291
        %v829 = vunpack.c.h.b16 %v291
        %v830 = vunpack.c.l.b16 %v292
        %v831 = vunpack.c.h.b16 %v292
        %v832 = vunpack.c.l.b16 %v293
        %v833 = vunpack.c.h.b16 %v293
        %v834 = vunpack.c.l.b16 %v294
        %v835 = vunpack.c.h.b16 %v294
        %v836 = vunpack.c.l.b16 %v295
        %v837 = vunpack.c.h.b16 %v295
        %v838 = vunpack.c.l.b16 %v296
        %v839 = vunpack.c.h.b16 %v296
        %v840 = vunpack.c.l.b16 %v297
        %v841 = vunpack.c.h.b16 %v297
        %v842 = vpack.c.b16 %v780, %v778
        %v843 = vpack.c.b16 %v781, %v779
        %v844 = vpack.c.b16 %v784, %v782
        %v845 = vpack.c.b16 %v785, %v783
        %v846 = vpack.c.b16 %v788, %v786
        %v847 = vpack.c.b16 %v789, %v787
        %v848 = vpack.c.b16 %v792, %v790
        %v849 = vpack.c.b16 %v793, %v791
        %v850 = vpack.c.b16 %v796, %v794
        %v851 = vpack.c.b16 %v797, %v795
        %v852 = vpack.c.b16 %v800, %v798
        %v853 = vpack.c.b16 %v801, %v799
        %v854 = vpack.c.b16 %v804, %v802
        %v855 = vpack.c.b16 %v805, %v803
        %v856 = vpack.c.b16 %v808, %v806
        %v857 = vpack.c.b16 %v809, %v807
        %v858 = vpack.c.b16 %v812, %v810
        %v859 = vpack.c.b16 %v813, %v811
        %v860 = vpack.c.b16 %v816, %v814
        %v861 = vpack.c.b16 %v817, %v815
        %v862 = vpack.c.b16 %v820, %v818
        %v863 = vpack.c.b16 %v821, %v819
        %v864 = vpack.c.b16 %v824, %v822
        %v865 = vpack.c.b16 %v825, %v823
        %v866 = vpack.c.b16 %v828, %v826
        %v867 = vpack.c.b16 %v829, %v827
        %v868 = vpack.c.b16 %v832, %v830
        %v869 = vpack.c.b16 %v833, %v831
        %v870 = vpack.c.b16 %v836, %v834
        %v871 = vpack.c.b16 %v837, %v835
        %v872 = vpack.c.b16 %v840, %v838
        %v873 = vpack.c.b16 %v841, %v839
        %906 = vmatprep.subr.bf16.mxu0 0
        %907 = vmatpush1.bf16.msra.mxu0 %v722
        %908 = vmatprep.subr.bf16.mxu0 0
        %909 = vmatpush1.bf16.msra.mxu0 %v723
        %910 = vmatprep.subr.bf16.mxu0 0
        %911 = vmatpush1.bf16.msra.mxu0 %v724
        %912 = vmatprep.subr.bf16.mxu0 0
        %913 = vmatpush1.bf16.msra.mxu0 %v725
        %914 = vmatprep.subr.bf16.mxu0 0
        %915 = vmatpush1.bf16.msra.mxu0 %v726
        %916 = vmatprep.subr.bf16.mxu0 0
        %917 = vmatpush1.bf16.msra.mxu0 %v727
        %918 = vmatprep.subr.bf16.mxu0 0
        %919 = vmatpush1.bf16.msra.mxu0 %v728
        %920 = vmatprep.subr.bf16.mxu0 0
        %921 = vmatpush1.bf16.msra.mxu0 %v729
        %922 = vmatprep.subr.bf16.mxu0 0
        %923 = vmatpush1.bf16.msra.mxu0 %v730
        %924 = vmatprep.subr.bf16.mxu0 0
        %925 = vmatpush1.bf16.msra.mxu0 %v731
        %926 = vmatprep.subr.bf16.mxu0 0
        %927 = vmatpush1.bf16.msra.mxu0 %v732
        %928 = vmatprep.subr.bf16.mxu0 0
        %929 = vmatpush1.bf16.msra.mxu0 %v733
        %930 = vmatprep.subr.bf16.mxu0 0
        %931 = vmatpush1.bf16.msra.mxu0 %v734
        %932 = vmatprep.subr.bf16.mxu0 0
        %933 = vmatpush1.bf16.msra.mxu0 %v735
        %934 = vmatprep.subr.bf16.mxu0 0
        %935 = vmatpush1.bf16.msra.mxu0 %v736
        %936 = vmatprep.subr.bf16.mxu0 0
        %937 = vmatpush1.bf16.msra.mxu0 %v737
        %938 = vmatprep.mubr.bf16.mxu0 %v843
        %939 = vmatmul.mubr.bf16.gmra.mrb[0].mxu0 %v842
        %v940 = vpop.f32.mrb[0].mxu0
        %v941 = vadd.f32 0.0, %v940
        %v942 = vpop.f32.mrb[0].mxu0
        %v943 = vpop.f32.mrb[0].mxu0
        %v944 = vadd.f32 0.0, %v943
        %v945 = vpop.f32.mrb[0].mxu0
        %946 = vmatprep.mubr.bf16.mxu0 %v845
        %947 = vmatmul.mubr.bf16.gmra.mrb[0].mxu0 %v844
        %v948 = vpop.f32.mrb[0].mxu0
        %v949 = vadd.f32 0.0, %v948
        %v950 = vpop.f32.mrb[0].mxu0
        %v951 = vpop.f32.mrb[0].mxu0
        %v952 = vadd.f32 0.0, %v951
        %v953 = vpop.f32.mrb[0].mxu0
        %954 = vmatprep.mubr.bf16.mxu0 %v847
        %955 = vmatmul.mubr.bf16.gmra.mrb[0].mxu0 %v846
        %v956 = vpop.f32.mrb[0].mxu0
        %v957 = vadd.f32 0.0, %v956
        %v958 = vpop.f32.mrb[0].mxu0
        %v959 = vpop.f32.mrb[0].mxu0
        %v960 = vadd.f32 0.0, %v959
        %v961 = vpop.f32.mrb[0].mxu0
        %962 = vmatprep.mubr.bf16.mxu0 %v849
        %963 = vmatmul.mubr.bf16.gmra.mrb[0].mxu0 %v848
        %v964 = vpop.f32.mrb[0].mxu0
        %v965 = vadd.f32 0.0, %v964
        %v966 = vpop.f32.mrb[0].mxu0
        %v967 = vpop.f32.mrb[0].mxu0
        %v968 = vadd.f32 0.0, %v967
        %v969 = vpop.f32.mrb[0].mxu0
        %970 = vmatprep.mubr.bf16.mxu0 %v851
        %971 = vmatmul.mubr.bf16.gmra.mrb[0].mxu0 %v850
        %v972 = vpop.f32.mrb[0].mxu0
        %v973 = vadd.f32 0.0, %v972
        %v974 = vpop.f32.mrb[0].mxu0
        %v975 = vpop.f32.mrb[0].mxu0
        %v976 = vadd.f32 0.0, %v975
        %v977 = vpop.f32.mrb[0].mxu0
        %978 = vmatprep.mubr.bf16.mxu0 %v853
        %979 = vmatmul.mubr.bf16.gmra.mrb[0].mxu0 %v852
        %v980 = vpop.f32.mrb[0].mxu0
        %v981 = vadd.f32 0.0, %v980
        %v982 = vpop.f32.mrb[0].mxu0
        %v983 = vpop.f32.mrb[0].mxu0
        %v984 = vadd.f32 0.0, %v983
        %v985 = vpop.f32.mrb[0].mxu0
        %986 = vmatprep.mubr.bf16.mxu0 %v855
        %987 = vmatmul.mubr.bf16.gmra.mrb[0].mxu0 %v854
        %v988 = vpop.f32.mrb[0].mxu0
        %v989 = vadd.f32 0.0, %v988
        %v990 = vpop.f32.mrb[0].mxu0
        %v991 = vpop.f32.mrb[0].mxu0
        %v992 = vadd.f32 0.0, %v991
        %v993 = vpop.f32.mrb[0].mxu0
        %994 = vmatprep.mubr.bf16.mxu0 %v857
        %995 = vmatmul.mubr.bf16.gmra.mrb[0].mxu0 %v856
        %v996 = vpop.f32.mrb[0].mxu0
        %v997 = vadd.f32 0.0, %v996
        %v998 = vpop.f32.mrb[0].mxu0
        %v999 = vpop.f32.mrb[0].mxu0
        %v1000 = vadd.f32 0.0, %v999
        %v1001 = vpop.f32.mrb[0].mxu0
        %1002 = vmatprep.mubr.bf16.mxu0 %v859
        %1003 = vmatmul.mubr.bf16.gmra.mrb[0].mxu0 %v858
        %v1004 = vpop.f32.mrb[0].mxu0
        %v1005 = vadd.f32 0.0, %v1004
        %v1006 = vpop.f32.mrb[0].mxu0
        %v1007 = vpop.f32.mrb[0].mxu0
        %v1008 = vadd.f32 0.0, %v1007
        %v1009 = vpop.f32.mrb[0].mxu0
        %1010 = vmatprep.mubr.bf16.mxu0 %v861
        %1011 = vmatmul.mubr.bf16.gmra.mrb[0].mxu0 %v860
        %v1012 = vpop.f32.mrb[0].mxu0
        %v1013 = vadd.f32 0.0, %v1012
        %v1014 = vpop.f32.mrb[0].mxu0
        %v1015 = vpop.f32.mrb[0].mxu0
        %v1016 = vadd.f32 0.0, %v1015
        %v1017 = vpop.f32.mrb[0].mxu0
        %1018 = vmatprep.mubr.bf16.mxu0 %v863
        %1019 = vmatmul.mubr.bf16.gmra.mrb[0].mxu0 %v862
        %v1020 = vpop.f32.mrb[0].mxu0
        %v1021 = vadd.f32 0.0, %v1020
        %v1022 = vpop.f32.mrb[0].mxu0
        %v1023 = vpop.f32.mrb[0].mxu0
        %v1024 = vadd.f32 0.0, %v1023
        %v1025 = vpop.f32.mrb[0].mxu0
        %1026 = vmatprep.mubr.bf16.mxu0 %v865
        %1027 = vmatmul.mubr.bf16.gmra.mrb[0].mxu0 %v864
        %v1028 = vpop.f32.mrb[0].mxu0
        %v1029 = vadd.f32 0.0, %v1028
        %v1030 = vpop.f32.mrb[0].mxu0
        %v1031 = vpop.f32.mrb[0].mxu0
        %v1032 = vadd.f32 0.0, %v1031
        %v1033 = vpop.f32.mrb[0].mxu0
        %1034 = vmatprep.mubr.bf16.mxu0 %v867
        %1035 = vmatmul.mubr.bf16.gmra.mrb[0].mxu0 %v866
        %v1036 = vpop.f32.mrb[0].mxu0
        %v1037 = vadd.f32 0.0, %v1036
        %v1038 = vpop.f32.mrb[0].mxu0
        %v1039 = vpop.f32.mrb[0].mxu0
        %v1040 = vadd.f32 0.0, %v1039
        %v1041 = vpop.f32.mrb[0].mxu0
        %1042 = vmatprep.mubr.bf16.mxu0 %v869
        %1043 = vmatmul.mubr.bf16.gmra.mrb[0].mxu0 %v868
        %v1044 = vpop.f32.mrb[0].mxu0
        %v1045 = vadd.f32 0.0, %v1044
        %v1046 = vpop.f32.mrb[0].mxu0
        %v1047 = vpop.f32.mrb[0].mxu0
        %v1048 = vadd.f32 0.0, %v1047
        %v1049 = vpop.f32.mrb[0].mxu0
        %1050 = vmatprep.mubr.bf16.mxu0 %v871
        %1051 = vmatmul.mubr.bf16.gmra.mrb[0].mxu0 %v870
        %v1052 = vpop.f32.mrb[0].mxu0
        %v1053 = vadd.f32 0.0, %v1052
        %v1054 = vpop.f32.mrb[0].mxu0
        %v1055 = vpop.f32.mrb[0].mxu0
        %v1056 = vadd.f32 0.0, %v1055
        %v1057 = vpop.f32.mrb[0].mxu0
        %1058 = vmatprep.mubr.bf16.mxu0 %v873
        %1059 = vmatmul.mubr.bf16.gmra.mrb[0].mxu0 %v872
        %v1060 = vpop.f32.mrb[0].mxu0
        %v1061 = vadd.f32 0.0, %v1060
        %v1062 = vpop.f32.mrb[0].mxu0
        %v1063 = vpop.f32.mrb[0].mxu0
        %v1064 = vadd.f32 0.0, %v1063
        %v1065 = vpop.f32.mrb[0].mxu0
        %1066 = vdwg.mxu0
        %v1099 = vunpack.c.l.b16 %v299
        %v1100 = vunpack.c.h.b16 %v299
        %v1101 = vunpack.c.l.b16 %v300
        %v1102 = vunpack.c.h.b16 %v300
        %v1103 = vunpack.c.l.b16 %v301
        %v1104 = vunpack.c.h.b16 %v301
        %v1105 = vunpack.c.l.b16 %v302
        %v1106 = vunpack.c.h.b16 %v302
        %v1107 = vunpack.c.l.b16 %v303
        %v1108 = vunpack.c.h.b16 %v303
        %v1109 = vunpack.c.l.b16 %v304
        %v1110 = vunpack.c.h.b16 %v304
        %v1111 = vunpack.c.l.b16 %v305
        %v1112 = vunpack.c.h.b16 %v305
        %v1113 = vunpack.c.l.b16 %v306
        %v1114 = vunpack.c.h.b16 %v306
        %v1115 = vunpack.c.l.b16 %v307
        %v1116 = vunpack.c.h.b16 %v307
        %v1117 = vunpack.c.l.b16 %v308
        %v1118 = vunpack.c.h.b16 %v308
        %v1119 = vunpack.c.l.b16 %v309
        %v1120 = vunpack.c.h.b16 %v309
        %v1121 = vunpack.c.l.b16 %v310
        %v1122 = vunpack.c.h.b16 %v310
        %v1123 = vunpack.c.l.b16 %v311
        %v1124 = vunpack.c.h.b16 %v311
        %v1125 = vunpack.c.l.b16 %v312
        %v1126 = vunpack.c.h.b16 %v312
        %v1127 = vunpack.c.l.b16 %v313
        %v1128 = vunpack.c.h.b16 %v313
        %v1129 = vunpack.c.l.b16 %v314
        %v1130 = vunpack.c.h.b16 %v314
        %v1131 = vunpack.c.l.b16 %v315
        %v1132 = vunpack.c.h.b16 %v315
        %v1133 = vunpack.c.l.b16 %v316
        %v1134 = vunpack.c.h.b16 %v316
        %v1135 = vunpack.c.l.b16 %v317
        %v1136 = vunpack.c.h.b16 %v317
        %v1137 = vunpack.c.l.b16 %v318
        %v1138 = vunpack.c.h.b16 %v318
        %v1139 = vunpack.c.l.b16 %v319
        %v1140 = vunpack.c.h.b16 %v319
        %v1141 = vunpack.c.l.b16 %v320
        %v1142 = vunpack.c.h.b16 %v320
        %v1143 = vunpack.c.l.b16 %v321
        %v1144 = vunpack.c.h.b16 %v321
        %v1145 = vunpack.c.l.b16 %v322
        %v1146 = vunpack.c.h.b16 %v322
        %v1147 = vunpack.c.l.b16 %v323
        %v1148 = vunpack.c.h.b16 %v323
        %v1149 = vunpack.c.l.b16 %v324
        %v1150 = vunpack.c.h.b16 %v324
        %v1151 = vunpack.c.l.b16 %v325
        %v1152 = vunpack.c.h.b16 %v325
        %v1153 = vunpack.c.l.b16 %v326
        %v1154 = vunpack.c.h.b16 %v326
        %v1155 = vunpack.c.l.b16 %v327
        %v1156 = vunpack.c.h.b16 %v327
        %v1157 = vunpack.c.l.b16 %v328
        %v1158 = vunpack.c.h.b16 %v328
        %v1159 = vunpack.c.l.b16 %v329
        %v1160 = vunpack.c.h.b16 %v329
        %v1161 = vunpack.c.l.b16 %v330
        %v1162 = vunpack.c.h.b16 %v330
        %v1163 = vpack.c.b16 %v1101, %v1099
        %v1164 = vpack.c.b16 %v1102, %v1100
        %v1165 = vpack.c.b16 %v1105, %v1103
        %v1166 = vpack.c.b16 %v1106, %v1104
        %v1167 = vpack.c.b16 %v1109, %v1107
        %v1168 = vpack.c.b16 %v1110, %v1108
        %v1169 = vpack.c.b16 %v1113, %v1111
        %v1170 = vpack.c.b16 %v1114, %v1112
        %v1171 = vpack.c.b16 %v1117, %v1115
        %v1172 = vpack.c.b16 %v1118, %v1116
        %v1173 = vpack.c.b16 %v1121, %v1119
        %v1174 = vpack.c.b16 %v1122, %v1120
        %v1175 = vpack.c.b16 %v1125, %v1123
        %v1176 = vpack.c.b16 %v1126, %v1124
        %v1177 = vpack.c.b16 %v1129, %v1127
        %v1178 = vpack.c.b16 %v1130, %v1128
        %v1179 = vpack.c.b16 %v1133, %v1131
        %v1180 = vpack.c.b16 %v1134, %v1132
        %v1181 = vpack.c.b16 %v1137, %v1135
        %v1182 = vpack.c.b16 %v1138, %v1136
        %v1183 = vpack.c.b16 %v1141, %v1139
        %v1184 = vpack.c.b16 %v1142, %v1140
        %v1185 = vpack.c.b16 %v1145, %v1143
        %v1186 = vpack.c.b16 %v1146, %v1144
        %v1187 = vpack.c.b16 %v1149, %v1147
        %v1188 = vpack.c.b16 %v1150, %v1148
        %v1189 = vpack.c.b16 %v1153, %v1151
        %v1190 = vpack.c.b16 %v1154, %v1152
        %v1191 = vpack.c.b16 %v1157, %v1155
        %v1192 = vpack.c.b16 %v1158, %v1156
        %v1193 = vpack.c.b16 %v1161, %v1159
        %v1194 = vpack.c.b16 %v1162, %v1160
        %1227 = vmatprep.subr.bf16.mxu0 0
        %1228 = vmatpush1.bf16.msra.mxu0 %v722
        %1229 = vmatprep.subr.bf16.mxu0 0
        %1230 = vmatpush1.bf16.msra.mxu0 %v723
        %1231 = vmatprep.subr.bf16.mxu0 0
        %1232 = vmatpush1.bf16.msra.mxu0 %v724
        %1233 = vmatprep.subr.bf16.mxu0 0
        %1234 = vmatpush1.bf16.msra.mxu0 %v725
        %1235 = vmatprep.subr.bf16.mxu0 0
        %1236 = vmatpush1.bf16.msra.mxu0 %v726
        %1237 = vmatprep.subr.bf16.mxu0 0
        %1238 = vmatpush1.bf16.msra.mxu0 %v727
        %1239 = vmatprep.subr.bf16.mxu0 0
        %1240 = vmatpush1.bf16.msra.mxu0 %v728
        %1241 = vmatprep.subr.bf16.mxu0 0
        %1242 = vmatpush1.bf16.msra.mxu0 %v729
        %1243 = vmatprep.subr.bf16.mxu0 0
        %1244 = vmatpush1.bf16.msra.mxu0 %v730
        %1245 = vmatprep.subr.bf16.mxu0 0
        %1246 = vmatpush1.bf16.msra.mxu0 %v731
        %1247 = vmatprep.subr.bf16.mxu0 0
        %1248 = vmatpush1.bf16.msra.mxu0 %v732
        %1249 = vmatprep.subr.bf16.mxu0 0
        %1250 = vmatpush1.bf16.msra.mxu0 %v733
        %1251 = vmatprep.subr.bf16.mxu0 0
        %1252 = vmatpush1.bf16.msra.mxu0 %v734
        %1253 = vmatprep.subr.bf16.mxu0 0
        %1254 = vmatpush1.bf16.msra.mxu0 %v735
        %1255 = vmatprep.subr.bf16.mxu0 0
        %1256 = vmatpush1.bf16.msra.mxu0 %v736
        %1257 = vmatprep.subr.bf16.mxu0 0
        %1258 = vmatpush1.bf16.msra.mxu0 %v737
        %1259 = vmatprep.mubr.bf16.mxu0 %v1164
        %1260 = vmatmul.mubr.bf16.gmra.mrb[0].mxu0 %v1163
        %v1261 = vpop.f32.mrb[0].mxu0
        %v1262 = vadd.f32 0.0, %v1261
        %v1263 = vpop.f32.mrb[0].mxu0
        %v1264 = vpop.f32.mrb[0].mxu0
        %v1265 = vadd.f32 0.0, %v1264
        %v1266 = vpop.f32.mrb[0].mxu0
        %1267 = vmatprep.mubr.bf16.mxu0 %v1166
        %1268 = vmatmul.mubr.bf16.gmra.mrb[0].mxu0 %v1165
        %v1269 = vpop.f32.mrb[0].mxu0
        %v1270 = vadd.f32 0.0, %v1269
        %v1271 = vpop.f32.mrb[0].mxu0
        %v1272 = vpop.f32.mrb[0].mxu0
        %v1273 = vadd.f32 0.0, %v1272
        %v1274 = vpop.f32.mrb[0].mxu0
        %1275 = vmatprep.mubr.bf16.mxu0 %v1168
        %1276 = vmatmul.mubr.bf16.gmra.mrb[0].mxu0 %v1167
        %v1277 = vpop.f32.mrb[0].mxu0
        %v1278 = vadd.f32 0.0, %v1277
        %v1279 = vpop.f32.mrb[0].mxu0
        %v1280 = vpop.f32.mrb[0].mxu0
        %v1281 = vadd.f32 0.0, %v1280
        %v1282 = vpop.f32.mrb[0].mxu0
        %1283 = vmatprep.mubr.bf16.mxu0 %v1170
        %1284 = vmatmul.mubr.bf16.gmra.mrb[0].mxu0 %v1169
        %v1285 = vpop.f32.mrb[0].mxu0
        %v1286 = vadd.f32 0.0, %v1285
        %v1287 = vpop.f32.mrb[0].mxu0
        %v1288 = vpop.f32.mrb[0].mxu0
        %v1289 = vadd.f32 0.0, %v1288
        %v1290 = vpop.f32.mrb[0].mxu0
        %1291 = vmatprep.mubr.bf16.mxu0 %v1172
        %1292 = vmatmul.mubr.bf16.gmra.mrb[0].mxu0 %v1171
        %v1293 = vpop.f32.mrb[0].mxu0
        %v1294 = vadd.f32 0.0, %v1293
        %v1295 = vpop.f32.mrb[0].mxu0
        %v1296 = vpop.f32.mrb[0].mxu0
        %v1297 = vadd.f32 0.0, %v1296
        %v1298 = vpop.f32.mrb[0].mxu0
        %1299 = vmatprep.mubr.bf16.mxu0 %v1174
        %1300 = vmatmul.mubr.bf16.gmra.mrb[0].mxu0 %v1173
        %v1301 = vpop.f32.mrb[0].mxu0
        %v1302 = vadd.f32 0.0, %v1301
        %v1303 = vpop.f32.mrb[0].mxu0
        %v1304 = vpop.f32.mrb[0].mxu0
        %v1305 = vadd.f32 0.0, %v1304
        %v1306 = vpop.f32.mrb[0].mxu0
        %1307 = vmatprep.mubr.bf16.mxu0 %v1176
        %1308 = vmatmul.mubr.bf16.gmra.mrb[0].mxu0 %v1175
        %v1309 = vpop.f32.mrb[0].mxu0
        %v1310 = vadd.f32 0.0, %v1309
        %v1311 = vpop.f32.mrb[0].mxu0
        %v1312 = vpop.f32.mrb[0].mxu0
        %v1313 = vadd.f32 0.0, %v1312
        %v1314 = vpop.f32.mrb[0].mxu0
        %1315 = vmatprep.mubr.bf16.mxu0 %v1178
        %1316 = vmatmul.mubr.bf16.gmra.mrb[0].mxu0 %v1177
        %v1317 = vpop.f32.mrb[0].mxu0
        %v1318 = vadd.f32 0.0, %v1317
        %v1319 = vpop.f32.mrb[0].mxu0
        %v1320 = vpop.f32.mrb[0].mxu0
        %v1321 = vadd.f32 0.0, %v1320
        %v1322 = vpop.f32.mrb[0].mxu0
        %1323 = vmatprep.mubr.bf16.mxu0 %v1180
        %1324 = vmatmul.mubr.bf16.gmra.mrb[0].mxu0 %v1179
        %v1325 = vpop.f32.mrb[0].mxu0
        %v1326 = vadd.f32 0.0, %v1325
        %v1327 = vpop.f32.mrb[0].mxu0
        %v1328 = vpop.f32.mrb[0].mxu0
        %v1329 = vadd.f32 0.0, %v1328
        %v1330 = vpop.f32.mrb[0].mxu0
        %1331 = vmatprep.mubr.bf16.mxu0 %v1182
        %1332 = vmatmul.mubr.bf16.gmra.mrb[0].mxu0 %v1181
        %v1333 = vpop.f32.mrb[0].mxu0
        %v1334 = vadd.f32 0.0, %v1333
        %v1335 = vpop.f32.mrb[0].mxu0
        %v1336 = vpop.f32.mrb[0].mxu0
        %v1337 = vadd.f32 0.0, %v1336
        %v1338 = vpop.f32.mrb[0].mxu0
        %1339 = vmatprep.mubr.bf16.mxu0 %v1184
        %1340 = vmatmul.mubr.bf16.gmra.mrb[0].mxu0 %v1183
        %v1341 = vpop.f32.mrb[0].mxu0
        %v1342 = vadd.f32 0.0, %v1341
        %v1343 = vpop.f32.mrb[0].mxu0
        %v1344 = vpop.f32.mrb[0].mxu0
        %v1345 = vadd.f32 0.0, %v1344
        %v1346 = vpop.f32.mrb[0].mxu0
        %1347 = vmatprep.mubr.bf16.mxu0 %v1186
        %1348 = vmatmul.mubr.bf16.gmra.mrb[0].mxu0 %v1185
        %v1349 = vpop.f32.mrb[0].mxu0
        %v1350 = vadd.f32 0.0, %v1349
        %v1351 = vpop.f32.mrb[0].mxu0
        %v1352 = vpop.f32.mrb[0].mxu0
        %v1353 = vadd.f32 0.0, %v1352
        %v1354 = vpop.f32.mrb[0].mxu0
        %1355 = vmatprep.mubr.bf16.mxu0 %v1188
        %1356 = vmatmul.mubr.bf16.gmra.mrb[0].mxu0 %v1187
        %v1357 = vpop.f32.mrb[0].mxu0
        %v1358 = vadd.f32 0.0, %v1357
        %v1359 = vpop.f32.mrb[0].mxu0
        %v1360 = vpop.f32.mrb[0].mxu0
        %v1361 = vadd.f32 0.0, %v1360
        %v1362 = vpop.f32.mrb[0].mxu0
        %1363 = vmatprep.mubr.bf16.mxu0 %v1190
        %1364 = vmatmul.mubr.bf16.gmra.mrb[0].mxu0 %v1189
        %v1365 = vpop.f32.mrb[0].mxu0
        %v1366 = vadd.f32 0.0, %v1365
        %v1367 = vpop.f32.mrb[0].mxu0
        %v1368 = vpop.f32.mrb[0].mxu0
        %v1369 = vadd.f32 0.0, %v1368
        %v1370 = vpop.f32.mrb[0].mxu0
        %1371 = vmatprep.mubr.bf16.mxu0 %v1192
        %1372 = vmatmul.mubr.bf16.gmra.mrb[0].mxu0 %v1191
        %v1373 = vpop.f32.mrb[0].mxu0
        %v1374 = vadd.f32 0.0, %v1373
        %v1375 = vpop.f32.mrb[0].mxu0
        %v1376 = vpop.f32.mrb[0].mxu0
        %v1377 = vadd.f32 0.0, %v1376
        %v1378 = vpop.f32.mrb[0].mxu0
        %1379 = vmatprep.mubr.bf16.mxu0 %v1194
        %1380 = vmatmul.mubr.bf16.gmra.mrb[0].mxu0 %v1193
        %v1381 = vpop.f32.mrb[0].mxu0
        %v1382 = vadd.f32 0.0, %v1381
        %v1383 = vpop.f32.mrb[0].mxu0
        %v1384 = vpop.f32.mrb[0].mxu0
        %v1385 = vadd.f32 0.0, %v1384
        %v1386 = vpop.f32.mrb[0].mxu0
        %1387 = vdwg.mxu0
        %v1388 = vpack.c.bf16 %v944, %v941
        %v1389 = vpack.c.bf16 %v952, %v949
        %v1390 = vpack.c.bf16 %v960, %v957
        %v1391 = vpack.c.bf16 %v968, %v965
        %v1392 = vpack.c.bf16 %v976, %v973
        %v1393 = vpack.c.bf16 %v984, %v981
        %v1394 = vpack.c.bf16 %v992, %v989
        %v1395 = vpack.c.bf16 %v1000, %v997
        %v1396 = vpack.c.bf16 %v1008, %v1005
        %v1397 = vpack.c.bf16 %v1016, %v1013
        %v1398 = vpack.c.bf16 %v1024, %v1021
        %v1399 = vpack.c.bf16 %v1032, %v1029
        %v1400 = vpack.c.bf16 %v1040, %v1037
        %v1401 = vpack.c.bf16 %v1048, %v1045
        %v1402 = vpack.c.bf16 %v1056, %v1053
        %v1403 = vpack.c.bf16 %v1064, %v1061
        %s1404 = scalar_lea.vmem %s2, 32
        %v1405 = vld [vmem:[%s1404] sm:$0xf]
        %v1406 = vld [vmem:[%s1404 + $0x4] sm:$0xf]
        %v1407 = vld [vmem:[%s1404 + $0x8] sm:$0xf]
        %v1408 = vld [vmem:[%s1404 + $0xc] sm:$0xf]
        %v1409 = vld [vmem:[%s1404 + $0x10] sm:$0xf]
        %v1410 = vld [vmem:[%s1404 + $0x14] sm:$0xf]
        %v1411 = vld [vmem:[%s1404 + $0x18] sm:$0xf]
        %v1412 = vld [vmem:[%s1404 + $0x1c] sm:$0xf]
        %v1413 = vpack.c.bf16 %v1265, %v1262
        %v1414 = vpack.c.bf16 %v1273, %v1270
        %v1415 = vpack.c.bf16 %v1281, %v1278
        %v1416 = vpack.c.bf16 %v1289, %v1286
        %v1417 = vpack.c.bf16 %v1297, %v1294
        %v1418 = vpack.c.bf16 %v1305, %v1302
        %v1419 = vpack.c.bf16 %v1313, %v1310
        %v1420 = vpack.c.bf16 %v1321, %v1318
        %v1421 = vpack.c.bf16 %v1329, %v1326
        %v1422 = vpack.c.bf16 %v1337, %v1334
        %v1423 = vpack.c.bf16 %v1345, %v1342
        %v1424 = vpack.c.bf16 %v1353, %v1350
        %v1425 = vpack.c.bf16 %v1361, %v1358
        %v1426 = vpack.c.bf16 %v1369, %v1366
        %v1427 = vpack.c.bf16 %v1377, %v1374
        %v1428 = vpack.c.bf16 %v1385, %v1382
        %s1429 = scalar_lea.vmem %s2, 64
        %v1430 = vld [vmem:[%s1429] sm:$0xf]
        %v1431 = vld [vmem:[%s1429 + $0x4] sm:$0xf]
        %v1432 = vld [vmem:[%s1429 + $0x8] sm:$0xf]
        %v1433 = vld [vmem:[%s1429 + $0xc] sm:$0xf]
        %v1434 = vld [vmem:[%s1429 + $0x10] sm:$0xf]
        %v1435 = vld [vmem:[%s1429 + $0x14] sm:$0xf]
        %v1436 = vld [vmem:[%s1429 + $0x18] sm:$0xf]
        %v1437 = vld [vmem:[%s1429 + $0x1c] sm:$0xf]
        %v1446 = vunpack.c.l.b16 %v1430
        %v1447 = vunpack.c.l.b16 %v1431
        %v1448 = vunpack.c.l.b16 %v1432
        %v1449 = vunpack.c.l.b16 %v1433
        %v1450 = vunpack.c.l.b16 %v1434
        %v1451 = vunpack.c.l.b16 %v1435
        %v1452 = vunpack.c.l.b16 %v1436
        %v1453 = vunpack.c.l.b16 %v1437
        %v1454 = vpack.c.b16 %v1447, %v1446
        %v1455 = vpack.c.b16 %v1449, %v1448
        %v1456 = vpack.c.b16 %v1451, %v1450
        %v1457 = vpack.c.b16 %v1453, %v1452
        %v1463 = vsel %vm480, %v1413, 0
        %v1466 = vsel %vm480, %v1414, 0
        %v1469 = vsel %vm480, %v1415, 0
        %v1472 = vsel %vm480, %v1416, 0
        %v1475 = vsel %vm480, %v1417, 0
        %v1478 = vsel %vm480, %v1418, 0
        %v1481 = vsel %vm480, %v1419, 0
        %v1484 = vsel %vm480, %v1420, 0
        %v1487 = vsel %vm480, %v1421, 0
        %v1490 = vsel %vm480, %v1422, 0
        %v1493 = vsel %vm480, %v1423, 0
        %v1496 = vsel %vm480, %v1424, 0
        %v1499 = vsel %vm480, %v1425, 0
        %v1502 = vsel %vm480, %v1426, 0
        %v1505 = vsel %vm480, %v1427, 0
        %v1508 = vsel %vm480, %v1428, 0
        %1510 = vmatprep.subr.bf16.mxu0 0
        %1511 = vmatpush1.bf16.msra.mxu0 %v1454
        %1512 = vmatprep.subr.bf16.mxu0 0
        %1513 = vmatpush1.bf16.msra.mxu0 %v1455
        %1514 = vmatprep.subr.bf16.mxu0 0
        %1515 = vmatpush1.bf16.msra.mxu0 %v1456
        %1516 = vmatprep.subr.bf16.mxu0 0
        %1517 = vmatpush1.bf16.msra.mxu0 %v1457
        %1518 = vmatprep.subr.bf16.mxu0 0
        %1519 = vmatpush1.bf16.msra.mxu0 0
        %1520 = vmatprep.subr.bf16.mxu0 0
        %1521 = vmatpush1.bf16.msra.mxu0 0
        %1522 = vmatprep.subr.bf16.mxu0 0
        %1523 = vmatpush1.bf16.msra.mxu0 0
        %1524 = vmatprep.subr.bf16.mxu0 0
        %1525 = vmatpush1.bf16.msra.mxu0 0
        %1526 = vmatprep.subr.bf16.mxu0 0
        %1527 = vmatpush1.bf16.msra.mxu0 0
        %1528 = vmatprep.subr.bf16.mxu0 0
        %1529 = vmatpush1.bf16.msra.mxu0 0
        %1530 = vmatprep.subr.bf16.mxu0 0
        %1531 = vmatpush1.bf16.msra.mxu0 0
        %1532 = vmatprep.subr.bf16.mxu0 0
        %1533 = vmatpush1.bf16.msra.mxu0 0
        %1534 = vmatprep.subr.bf16.mxu0 0
        %1535 = vmatpush1.bf16.msra.mxu0 0
        %1536 = vmatprep.subr.bf16.mxu0 0
        %1537 = vmatpush1.bf16.msra.mxu0 0
        %1538 = vmatprep.subr.bf16.mxu0 0
        %1539 = vmatpush1.bf16.msra.mxu0 0
        %1540 = vmatprep.subr.bf16.mxu0 0
        %1541 = vmatpush1.bf16.msra.mxu0 0
        %1542 = vmatprep.mubr.bf16.mxu0 0
        %1543 = vmatmul.mubr.bf16.gmra.mrb[0].mxu0 %v1463
        %v1544 = vpop.f32.mrb[0].mxu0
        %v1545 = vadd.f32 0.0, %v1544
        %v1546 = vpop.f32.mrb[0].mxu0
        %v1547 = vpop.f32.mrb[0].mxu0
        %v1548 = vadd.f32 0.0, %v1547
        %v1549 = vpop.f32.mrb[0].mxu0
        %1550 = vmatprep.mubr.bf16.mxu0 0
        %1551 = vmatmul.mubr.bf16.gmra.mrb[0].mxu0 %v1466
        %v1552 = vpop.f32.mrb[0].mxu0
        %v1553 = vadd.f32 0.0, %v1552
        %v1554 = vpop.f32.mrb[0].mxu0
        %v1555 = vpop.f32.mrb[0].mxu0
        %v1556 = vadd.f32 0.0, %v1555
        %v1557 = vpop.f32.mrb[0].mxu0
        %1558 = vmatprep.mubr.bf16.mxu0 0
        %1559 = vmatmul.mubr.bf16.gmra.mrb[0].mxu0 %v1469
        %v1560 = vpop.f32.mrb[0].mxu0
        %v1561 = vadd.f32 0.0, %v1560
        %v1562 = vpop.f32.mrb[0].mxu0
        %v1563 = vpop.f32.mrb[0].mxu0
        %v1564 = vadd.f32 0.0, %v1563
        %v1565 = vpop.f32.mrb[0].mxu0
        %1566 = vmatprep.mubr.bf16.mxu0 0
        %1567 = vmatmul.mubr.bf16.gmra.mrb[0].mxu0 %v1472
        %v1568 = vpop.f32.mrb[0].mxu0
        %v1569 = vadd.f32 0.0, %v1568
        %v1570 = vpop.f32.mrb[0].mxu0
        %v1571 = vpop.f32.mrb[0].mxu0
        %v1572 = vadd.f32 0.0, %v1571
        %v1573 = vpop.f32.mrb[0].mxu0
        %1574 = vmatprep.mubr.bf16.mxu0 0
        %1575 = vmatmul.mubr.bf16.gmra.mrb[0].mxu0 %v1475
        %v1576 = vpop.f32.mrb[0].mxu0
        %v1577 = vadd.f32 0.0, %v1576
        %v1578 = vpop.f32.mrb[0].mxu0
        %v1579 = vpop.f32.mrb[0].mxu0
        %v1580 = vadd.f32 0.0, %v1579
        %v1581 = vpop.f32.mrb[0].mxu0
        %1582 = vmatprep.mubr.bf16.mxu0 0
        %1583 = vmatmul.mubr.bf16.gmra.mrb[0].mxu0 %v1478
        %v1584 = vpop.f32.mrb[0].mxu0
        %v1585 = vadd.f32 0.0, %v1584
        %v1586 = vpop.f32.mrb[0].mxu0
        %v1587 = vpop.f32.mrb[0].mxu0
        %v1588 = vadd.f32 0.0, %v1587
        %v1589 = vpop.f32.mrb[0].mxu0
        %1590 = vmatprep.mubr.bf16.mxu0 0
        %1591 = vmatmul.mubr.bf16.gmra.mrb[0].mxu0 %v1481
        %v1592 = vpop.f32.mrb[0].mxu0
        %v1593 = vadd.f32 0.0, %v1592
        %v1594 = vpop.f32.mrb[0].mxu0
        %v1595 = vpop.f32.mrb[0].mxu0
        %v1596 = vadd.f32 0.0, %v1595
        %v1597 = vpop.f32.mrb[0].mxu0
        %1598 = vmatprep.mubr.bf16.mxu0 0
        %1599 = vmatmul.mubr.bf16.gmra.mrb[0].mxu0 %v1484
        %v1600 = vpop.f32.mrb[0].mxu0
        %v1601 = vadd.f32 0.0, %v1600
        %v1602 = vpop.f32.mrb[0].mxu0
        %v1603 = vpop.f32.mrb[0].mxu0
        %v1604 = vadd.f32 0.0, %v1603
        %v1605 = vpop.f32.mrb[0].mxu0
        %1606 = vmatprep.mubr.bf16.mxu0 0
        %1607 = vmatmul.mubr.bf16.gmra.mrb[0].mxu0 %v1487
        %v1608 = vpop.f32.mrb[0].mxu0
        %v1609 = vadd.f32 0.0, %v1608
        %v1610 = vpop.f32.mrb[0].mxu0
        %v1611 = vpop.f32.mrb[0].mxu0
        %v1612 = vadd.f32 0.0, %v1611
        %v1613 = vpop.f32.mrb[0].mxu0
        %1614 = vmatprep.mubr.bf16.mxu0 0
        %1615 = vmatmul.mubr.bf16.gmra.mrb[0].mxu0 %v1490
        %v1616 = vpop.f32.mrb[0].mxu0
        %v1617 = vadd.f32 0.0, %v1616
        %v1618 = vpop.f32.mrb[0].mxu0
        %v1619 = vpop.f32.mrb[0].mxu0
        %v1620 = vadd.f32 0.0, %v1619
        %v1621 = vpop.f32.mrb[0].mxu0
        %1622 = vmatprep.mubr.bf16.mxu0 0
        %1623 = vmatmul.mubr.bf16.gmra.mrb[0].mxu0 %v1493
        %v1624 = vpop.f32.mrb[0].mxu0
        %v1625 = vadd.f32 0.0, %v1624
        %v1626 = vpop.f32.mrb[0].mxu0
        %v1627 = vpop.f32.mrb[0].mxu0
        %v1628 = vadd.f32 0.0, %v1627
        %v1629 = vpop.f32.mrb[0].mxu0
        %1630 = vmatprep.mubr.bf16.mxu0 0
        %1631 = vmatmul.mubr.bf16.gmra.mrb[0].mxu0 %v1496
        %v1632 = vpop.f32.mrb[0].mxu0
        %v1633 = vadd.f32 0.0, %v1632
        %v1634 = vpop.f32.mrb[0].mxu0
        %v1635 = vpop.f32.mrb[0].mxu0
        %v1636 = vadd.f32 0.0, %v1635
        %v1637 = vpop.f32.mrb[0].mxu0
        %1638 = vmatprep.mubr.bf16.mxu0 0
        %1639 = vmatmul.mubr.bf16.gmra.mrb[0].mxu0 %v1499
        %v1640 = vpop.f32.mrb[0].mxu0
        %v1641 = vadd.f32 0.0, %v1640
        %v1642 = vpop.f32.mrb[0].mxu0
        %v1643 = vpop.f32.mrb[0].mxu0
        %v1644 = vadd.f32 0.0, %v1643
        %v1645 = vpop.f32.mrb[0].mxu0
        %1646 = vmatprep.mubr.bf16.mxu0 0
        %1647 = vmatmul.mubr.bf16.gmra.mrb[0].mxu0 %v1502
        %v1648 = vpop.f32.mrb[0].mxu0
        %v1649 = vadd.f32 0.0, %v1648
        %v1650 = vpop.f32.mrb[0].mxu0
        %v1651 = vpop.f32.mrb[0].mxu0
        %v1652 = vadd.f32 0.0, %v1651
        %v1653 = vpop.f32.mrb[0].mxu0
        %1654 = vmatprep.mubr.bf16.mxu0 0
        %1655 = vmatmul.mubr.bf16.gmra.mrb[0].mxu0 %v1505
        %v1656 = vpop.f32.mrb[0].mxu0
        %v1657 = vadd.f32 0.0, %v1656
        %v1658 = vpop.f32.mrb[0].mxu0
        %v1659 = vpop.f32.mrb[0].mxu0
        %v1660 = vadd.f32 0.0, %v1659
        %v1661 = vpop.f32.mrb[0].mxu0
        %1662 = vmatprep.mubr.bf16.mxu0 0
        %1663 = vmatmul.mubr.bf16.gmra.mrb[0].mxu0 %v1508
        %v1664 = vpop.f32.mrb[0].mxu0
        %v1665 = vadd.f32 0.0, %v1664
        %v1666 = vpop.f32.mrb[0].mxu0
        %v1667 = vpop.f32.mrb[0].mxu0
        %v1668 = vadd.f32 0.0, %v1667
        %v1669 = vpop.f32.mrb[0].mxu0
        %1670 = vdwg.mxu0
        %v1679 = vunpack.c.l.b16 %v1405
        %v1680 = vunpack.c.l.b16 %v1406
        %v1681 = vunpack.c.l.b16 %v1407
        %v1682 = vunpack.c.l.b16 %v1408
        %v1683 = vunpack.c.l.b16 %v1409
        %v1684 = vunpack.c.l.b16 %v1410
        %v1685 = vunpack.c.l.b16 %v1411
        %v1686 = vunpack.c.l.b16 %v1412
        %v1687 = vpack.c.b16 %v1680, %v1679
        %v1688 = vpack.c.b16 %v1682, %v1681
        %v1689 = vpack.c.b16 %v1684, %v1683
        %v1690 = vpack.c.b16 %v1686, %v1685
        %v1696 = vsel %vm480, %v1388, 0
        %v1699 = vsel %vm480, %v1389, 0
        %v1702 = vsel %vm480, %v1390, 0
        %v1705 = vsel %vm480, %v1391, 0
        %v1708 = vsel %vm480, %v1392, 0
        %v1711 = vsel %vm480, %v1393, 0
        %v1714 = vsel %vm480, %v1394, 0
        %v1717 = vsel %vm480, %v1395, 0
        %v1720 = vsel %vm480, %v1396, 0
        %v1723 = vsel %vm480, %v1397, 0
        %v1726 = vsel %vm480, %v1398, 0
        %v1729 = vsel %vm480, %v1399, 0
        %v1732 = vsel %vm480, %v1400, 0
        %v1735 = vsel %vm480, %v1401, 0
        %v1738 = vsel %vm480, %v1402, 0
        %v1741 = vsel %vm480, %v1403, 0
        %1743 = vmatprep.subr.bf16.mxu0 0
        %1744 = vmatpush1.bf16.msra.mxu0 %v1687
        %1745 = vmatprep.subr.bf16.mxu0 0
        %1746 = vmatpush1.bf16.msra.mxu0 %v1688
        %1747 = vmatprep.subr.bf16.mxu0 0
        %1748 = vmatpush1.bf16.msra.mxu0 %v1689
        %1749 = vmatprep.subr.bf16.mxu0 0
        %1750 = vmatpush1.bf16.msra.mxu0 %v1690
        %1751 = vmatprep.subr.bf16.mxu0 0
        %1752 = vmatpush1.bf16.msra.mxu0 0
        %1753 = vmatprep.subr.bf16.mxu0 0
        %1754 = vmatpush1.bf16.msra.mxu0 0
        %1755 = vmatprep.subr.bf16.mxu0 0
        %1756 = vmatpush1.bf16.msra.mxu0 0
        %1757 = vmatprep.subr.bf16.mxu0 0
        %1758 = vmatpush1.bf16.msra.mxu0 0
        %1759 = vmatprep.subr.bf16.mxu0 0
        %1760 = vmatpush1.bf16.msra.mxu0 0
        %1761 = vmatprep.subr.bf16.mxu0 0
        %1762 = vmatpush1.bf16.msra.mxu0 0
        %1763 = vmatprep.subr.bf16.mxu0 0
        %1764 = vmatpush1.bf16.msra.mxu0 0
        %1765 = vmatprep.subr.bf16.mxu0 0
        %1766 = vmatpush1.bf16.msra.mxu0 0
        %1767 = vmatprep.subr.bf16.mxu0 0
        %1768 = vmatpush1.bf16.msra.mxu0 0
        %1769 = vmatprep.subr.bf16.mxu0 0
        %1770 = vmatpush1.bf16.msra.mxu0 0
        %1771 = vmatprep.subr.bf16.mxu0 0
        %1772 = vmatpush1.bf16.msra.mxu0 0
        %1773 = vmatprep.subr.bf16.mxu0 0
        %1774 = vmatpush1.bf16.msra.mxu0 0
        %1775 = vmatprep.mubr.bf16.mxu0 0
        %1776 = vmatmul.mubr.bf16.gmra.mrb[0].mxu0 %v1696
        %v1777 = vpop.f32.mrb[0].mxu0
        %v1778 = vadd.f32 %v1545, %v1777
        %v1779 = vpop.f32.mrb[0].mxu0
        %v1780 = vpop.f32.mrb[0].mxu0
        %v1781 = vadd.f32 %v1548, %v1780
        %v1782 = vpop.f32.mrb[0].mxu0
        %1783 = vmatprep.mubr.bf16.mxu0 0
        %1784 = vmatmul.mubr.bf16.gmra.mrb[0].mxu0 %v1699
        %v1785 = vpop.f32.mrb[0].mxu0
        %v1786 = vadd.f32 %v1553, %v1785
        %v1787 = vpop.f32.mrb[0].mxu0
        %v1788 = vpop.f32.mrb[0].mxu0
        %v1789 = vadd.f32 %v1556, %v1788
        %v1790 = vpop.f32.mrb[0].mxu0
        %1791 = vmatprep.mubr.bf16.mxu0 0
        %1792 = vmatmul.mubr.bf16.gmra.mrb[0].mxu0 %v1702
        %v1793 = vpop.f32.mrb[0].mxu0
        %v1794 = vadd.f32 %v1561, %v1793
        %v1795 = vpop.f32.mrb[0].mxu0
        %v1796 = vpop.f32.mrb[0].mxu0
        %v1797 = vadd.f32 %v1564, %v1796
        %v1798 = vpop.f32.mrb[0].mxu0
        %1799 = vmatprep.mubr.bf16.mxu0 0
        %1800 = vmatmul.mubr.bf16.gmra.mrb[0].mxu0 %v1705
        %v1801 = vpop.f32.mrb[0].mxu0
        %v1802 = vadd.f32 %v1569, %v1801
        %v1803 = vpop.f32.mrb[0].mxu0
        %v1804 = vpop.f32.mrb[0].mxu0
        %v1805 = vadd.f32 %v1572, %v1804
        %v1806 = vpop.f32.mrb[0].mxu0
        %1807 = vmatprep.mubr.bf16.mxu0 0
        %1808 = vmatmul.mubr.bf16.gmra.mrb[0].mxu0 %v1708
        %v1809 = vpop.f32.mrb[0].mxu0
        %v1810 = vadd.f32 %v1577, %v1809
        %v1811 = vpop.f32.mrb[0].mxu0
        %v1812 = vpop.f32.mrb[0].mxu0
        %v1813 = vadd.f32 %v1580, %v1812
        %v1814 = vpop.f32.mrb[0].mxu0
        %1815 = vmatprep.mubr.bf16.mxu0 0
        %1816 = vmatmul.mubr.bf16.gmra.mrb[0].mxu0 %v1711
        %v1817 = vpop.f32.mrb[0].mxu0
        %v1818 = vadd.f32 %v1585, %v1817
        %v1819 = vpop.f32.mrb[0].mxu0
        %v1820 = vpop.f32.mrb[0].mxu0
        %v1821 = vadd.f32 %v1588, %v1820
        %v1822 = vpop.f32.mrb[0].mxu0
        %1823 = vmatprep.mubr.bf16.mxu0 0
        %1824 = vmatmul.mubr.bf16.gmra.mrb[0].mxu0 %v1714
        %v1825 = vpop.f32.mrb[0].mxu0
        %v1826 = vadd.f32 %v1593, %v1825
        %v1827 = vpop.f32.mrb[0].mxu0
        %v1828 = vpop.f32.mrb[0].mxu0
        %v1829 = vadd.f32 %v1596, %v1828
        %v1830 = vpop.f32.mrb[0].mxu0
        %1831 = vmatprep.mubr.bf16.mxu0 0
        %1832 = vmatmul.mubr.bf16.gmra.mrb[0].mxu0 %v1717
        %v1833 = vpop.f32.mrb[0].mxu0
        %v1834 = vadd.f32 %v1601, %v1833
        %v1835 = vpop.f32.mrb[0].mxu0
        %v1836 = vpop.f32.mrb[0].mxu0
        %v1837 = vadd.f32 %v1604, %v1836
        %v1838 = vpop.f32.mrb[0].mxu0
        %1839 = vmatprep.mubr.bf16.mxu0 0
        %1840 = vmatmul.mubr.bf16.gmra.mrb[0].mxu0 %v1720
        %v1841 = vpop.f32.mrb[0].mxu0
        %v1842 = vadd.f32 %v1609, %v1841
        %v1843 = vpop.f32.mrb[0].mxu0
        %v1844 = vpop.f32.mrb[0].mxu0
        %v1845 = vadd.f32 %v1612, %v1844
        %v1846 = vpop.f32.mrb[0].mxu0
        %1847 = vmatprep.mubr.bf16.mxu0 0
        %1848 = vmatmul.mubr.bf16.gmra.mrb[0].mxu0 %v1723
        %v1849 = vpop.f32.mrb[0].mxu0
        %v1850 = vadd.f32 %v1617, %v1849
        %v1851 = vpop.f32.mrb[0].mxu0
        %v1852 = vpop.f32.mrb[0].mxu0
        %v1853 = vadd.f32 %v1620, %v1852
        %v1854 = vpop.f32.mrb[0].mxu0
        %1855 = vmatprep.mubr.bf16.mxu0 0
        %1856 = vmatmul.mubr.bf16.gmra.mrb[0].mxu0 %v1726
        %v1857 = vpop.f32.mrb[0].mxu0
        %v1858 = vadd.f32 %v1625, %v1857
        %v1859 = vpop.f32.mrb[0].mxu0
        %v1860 = vpop.f32.mrb[0].mxu0
        %v1861 = vadd.f32 %v1628, %v1860
        %v1862 = vpop.f32.mrb[0].mxu0
        %1863 = vmatprep.mubr.bf16.mxu0 0
        %1864 = vmatmul.mubr.bf16.gmra.mrb[0].mxu0 %v1729
        %v1865 = vpop.f32.mrb[0].mxu0
        %v1866 = vadd.f32 %v1633, %v1865
        %v1867 = vpop.f32.mrb[0].mxu0
        %v1868 = vpop.f32.mrb[0].mxu0
        %v1869 = vadd.f32 %v1636, %v1868
        %v1870 = vpop.f32.mrb[0].mxu0
        %1871 = vmatprep.mubr.bf16.mxu0 0
        %1872 = vmatmul.mubr.bf16.gmra.mrb[0].mxu0 %v1732
        %v1873 = vpop.f32.mrb[0].mxu0
        %v1874 = vadd.f32 %v1641, %v1873
        %v1875 = vpop.f32.mrb[0].mxu0
        %v1876 = vpop.f32.mrb[0].mxu0
        %v1877 = vadd.f32 %v1644, %v1876
        %v1878 = vpop.f32.mrb[0].mxu0
        %1879 = vmatprep.mubr.bf16.mxu0 0
        %1880 = vmatmul.mubr.bf16.gmra.mrb[0].mxu0 %v1735
        %v1881 = vpop.f32.mrb[0].mxu0
        %v1882 = vadd.f32 %v1649, %v1881
        %v1883 = vpop.f32.mrb[0].mxu0
        %v1884 = vpop.f32.mrb[0].mxu0
        %v1885 = vadd.f32 %v1652, %v1884
        %v1886 = vpop.f32.mrb[0].mxu0
        %1887 = vmatprep.mubr.bf16.mxu0 0
        %1888 = vmatmul.mubr.bf16.gmra.mrb[0].mxu0 %v1738
        %v1889 = vpop.f32.mrb[0].mxu0
        %v1890 = vadd.f32 %v1657, %v1889
        %v1891 = vpop.f32.mrb[0].mxu0
        %v1892 = vpop.f32.mrb[0].mxu0
        %v1893 = vadd.f32 %v1660, %v1892
        %v1894 = vpop.f32.mrb[0].mxu0
        %1895 = vmatprep.mubr.bf16.mxu0 0
        %1896 = vmatmul.mubr.bf16.gmra.mrb[0].mxu0 %v1741
        %v1897 = vpop.f32.mrb[0].mxu0
        %v1898 = vadd.f32 %v1665, %v1897
        %v1899 = vpop.f32.mrb[0].mxu0
        %v1900 = vpop.f32.mrb[0].mxu0
        %v1901 = vadd.f32 %v1668, %v1900
        %v1902 = vpop.f32.mrb[0].mxu0
        %1903 = vdwg.mxu0
        %v1904 = vld [vmem:[%s3 + $0x1] sm:$0x1]
        %v1905 = vlaneseq
        %v1906 = vshrl.u32 %v1905, 7
        %v1907 = vsub.s32 0, %v1906
        %v1908 = vrot.slane %v1904, %v1907
        %v1909 = vadd.f32 %v1778, %v1908
        %v1910 = vadd.f32 %v1781, %v1908
        %v1911 = vadd.f32 %v1786, %v1908
        %v1912 = vadd.f32 %v1789, %v1908
        %v1913 = vadd.f32 %v1794, %v1908
        %v1914 = vadd.f32 %v1797, %v1908
        %v1915 = vadd.f32 %v1802, %v1908
        %v1916 = vadd.f32 %v1805, %v1908
        %v1917 = vadd.f32 %v1810, %v1908
        %v1918 = vadd.f32 %v1813, %v1908
        %v1919 = vadd.f32 %v1818, %v1908
        %v1920 = vadd.f32 %v1821, %v1908
        %v1921 = vadd.f32 %v1826, %v1908
        %v1922 = vadd.f32 %v1829, %v1908
        %v1923 = vadd.f32 %v1834, %v1908
        %v1924 = vadd.f32 %v1837, %v1908
        %v1925 = vadd.f32 %v1842, %v1908
        %v1926 = vadd.f32 %v1845, %v1908
        %v1927 = vadd.f32 %v1850, %v1908
        %v1928 = vadd.f32 %v1853, %v1908
        %v1929 = vadd.f32 %v1858, %v1908
        %v1930 = vadd.f32 %v1861, %v1908
        %v1931 = vadd.f32 %v1866, %v1908
        %v1932 = vadd.f32 %v1869, %v1908
        %v1933 = vadd.f32 %v1874, %v1908
        %v1934 = vadd.f32 %v1877, %v1908
        %v1935 = vadd.f32 %v1882, %v1908
        %v1936 = vadd.f32 %v1885, %v1908
        %v1937 = vadd.f32 %v1890, %v1908
        %v1938 = vadd.f32 %v1893, %v1908
        %v1939 = vadd.f32 %v1898, %v1908
        %v1940 = vadd.f32 %v1901, %v1908
        %v1941 = vpack.c.bf16 %v1910, %v1909
        %v1942 = vpack.c.bf16 %v1912, %v1911
        %v1943 = vpack.c.bf16 %v1914, %v1913
        %v1944 = vpack.c.bf16 %v1916, %v1915
        %v1945 = vpack.c.bf16 %v1918, %v1917
        %v1946 = vpack.c.bf16 %v1920, %v1919
        %v1947 = vpack.c.bf16 %v1922, %v1921
        %v1948 = vpack.c.bf16 %v1924, %v1923
        %v1949 = vpack.c.bf16 %v1926, %v1925
        %v1950 = vpack.c.bf16 %v1928, %v1927
        %v1951 = vpack.c.bf16 %v1930, %v1929
        %v1952 = vpack.c.bf16 %v1932, %v1931
        %v1953 = vpack.c.bf16 %v1934, %v1933
        %v1954 = vpack.c.bf16 %v1936, %v1935
        %v1955 = vpack.c.bf16 %v1938, %v1937
        %v1956 = vpack.c.bf16 %v1940, %v1939
        %s1957 = scalar_lea.vmem %s4, 32
        %v1958 = vld [vmem:[%s1957] sm:$0xf]
        %v1959 = vld [vmem:[%s1957 + $0x4] sm:$0xf]
        %v1960 = vld [vmem:[%s1957 + $0x8] sm:$0xf]
        %v1961 = vld [vmem:[%s1957 + $0xc] sm:$0xf]
        %v1962 = vld [vmem:[%s1957 + $0x10] sm:$0xf]
        %v1963 = vld [vmem:[%s1957 + $0x14] sm:$0xf]
        %v1964 = vld [vmem:[%s1957 + $0x18] sm:$0xf]
        %v1965 = vld [vmem:[%s1957 + $0x1c] sm:$0xf]
        %v1974 = vunpack.c.l.b16 %v1958
        %v1975 = vunpack.c.l.b16 %v1959
        %v1976 = vunpack.c.l.b16 %v1960
        %v1977 = vunpack.c.l.b16 %v1961
        %v1978 = vunpack.c.l.b16 %v1962
        %v1979 = vunpack.c.l.b16 %v1963
        %v1980 = vunpack.c.l.b16 %v1964
        %v1981 = vunpack.c.l.b16 %v1965
        %v1982 = vpack.c.b16 %v1975, %v1974
        %v1983 = vpack.c.b16 %v1977, %v1976
        %v1984 = vpack.c.b16 %v1979, %v1978
        %v1985 = vpack.c.b16 %v1981, %v1980
        %v1991 = vsel %vm480, %v1941, 0
        %v1994 = vsel %vm480, %v1942, 0
        %v1997 = vsel %vm480, %v1943, 0
        %v2000 = vsel %vm480, %v1944, 0
        %v2003 = vsel %vm480, %v1945, 0
        %v2006 = vsel %vm480, %v1946, 0
        %v2009 = vsel %vm480, %v1947, 0
        %v2012 = vsel %vm480, %v1948, 0
        %v2015 = vsel %vm480, %v1949, 0
        %v2018 = vsel %vm480, %v1950, 0
        %v2021 = vsel %vm480, %v1951, 0
        %v2024 = vsel %vm480, %v1952, 0
        %v2027 = vsel %vm480, %v1953, 0
        %v2030 = vsel %vm480, %v1954, 0
        %v2033 = vsel %vm480, %v1955, 0
        %v2036 = vsel %vm480, %v1956, 0
        %2038 = vmatprep.subr.bf16.mxu0 0
        %2039 = vmatpush1.bf16.msra.mxu0 %v1982
        %2040 = vmatprep.subr.bf16.mxu0 0
        %2041 = vmatpush1.bf16.msra.mxu0 %v1983
        %2042 = vmatprep.subr.bf16.mxu0 0
        %2043 = vmatpush1.bf16.msra.mxu0 %v1984
        %2044 = vmatprep.subr.bf16.mxu0 0
        %2045 = vmatpush1.bf16.msra.mxu0 %v1985
        %2046 = vmatprep.subr.bf16.mxu0 0
        %2047 = vmatpush1.bf16.msra.mxu0 0
        %2048 = vmatprep.subr.bf16.mxu0 0
        %2049 = vmatpush1.bf16.msra.mxu0 0
        %2050 = vmatprep.subr.bf16.mxu0 0
        %2051 = vmatpush1.bf16.msra.mxu0 0
        %2052 = vmatprep.subr.bf16.mxu0 0
        %2053 = vmatpush1.bf16.msra.mxu0 0
        %2054 = vmatprep.subr.bf16.mxu0 0
        %2055 = vmatpush1.bf16.msra.mxu0 0
        %2056 = vmatprep.subr.bf16.mxu0 0
        %2057 = vmatpush1.bf16.msra.mxu0 0
        %2058 = vmatprep.subr.bf16.mxu0 0
        %2059 = vmatpush1.bf16.msra.mxu0 0
        %2060 = vmatprep.subr.bf16.mxu0 0
        %2061 = vmatpush1.bf16.msra.mxu0 0
        %2062 = vmatprep.subr.bf16.mxu0 0
        %2063 = vmatpush1.bf16.msra.mxu0 0
        %2064 = vmatprep.subr.bf16.mxu0 0
        %2065 = vmatpush1.bf16.msra.mxu0 0
        %2066 = vmatprep.subr.bf16.mxu0 0
        %2067 = vmatpush1.bf16.msra.mxu0 0
        %2068 = vmatprep.subr.bf16.mxu0 0
        %2069 = vmatpush1.bf16.msra.mxu0 0
        %2070 = vmatprep.mubr.bf16.mxu0 0
        %2071 = vmatmul.mubr.bf16.gmra.mrb[0].mxu0 %v1991
        %v2072 = vpop.f32.mrb[0].mxu0
        %v2073 = vadd.f32 0.0, %v2072
        %v2074 = vpop.f32.mrb[0].mxu0
        %v2075 = vpop.f32.mrb[0].mxu0
        %v2076 = vadd.f32 0.0, %v2075
        %v2077 = vpop.f32.mrb[0].mxu0
        %2078 = vmatprep.mubr.bf16.mxu0 0
        %2079 = vmatmul.mubr.bf16.gmra.mrb[0].mxu0 %v1994
        %v2080 = vpop.f32.mrb[0].mxu0
        %v2081 = vadd.f32 0.0, %v2080
        %v2082 = vpop.f32.mrb[0].mxu0
        %v2083 = vpop.f32.mrb[0].mxu0
        %v2084 = vadd.f32 0.0, %v2083
        %v2085 = vpop.f32.mrb[0].mxu0
        %2086 = vmatprep.mubr.bf16.mxu0 0
        %2087 = vmatmul.mubr.bf16.gmra.mrb[0].mxu0 %v1997
        %v2088 = vpop.f32.mrb[0].mxu0
        %v2089 = vadd.f32 0.0, %v2088
        %v2090 = vpop.f32.mrb[0].mxu0
        %v2091 = vpop.f32.mrb[0].mxu0
        %v2092 = vadd.f32 0.0, %v2091
        %v2093 = vpop.f32.mrb[0].mxu0
        %2094 = vmatprep.mubr.bf16.mxu0 0
        %2095 = vmatmul.mubr.bf16.gmra.mrb[0].mxu0 %v2000
        %v2096 = vpop.f32.mrb[0].mxu0
        %v2097 = vadd.f32 0.0, %v2096
        %v2098 = vpop.f32.mrb[0].mxu0
        %v2099 = vpop.f32.mrb[0].mxu0
        %v2100 = vadd.f32 0.0, %v2099
        %v2101 = vpop.f32.mrb[0].mxu0
        %2102 = vmatprep.mubr.bf16.mxu0 0
        %2103 = vmatmul.mubr.bf16.gmra.mrb[0].mxu0 %v2003
        %v2104 = vpop.f32.mrb[0].mxu0
        %v2105 = vadd.f32 0.0, %v2104
        %v2106 = vpop.f32.mrb[0].mxu0
        %v2107 = vpop.f32.mrb[0].mxu0
        %v2108 = vadd.f32 0.0, %v2107
        %v2109 = vpop.f32.mrb[0].mxu0
        %2110 = vmatprep.mubr.bf16.mxu0 0
        %2111 = vmatmul.mubr.bf16.gmra.mrb[0].mxu0 %v2006
        %v2112 = vpop.f32.mrb[0].mxu0
        %v2113 = vadd.f32 0.0, %v2112
        %v2114 = vpop.f32.mrb[0].mxu0
        %v2115 = vpop.f32.mrb[0].mxu0
        %v2116 = vadd.f32 0.0, %v2115
        %v2117 = vpop.f32.mrb[0].mxu0
        %2118 = vmatprep.mubr.bf16.mxu0 0
        %2119 = vmatmul.mubr.bf16.gmra.mrb[0].mxu0 %v2009
        %v2120 = vpop.f32.mrb[0].mxu0
        %v2121 = vadd.f32 0.0, %v2120
        %v2122 = vpop.f32.mrb[0].mxu0
        %v2123 = vpop.f32.mrb[0].mxu0
        %v2124 = vadd.f32 0.0, %v2123
        %v2125 = vpop.f32.mrb[0].mxu0
        %2126 = vmatprep.mubr.bf16.mxu0 0
        %2127 = vmatmul.mubr.bf16.gmra.mrb[0].mxu0 %v2012
        %v2128 = vpop.f32.mrb[0].mxu0
        %v2129 = vadd.f32 0.0, %v2128
        %v2130 = vpop.f32.mrb[0].mxu0
        %v2131 = vpop.f32.mrb[0].mxu0
        %v2132 = vadd.f32 0.0, %v2131
        %v2133 = vpop.f32.mrb[0].mxu0
        %2134 = vmatprep.mubr.bf16.mxu0 0
        %2135 = vmatmul.mubr.bf16.gmra.mrb[0].mxu0 %v2015
        %v2136 = vpop.f32.mrb[0].mxu0
        %v2137 = vadd.f32 0.0, %v2136
        %v2138 = vpop.f32.mrb[0].mxu0
        %v2139 = vpop.f32.mrb[0].mxu0
        %v2140 = vadd.f32 0.0, %v2139
        %v2141 = vpop.f32.mrb[0].mxu0
        %2142 = vmatprep.mubr.bf16.mxu0 0
        %2143 = vmatmul.mubr.bf16.gmra.mrb[0].mxu0 %v2018
        %v2144 = vpop.f32.mrb[0].mxu0
        %v2145 = vadd.f32 0.0, %v2144
        %v2146 = vpop.f32.mrb[0].mxu0
        %v2147 = vpop.f32.mrb[0].mxu0
        %v2148 = vadd.f32 0.0, %v2147
        %v2149 = vpop.f32.mrb[0].mxu0
        %2150 = vmatprep.mubr.bf16.mxu0 0
        %2151 = vmatmul.mubr.bf16.gmra.mrb[0].mxu0 %v2021
        %v2152 = vpop.f32.mrb[0].mxu0
        %v2153 = vadd.f32 0.0, %v2152
        %v2154 = vpop.f32.mrb[0].mxu0
        %v2155 = vpop.f32.mrb[0].mxu0
        %v2156 = vadd.f32 0.0, %v2155
        %v2157 = vpop.f32.mrb[0].mxu0
        %2158 = vmatprep.mubr.bf16.mxu0 0
        %2159 = vmatmul.mubr.bf16.gmra.mrb[0].mxu0 %v2024
        %v2160 = vpop.f32.mrb[0].mxu0
        %v2161 = vadd.f32 0.0, %v2160
        %v2162 = vpop.f32.mrb[0].mxu0
        %v2163 = vpop.f32.mrb[0].mxu0
        %v2164 = vadd.f32 0.0, %v2163
        %v2165 = vpop.f32.mrb[0].mxu0
        %2166 = vmatprep.mubr.bf16.mxu0 0
        %2167 = vmatmul.mubr.bf16.gmra.mrb[0].mxu0 %v2027
        %v2168 = vpop.f32.mrb[0].mxu0
        %v2169 = vadd.f32 0.0, %v2168
        %v2170 = vpop.f32.mrb[0].mxu0
        %v2171 = vpop.f32.mrb[0].mxu0
        %v2172 = vadd.f32 0.0, %v2171
        %v2173 = vpop.f32.mrb[0].mxu0
        %2174 = vmatprep.mubr.bf16.mxu0 0
        %2175 = vmatmul.mubr.bf16.gmra.mrb[0].mxu0 %v2030
        %v2176 = vpop.f32.mrb[0].mxu0
        %v2177 = vadd.f32 0.0, %v2176
        %v2178 = vpop.f32.mrb[0].mxu0
        %v2179 = vpop.f32.mrb[0].mxu0
        %v2180 = vadd.f32 0.0, %v2179
        %v2181 = vpop.f32.mrb[0].mxu0
        %2182 = vmatprep.mubr.bf16.mxu0 0
        %2183 = vmatmul.mubr.bf16.gmra.mrb[0].mxu0 %v2033
        %v2184 = vpop.f32.mrb[0].mxu0
        %v2185 = vadd.f32 0.0, %v2184
        %v2186 = vpop.f32.mrb[0].mxu0
        %v2187 = vpop.f32.mrb[0].mxu0
        %v2188 = vadd.f32 0.0, %v2187
        %v2189 = vpop.f32.mrb[0].mxu0
        %2190 = vmatprep.mubr.bf16.mxu0 0
        %2191 = vmatmul.mubr.bf16.gmra.mrb[0].mxu0 %v2036
        %v2192 = vpop.f32.mrb[0].mxu0
        %v2193 = vadd.f32 0.0, %v2192
        %v2194 = vpop.f32.mrb[0].mxu0
        %v2195 = vpop.f32.mrb[0].mxu0
        %v2196 = vadd.f32 0.0, %v2195
        %v2197 = vpop.f32.mrb[0].mxu0
        %2198 = vdwg.mxu0
        %v2207 = vunpack.c.l.b16 %v738
        %v2208 = vunpack.c.l.b16 %v739
        %v2209 = vunpack.c.l.b16 %v740
        %v2210 = vunpack.c.l.b16 %v741
        %v2211 = vunpack.c.l.b16 %v742
        %v2212 = vunpack.c.l.b16 %v743
        %v2213 = vunpack.c.l.b16 %v744
        %v2214 = vunpack.c.l.b16 %v745
        %v2215 = vpack.c.b16 %v2208, %v2207
        %v2216 = vpack.c.b16 %v2210, %v2209
        %v2217 = vpack.c.b16 %v2212, %v2211
        %v2218 = vpack.c.b16 %v2214, %v2213
        %v2224 = vsel %vm480, %v722, 0
        %v2227 = vsel %vm480, %v723, 0
        %v2230 = vsel %vm480, %v724, 0
        %v2233 = vsel %vm480, %v725, 0
        %v2236 = vsel %vm480, %v726, 0
        %v2239 = vsel %vm480, %v727, 0
        %v2242 = vsel %vm480, %v728, 0
        %v2245 = vsel %vm480, %v729, 0
        %v2248 = vsel %vm480, %v730, 0
        %v2251 = vsel %vm480, %v731, 0
        %v2254 = vsel %vm480, %v732, 0
        %v2257 = vsel %vm480, %v733, 0
        %v2260 = vsel %vm480, %v734, 0
        %v2263 = vsel %vm480, %v735, 0
        %v2266 = vsel %vm480, %v736, 0
        %v2269 = vsel %vm480, %v737, 0
        %2271 = vmatprep.subr.bf16.mxu0 0
        %2272 = vmatpush1.bf16.msra.mxu0 %v2215
        %2273 = vmatprep.subr.bf16.mxu0 0
        %2274 = vmatpush1.bf16.msra.mxu0 %v2216
        %2275 = vmatprep.subr.bf16.mxu0 0
        %2276 = vmatpush1.bf16.msra.mxu0 %v2217
        %2277 = vmatprep.subr.bf16.mxu0 0
        %2278 = vmatpush1.bf16.msra.mxu0 %v2218
        %2279 = vmatprep.subr.bf16.mxu0 0
        %2280 = vmatpush1.bf16.msra.mxu0 0
        %2281 = vmatprep.subr.bf16.mxu0 0
        %2282 = vmatpush1.bf16.msra.mxu0 0
        %2283 = vmatprep.subr.bf16.mxu0 0
        %2284 = vmatpush1.bf16.msra.mxu0 0
        %2285 = vmatprep.subr.bf16.mxu0 0
        %2286 = vmatpush1.bf16.msra.mxu0 0
        %2287 = vmatprep.subr.bf16.mxu0 0
        %2288 = vmatpush1.bf16.msra.mxu0 0
        %2289 = vmatprep.subr.bf16.mxu0 0
        %2290 = vmatpush1.bf16.msra.mxu0 0
        %2291 = vmatprep.subr.bf16.mxu0 0
        %2292 = vmatpush1.bf16.msra.mxu0 0
        %2293 = vmatprep.subr.bf16.mxu0 0
        %2294 = vmatpush1.bf16.msra.mxu0 0
        %2295 = vmatprep.subr.bf16.mxu0 0
        %2296 = vmatpush1.bf16.msra.mxu0 0
        %2297 = vmatprep.subr.bf16.mxu0 0
        %2298 = vmatpush1.bf16.msra.mxu0 0
        %2299 = vmatprep.subr.bf16.mxu0 0
        %2300 = vmatpush1.bf16.msra.mxu0 0
        %2301 = vmatprep.subr.bf16.mxu0 0
        %2302 = vmatpush1.bf16.msra.mxu0 0
        %2303 = vmatprep.mubr.bf16.mxu0 0
        %2304 = vmatmul.mubr.bf16.gmra.mrb[0].mxu0 %v2224
        %v2305 = vpop.f32.mrb[0].mxu0
        %v2306 = vadd.f32 %v2073, %v2305
        %v2307 = vpop.f32.mrb[0].mxu0
        %v2308 = vpop.f32.mrb[0].mxu0
        %v2309 = vadd.f32 %v2076, %v2308
        %v2310 = vpop.f32.mrb[0].mxu0
        %2311 = vmatprep.mubr.bf16.mxu0 0
        %2312 = vmatmul.mubr.bf16.gmra.mrb[0].mxu0 %v2227
        %v2313 = vpop.f32.mrb[0].mxu0
        %v2314 = vadd.f32 %v2081, %v2313
        %v2315 = vpop.f32.mrb[0].mxu0
        %v2316 = vpop.f32.mrb[0].mxu0
        %v2317 = vadd.f32 %v2084, %v2316
        %v2318 = vpop.f32.mrb[0].mxu0
        %2319 = vmatprep.mubr.bf16.mxu0 0
        %2320 = vmatmul.mubr.bf16.gmra.mrb[0].mxu0 %v2230
        %v2321 = vpop.f32.mrb[0].mxu0
        %v2322 = vadd.f32 %v2089, %v2321
        %v2323 = vpop.f32.mrb[0].mxu0
        %v2324 = vpop.f32.mrb[0].mxu0
        %v2325 = vadd.f32 %v2092, %v2324
        %v2326 = vpop.f32.mrb[0].mxu0
        %2327 = vmatprep.mubr.bf16.mxu0 0
        %2328 = vmatmul.mubr.bf16.gmra.mrb[0].mxu0 %v2233
        %v2329 = vpop.f32.mrb[0].mxu0
        %v2330 = vadd.f32 %v2097, %v2329
        %v2331 = vpop.f32.mrb[0].mxu0
        %v2332 = vpop.f32.mrb[0].mxu0
        %v2333 = vadd.f32 %v2100, %v2332
        %v2334 = vpop.f32.mrb[0].mxu0
        %2335 = vmatprep.mubr.bf16.mxu0 0
        %2336 = vmatmul.mubr.bf16.gmra.mrb[0].mxu0 %v2236
        %v2337 = vpop.f32.mrb[0].mxu0
        %v2338 = vadd.f32 %v2105, %v2337
        %v2339 = vpop.f32.mrb[0].mxu0
        %v2340 = vpop.f32.mrb[0].mxu0
        %v2341 = vadd.f32 %v2108, %v2340
        %v2342 = vpop.f32.mrb[0].mxu0
        %2343 = vmatprep.mubr.bf16.mxu0 0
        %2344 = vmatmul.mubr.bf16.gmra.mrb[0].mxu0 %v2239
        %v2345 = vpop.f32.mrb[0].mxu0
        %v2346 = vadd.f32 %v2113, %v2345
        %v2347 = vpop.f32.mrb[0].mxu0
        %v2348 = vpop.f32.mrb[0].mxu0
        %v2349 = vadd.f32 %v2116, %v2348
        %v2350 = vpop.f32.mrb[0].mxu0
        %2351 = vmatprep.mubr.bf16.mxu0 0
        %2352 = vmatmul.mubr.bf16.gmra.mrb[0].mxu0 %v2242
        %v2353 = vpop.f32.mrb[0].mxu0
        %v2354 = vadd.f32 %v2121, %v2353
        %v2355 = vpop.f32.mrb[0].mxu0
        %v2356 = vpop.f32.mrb[0].mxu0
        %v2357 = vadd.f32 %v2124, %v2356
        %v2358 = vpop.f32.mrb[0].mxu0
        %2359 = vmatprep.mubr.bf16.mxu0 0
        %2360 = vmatmul.mubr.bf16.gmra.mrb[0].mxu0 %v2245
        %v2361 = vpop.f32.mrb[0].mxu0
        %v2362 = vadd.f32 %v2129, %v2361
        %v2363 = vpop.f32.mrb[0].mxu0
        %v2364 = vpop.f32.mrb[0].mxu0
        %v2365 = vadd.f32 %v2132, %v2364
        %v2366 = vpop.f32.mrb[0].mxu0
        %2367 = vmatprep.mubr.bf16.mxu0 0
        %2368 = vmatmul.mubr.bf16.gmra.mrb[0].mxu0 %v2248
        %v2369 = vpop.f32.mrb[0].mxu0
        %v2370 = vadd.f32 %v2137, %v2369
        %v2371 = vpop.f32.mrb[0].mxu0
        %v2372 = vpop.f32.mrb[0].mxu0
        %v2373 = vadd.f32 %v2140, %v2372
        %v2374 = vpop.f32.mrb[0].mxu0
        %2375 = vmatprep.mubr.bf16.mxu0 0
        %2376 = vmatmul.mubr.bf16.gmra.mrb[0].mxu0 %v2251
        %v2377 = vpop.f32.mrb[0].mxu0
        %v2378 = vadd.f32 %v2145, %v2377
        %v2379 = vpop.f32.mrb[0].mxu0
        %v2380 = vpop.f32.mrb[0].mxu0
        %v2381 = vadd.f32 %v2148, %v2380
        %v2382 = vpop.f32.mrb[0].mxu0
        %2383 = vmatprep.mubr.bf16.mxu0 0
        %2384 = vmatmul.mubr.bf16.gmra.mrb[0].mxu0 %v2254
        %v2385 = vpop.f32.mrb[0].mxu0
        %v2386 = vadd.f32 %v2153, %v2385
        %v2387 = vpop.f32.mrb[0].mxu0
        %v2388 = vpop.f32.mrb[0].mxu0
        %v2389 = vadd.f32 %v2156, %v2388
        %v2390 = vpop.f32.mrb[0].mxu0
        %2391 = vmatprep.mubr.bf16.mxu0 0
        %2392 = vmatmul.mubr.bf16.gmra.mrb[0].mxu0 %v2257
        %v2393 = vpop.f32.mrb[0].mxu0
        %v2394 = vadd.f32 %v2161, %v2393
        %v2395 = vpop.f32.mrb[0].mxu0
        %v2396 = vpop.f32.mrb[0].mxu0
        %v2397 = vadd.f32 %v2164, %v2396
        %v2398 = vpop.f32.mrb[0].mxu0
        %2399 = vmatprep.mubr.bf16.mxu0 0
        %2400 = vmatmul.mubr.bf16.gmra.mrb[0].mxu0 %v2260
        %v2401 = vpop.f32.mrb[0].mxu0
        %v2402 = vadd.f32 %v2169, %v2401
        %v2403 = vpop.f32.mrb[0].mxu0
        %v2404 = vpop.f32.mrb[0].mxu0
        %v2405 = vadd.f32 %v2172, %v2404
        %v2406 = vpop.f32.mrb[0].mxu0
        %2407 = vmatprep.mubr.bf16.mxu0 0
        %2408 = vmatmul.mubr.bf16.gmra.mrb[0].mxu0 %v2263
        %v2409 = vpop.f32.mrb[0].mxu0
        %v2410 = vadd.f32 %v2177, %v2409
        %v2411 = vpop.f32.mrb[0].mxu0
        %v2412 = vpop.f32.mrb[0].mxu0
        %v2413 = vadd.f32 %v2180, %v2412
        %v2414 = vpop.f32.mrb[0].mxu0
        %2415 = vmatprep.mubr.bf16.mxu0 0
        %2416 = vmatmul.mubr.bf16.gmra.mrb[0].mxu0 %v2266
        %v2417 = vpop.f32.mrb[0].mxu0
        %v2418 = vadd.f32 %v2185, %v2417
        %v2419 = vpop.f32.mrb[0].mxu0
        %v2420 = vpop.f32.mrb[0].mxu0
        %v2421 = vadd.f32 %v2188, %v2420
        %v2422 = vpop.f32.mrb[0].mxu0
        %2423 = vmatprep.mubr.bf16.mxu0 0
        %2424 = vmatmul.mubr.bf16.gmra.mrb[0].mxu0 %v2269
        %v2425 = vpop.f32.mrb[0].mxu0
        %v2426 = vadd.f32 %v2193, %v2425
        %v2427 = vpop.f32.mrb[0].mxu0
        %v2428 = vpop.f32.mrb[0].mxu0
        %v2429 = vadd.f32 %v2196, %v2428
        %v2430 = vpop.f32.mrb[0].mxu0
        %2431 = vdwg.mxu0
        %2432 = vmatprep.subr.bf16.mxu0 0
        %2433 = vmatpush1.bf16.msra.mxu0 %v1941
        %2434 = vmatprep.subr.bf16.mxu0 0
        %2435 = vmatpush1.bf16.msra.mxu0 %v1942
        %2436 = vmatprep.subr.bf16.mxu0 0
        %2437 = vmatpush1.bf16.msra.mxu0 %v1943
        %2438 = vmatprep.subr.bf16.mxu0 0
        %2439 = vmatpush1.bf16.msra.mxu0 %v1944
        %2440 = vmatprep.subr.bf16.mxu0 0
        %2441 = vmatpush1.bf16.msra.mxu0 %v1945
        %2442 = vmatprep.subr.bf16.mxu0 0
        %2443 = vmatpush1.bf16.msra.mxu0 %v1946
        %2444 = vmatprep.subr.bf16.mxu0 0
        %2445 = vmatpush1.bf16.msra.mxu0 %v1947
        %2446 = vmatprep.subr.bf16.mxu0 0
        %2447 = vmatpush1.bf16.msra.mxu0 %v1948
        %2448 = vmatprep.subr.bf16.mxu0 0
        %2449 = vmatpush1.bf16.msra.mxu0 %v1949
        %2450 = vmatprep.subr.bf16.mxu0 0
        %2451 = vmatpush1.bf16.msra.mxu0 %v1950
        %2452 = vmatprep.subr.bf16.mxu0 0
        %2453 = vmatpush1.bf16.msra.mxu0 %v1951
        %2454 = vmatprep.subr.bf16.mxu0 0
        %2455 = vmatpush1.bf16.msra.mxu0 %v1952
        %2456 = vmatprep.subr.bf16.mxu0 0
        %2457 = vmatpush1.bf16.msra.mxu0 %v1953
        %2458 = vmatprep.subr.bf16.mxu0 0
        %2459 = vmatpush1.bf16.msra.mxu0 %v1954
        %2460 = vmatprep.subr.bf16.mxu0 0
        %2461 = vmatpush1.bf16.msra.mxu0 %v1955
        %2462 = vmatprep.subr.bf16.mxu0 0
        %2463 = vmatpush1.bf16.msra.mxu0 %v1956
        %2464 = vmatprep.mubr.bf16.mxu0 %v843
        %2465 = vmatmul.mubr.bf16.gmra.mrb[0].mxu0 %v842
        %v2466 = vpop.f32.mrb[0].mxu0
        %v2467 = vadd.f32 0.0, %v2466
        %v2468 = vpop.f32.mrb[0].mxu0
        %v2469 = vpop.f32.mrb[0].mxu0
        %v2470 = vadd.f32 0.0, %v2469
        %v2471 = vpop.f32.mrb[0].mxu0
        %2472 = vmatprep.mubr.bf16.mxu0 %v845
        %2473 = vmatmul.mubr.bf16.gmra.mrb[0].mxu0 %v844
        %v2474 = vpop.f32.mrb[0].mxu0
        %v2475 = vadd.f32 0.0, %v2474
        %v2476 = vpop.f32.mrb[0].mxu0
        %v2477 = vpop.f32.mrb[0].mxu0
        %v2478 = vadd.f32 0.0, %v2477
        %v2479 = vpop.f32.mrb[0].mxu0
        %2480 = vmatprep.mubr.bf16.mxu0 %v847
        %2481 = vmatmul.mubr.bf16.gmra.mrb[0].mxu0 %v846
        %v2482 = vpop.f32.mrb[0].mxu0
        %v2483 = vadd.f32 0.0, %v2482
        %v2484 = vpop.f32.mrb[0].mxu0
        %v2485 = vpop.f32.mrb[0].mxu0
        %v2486 = vadd.f32 0.0, %v2485
        %v2487 = vpop.f32.mrb[0].mxu0
        %2488 = vmatprep.mubr.bf16.mxu0 %v849
        %2489 = vmatmul.mubr.bf16.gmra.mrb[0].mxu0 %v848
        %v2490 = vpop.f32.mrb[0].mxu0
        %v2491 = vadd.f32 0.0, %v2490
        %v2492 = vpop.f32.mrb[0].mxu0
        %v2493 = vpop.f32.mrb[0].mxu0
        %v2494 = vadd.f32 0.0, %v2493
        %v2495 = vpop.f32.mrb[0].mxu0
        %2496 = vmatprep.mubr.bf16.mxu0 %v851
        %2497 = vmatmul.mubr.bf16.gmra.mrb[0].mxu0 %v850
        %v2498 = vpop.f32.mrb[0].mxu0
        %v2499 = vadd.f32 0.0, %v2498
        %v2500 = vpop.f32.mrb[0].mxu0
        %v2501 = vpop.f32.mrb[0].mxu0
        %v2502 = vadd.f32 0.0, %v2501
        %v2503 = vpop.f32.mrb[0].mxu0
        %2504 = vmatprep.mubr.bf16.mxu0 %v853
        %2505 = vmatmul.mubr.bf16.gmra.mrb[0].mxu0 %v852
        %v2506 = vpop.f32.mrb[0].mxu0
        %v2507 = vadd.f32 0.0, %v2506
        %v2508 = vpop.f32.mrb[0].mxu0
        %v2509 = vpop.f32.mrb[0].mxu0
        %v2510 = vadd.f32 0.0, %v2509
        %v2511 = vpop.f32.mrb[0].mxu0
        %2512 = vmatprep.mubr.bf16.mxu0 %v855
        %2513 = vmatmul.mubr.bf16.gmra.mrb[0].mxu0 %v854
        %v2514 = vpop.f32.mrb[0].mxu0
        %v2515 = vadd.f32 0.0, %v2514
        %v2516 = vpop.f32.mrb[0].mxu0
        %v2517 = vpop.f32.mrb[0].mxu0
        %v2518 = vadd.f32 0.0, %v2517
        %v2519 = vpop.f32.mrb[0].mxu0
        %2520 = vmatprep.mubr.bf16.mxu0 %v857
        %2521 = vmatmul.mubr.bf16.gmra.mrb[0].mxu0 %v856
        %v2522 = vpop.f32.mrb[0].mxu0
        %v2523 = vadd.f32 0.0, %v2522
        %v2524 = vpop.f32.mrb[0].mxu0
        %v2525 = vpop.f32.mrb[0].mxu0
        %v2526 = vadd.f32 0.0, %v2525
        %v2527 = vpop.f32.mrb[0].mxu0
        %2528 = vmatprep.mubr.bf16.mxu0 %v859
        %2529 = vmatmul.mubr.bf16.gmra.mrb[0].mxu0 %v858
        %v2530 = vpop.f32.mrb[0].mxu0
        %v2531 = vadd.f32 0.0, %v2530
        %v2532 = vpop.f32.mrb[0].mxu0
        %v2533 = vpop.f32.mrb[0].mxu0
        %v2534 = vadd.f32 0.0, %v2533
        %v2535 = vpop.f32.mrb[0].mxu0
        %2536 = vmatprep.mubr.bf16.mxu0 %v861
        %2537 = vmatmul.mubr.bf16.gmra.mrb[0].mxu0 %v860
        %v2538 = vpop.f32.mrb[0].mxu0
        %v2539 = vadd.f32 0.0, %v2538
        %v2540 = vpop.f32.mrb[0].mxu0
        %v2541 = vpop.f32.mrb[0].mxu0
        %v2542 = vadd.f32 0.0, %v2541
        %v2543 = vpop.f32.mrb[0].mxu0
        %2544 = vmatprep.mubr.bf16.mxu0 %v863
        %2545 = vmatmul.mubr.bf16.gmra.mrb[0].mxu0 %v862
        %v2546 = vpop.f32.mrb[0].mxu0
        %v2547 = vadd.f32 0.0, %v2546
        %v2548 = vpop.f32.mrb[0].mxu0
        %v2549 = vpop.f32.mrb[0].mxu0
        %v2550 = vadd.f32 0.0, %v2549
        %v2551 = vpop.f32.mrb[0].mxu0
        %2552 = vmatprep.mubr.bf16.mxu0 %v865
        %2553 = vmatmul.mubr.bf16.gmra.mrb[0].mxu0 %v864
        %v2554 = vpop.f32.mrb[0].mxu0
        %v2555 = vadd.f32 0.0, %v2554
        %v2556 = vpop.f32.mrb[0].mxu0
        %v2557 = vpop.f32.mrb[0].mxu0
        %v2558 = vadd.f32 0.0, %v2557
        %v2559 = vpop.f32.mrb[0].mxu0
        %2560 = vmatprep.mubr.bf16.mxu0 %v867
        %2561 = vmatmul.mubr.bf16.gmra.mrb[0].mxu0 %v866
        %v2562 = vpop.f32.mrb[0].mxu0
        %v2563 = vadd.f32 0.0, %v2562
        %v2564 = vpop.f32.mrb[0].mxu0
        %v2565 = vpop.f32.mrb[0].mxu0
        %v2566 = vadd.f32 0.0, %v2565
        %v2567 = vpop.f32.mrb[0].mxu0
        %2568 = vmatprep.mubr.bf16.mxu0 %v869
        %2569 = vmatmul.mubr.bf16.gmra.mrb[0].mxu0 %v868
        %v2570 = vpop.f32.mrb[0].mxu0
        %v2571 = vadd.f32 0.0, %v2570
        %v2572 = vpop.f32.mrb[0].mxu0
        %v2573 = vpop.f32.mrb[0].mxu0
        %v2574 = vadd.f32 0.0, %v2573
        %v2575 = vpop.f32.mrb[0].mxu0
        %2576 = vmatprep.mubr.bf16.mxu0 %v871
        %2577 = vmatmul.mubr.bf16.gmra.mrb[0].mxu0 %v870
        %v2578 = vpop.f32.mrb[0].mxu0
        %v2579 = vadd.f32 0.0, %v2578
        %v2580 = vpop.f32.mrb[0].mxu0
        %v2581 = vpop.f32.mrb[0].mxu0
        %v2582 = vadd.f32 0.0, %v2581
        %v2583 = vpop.f32.mrb[0].mxu0
        %2584 = vmatprep.mubr.bf16.mxu0 %v873
        %2585 = vmatmul.mubr.bf16.gmra.mrb[0].mxu0 %v872
        %v2586 = vpop.f32.mrb[0].mxu0
        %v2587 = vadd.f32 0.0, %v2586
        %v2588 = vpop.f32.mrb[0].mxu0
        %v2589 = vpop.f32.mrb[0].mxu0
        %v2590 = vadd.f32 0.0, %v2589
        %v2591 = vpop.f32.mrb[0].mxu0
        %2592 = vdwg.mxu0
        %2593 = vmatprep.subr.bf16.mxu0 0
        %2594 = vmatpush1.bf16.msra.mxu0 %v1941
        %2595 = vmatprep.subr.bf16.mxu0 0
        %2596 = vmatpush1.bf16.msra.mxu0 %v1942
        %2597 = vmatprep.subr.bf16.mxu0 0
        %2598 = vmatpush1.bf16.msra.mxu0 %v1943
        %2599 = vmatprep.subr.bf16.mxu0 0
        %2600 = vmatpush1.bf16.msra.mxu0 %v1944
        %2601 = vmatprep.subr.bf16.mxu0 0
        %2602 = vmatpush1.bf16.msra.mxu0 %v1945
        %2603 = vmatprep.subr.bf16.mxu0 0
        %2604 = vmatpush1.bf16.msra.mxu0 %v1946
        %2605 = vmatprep.subr.bf16.mxu0 0
        %2606 = vmatpush1.bf16.msra.mxu0 %v1947
        %2607 = vmatprep.subr.bf16.mxu0 0
        %2608 = vmatpush1.bf16.msra.mxu0 %v1948
        %2609 = vmatprep.subr.bf16.mxu0 0
        %2610 = vmatpush1.bf16.msra.mxu0 %v1949
        %2611 = vmatprep.subr.bf16.mxu0 0
        %2612 = vmatpush1.bf16.msra.mxu0 %v1950
        %2613 = vmatprep.subr.bf16.mxu0 0
        %2614 = vmatpush1.bf16.msra.mxu0 %v1951
        %2615 = vmatprep.subr.bf16.mxu0 0
        %2616 = vmatpush1.bf16.msra.mxu0 %v1952
        %2617 = vmatprep.subr.bf16.mxu0 0
        %2618 = vmatpush1.bf16.msra.mxu0 %v1953
        %2619 = vmatprep.subr.bf16.mxu0 0
        %2620 = vmatpush1.bf16.msra.mxu0 %v1954
        %2621 = vmatprep.subr.bf16.mxu0 0
        %2622 = vmatpush1.bf16.msra.mxu0 %v1955
        %2623 = vmatprep.subr.bf16.mxu0 0
        %2624 = vmatpush1.bf16.msra.mxu0 %v1956
        %2625 = vmatprep.mubr.bf16.mxu0 %v1164
        %2626 = vmatmul.mubr.bf16.gmra.mrb[0].mxu0 %v1163
        %v2627 = vpop.f32.mrb[0].mxu0
        %v2628 = vadd.f32 0.0, %v2627
        %v2629 = vpop.f32.mrb[0].mxu0
        %v2630 = vpop.f32.mrb[0].mxu0
        %v2631 = vadd.f32 0.0, %v2630
        %v2632 = vpop.f32.mrb[0].mxu0
        %2633 = vmatprep.mubr.bf16.mxu0 %v1166
        %2634 = vmatmul.mubr.bf16.gmra.mrb[0].mxu0 %v1165
        %v2635 = vpop.f32.mrb[0].mxu0
        %v2636 = vadd.f32 0.0, %v2635
        %v2637 = vpop.f32.mrb[0].mxu0
        %v2638 = vpop.f32.mrb[0].mxu0
        %v2639 = vadd.f32 0.0, %v2638
        %v2640 = vpop.f32.mrb[0].mxu0
        %2641 = vmatprep.mubr.bf16.mxu0 %v1168
        %2642 = vmatmul.mubr.bf16.gmra.mrb[0].mxu0 %v1167
        %v2643 = vpop.f32.mrb[0].mxu0
        %v2644 = vadd.f32 0.0, %v2643
        %v2645 = vpop.f32.mrb[0].mxu0
        %v2646 = vpop.f32.mrb[0].mxu0
        %v2647 = vadd.f32 0.0, %v2646
        %v2648 = vpop.f32.mrb[0].mxu0
        %2649 = vmatprep.mubr.bf16.mxu0 %v1170
        %2650 = vmatmul.mubr.bf16.gmra.mrb[0].mxu0 %v1169
        %v2651 = vpop.f32.mrb[0].mxu0
        %v2652 = vadd.f32 0.0, %v2651
        %v2653 = vpop.f32.mrb[0].mxu0
        %v2654 = vpop.f32.mrb[0].mxu0
        %v2655 = vadd.f32 0.0, %v2654
        %v2656 = vpop.f32.mrb[0].mxu0
        %2657 = vmatprep.mubr.bf16.mxu0 %v1172
        %2658 = vmatmul.mubr.bf16.gmra.mrb[0].mxu0 %v1171
        %v2659 = vpop.f32.mrb[0].mxu0
        %v2660 = vadd.f32 0.0, %v2659
        %v2661 = vpop.f32.mrb[0].mxu0
        %v2662 = vpop.f32.mrb[0].mxu0
        %v2663 = vadd.f32 0.0, %v2662
        %v2664 = vpop.f32.mrb[0].mxu0
        %2665 = vmatprep.mubr.bf16.mxu0 %v1174
        %2666 = vmatmul.mubr.bf16.gmra.mrb[0].mxu0 %v1173
        %v2667 = vpop.f32.mrb[0].mxu0
        %v2668 = vadd.f32 0.0, %v2667
        %v2669 = vpop.f32.mrb[0].mxu0
        %v2670 = vpop.f32.mrb[0].mxu0
        %v2671 = vadd.f32 0.0, %v2670
        %v2672 = vpop.f32.mrb[0].mxu0
        %2673 = vmatprep.mubr.bf16.mxu0 %v1176
        %2674 = vmatmul.mubr.bf16.gmra.mrb[0].mxu0 %v1175
        %v2675 = vpop.f32.mrb[0].mxu0
        %v2676 = vadd.f32 0.0, %v2675
        %v2677 = vpop.f32.mrb[0].mxu0
        %v2678 = vpop.f32.mrb[0].mxu0
        %v2679 = vadd.f32 0.0, %v2678
        %v2680 = vpop.f32.mrb[0].mxu0
        %2681 = vmatprep.mubr.bf16.mxu0 %v1178
        %2682 = vmatmul.mubr.bf16.gmra.mrb[0].mxu0 %v1177
        %v2683 = vpop.f32.mrb[0].mxu0
        %v2684 = vadd.f32 0.0, %v2683
        %v2685 = vpop.f32.mrb[0].mxu0
        %v2686 = vpop.f32.mrb[0].mxu0
        %v2687 = vadd.f32 0.0, %v2686
        %v2688 = vpop.f32.mrb[0].mxu0
        %2689 = vmatprep.mubr.bf16.mxu0 %v1180
        %2690 = vmatmul.mubr.bf16.gmra.mrb[0].mxu0 %v1179
        %v2691 = vpop.f32.mrb[0].mxu0
        %v2692 = vadd.f32 0.0, %v2691
        %v2693 = vpop.f32.mrb[0].mxu0
        %v2694 = vpop.f32.mrb[0].mxu0
        %v2695 = vadd.f32 0.0, %v2694
        %v2696 = vpop.f32.mrb[0].mxu0
        %2697 = vmatprep.mubr.bf16.mxu0 %v1182
        %2698 = vmatmul.mubr.bf16.gmra.mrb[0].mxu0 %v1181
        %v2699 = vpop.f32.mrb[0].mxu0
        %v2700 = vadd.f32 0.0, %v2699
        %v2701 = vpop.f32.mrb[0].mxu0
        %v2702 = vpop.f32.mrb[0].mxu0
        %v2703 = vadd.f32 0.0, %v2702
        %v2704 = vpop.f32.mrb[0].mxu0
        %2705 = vmatprep.mubr.bf16.mxu0 %v1184
        %2706 = vmatmul.mubr.bf16.gmra.mrb[0].mxu0 %v1183
        %v2707 = vpop.f32.mrb[0].mxu0
        %v2708 = vadd.f32 0.0, %v2707
        %v2709 = vpop.f32.mrb[0].mxu0
        %v2710 = vpop.f32.mrb[0].mxu0
        %v2711 = vadd.f32 0.0, %v2710
        %v2712 = vpop.f32.mrb[0].mxu0
        %2713 = vmatprep.mubr.bf16.mxu0 %v1186
        %2714 = vmatmul.mubr.bf16.gmra.mrb[0].mxu0 %v1185
        %v2715 = vpop.f32.mrb[0].mxu0
        %v2716 = vadd.f32 0.0, %v2715
        %v2717 = vpop.f32.mrb[0].mxu0
        %v2718 = vpop.f32.mrb[0].mxu0
        %v2719 = vadd.f32 0.0, %v2718
        %v2720 = vpop.f32.mrb[0].mxu0
        %2721 = vmatprep.mubr.bf16.mxu0 %v1188
        %2722 = vmatmul.mubr.bf16.gmra.mrb[0].mxu0 %v1187
        %v2723 = vpop.f32.mrb[0].mxu0
        %v2724 = vadd.f32 0.0, %v2723
        %v2725 = vpop.f32.mrb[0].mxu0
        %v2726 = vpop.f32.mrb[0].mxu0
        %v2727 = vadd.f32 0.0, %v2726
        %v2728 = vpop.f32.mrb[0].mxu0
        %2729 = vmatprep.mubr.bf16.mxu0 %v1190
        %2730 = vmatmul.mubr.bf16.gmra.mrb[0].mxu0 %v1189
        %v2731 = vpop.f32.mrb[0].mxu0
        %v2732 = vadd.f32 0.0, %v2731
        %v2733 = vpop.f32.mrb[0].mxu0
        %v2734 = vpop.f32.mrb[0].mxu0
        %v2735 = vadd.f32 0.0, %v2734
        %v2736 = vpop.f32.mrb[0].mxu0
        %2737 = vmatprep.mubr.bf16.mxu0 %v1192
        %2738 = vmatmul.mubr.bf16.gmra.mrb[0].mxu0 %v1191
        %v2739 = vpop.f32.mrb[0].mxu0
        %v2740 = vadd.f32 0.0, %v2739
        %v2741 = vpop.f32.mrb[0].mxu0
        %v2742 = vpop.f32.mrb[0].mxu0
        %v2743 = vadd.f32 0.0, %v2742
        %v2744 = vpop.f32.mrb[0].mxu0
        %2745 = vmatprep.mubr.bf16.mxu0 %v1194
        %2746 = vmatmul.mubr.bf16.gmra.mrb[0].mxu0 %v1193
        %v2747 = vpop.f32.mrb[0].mxu0
        %v2748 = vadd.f32 0.0, %v2747
        %v2749 = vpop.f32.mrb[0].mxu0
        %v2750 = vpop.f32.mrb[0].mxu0
        %v2751 = vadd.f32 0.0, %v2750
        %v2752 = vpop.f32.mrb[0].mxu0
        %2753 = vdwg.mxu0
        %v2754 = vpack.c.bf16 %v2470, %v2467
        %v2755 = vpack.c.bf16 %v2478, %v2475
        %v2756 = vpack.c.bf16 %v2486, %v2483
        %v2757 = vpack.c.bf16 %v2494, %v2491
        %v2758 = vpack.c.bf16 %v2502, %v2499
        %v2759 = vpack.c.bf16 %v2510, %v2507
        %v2760 = vpack.c.bf16 %v2518, %v2515
        %v2761 = vpack.c.bf16 %v2526, %v2523
        %v2762 = vpack.c.bf16 %v2534, %v2531
        %v2763 = vpack.c.bf16 %v2542, %v2539
        %v2764 = vpack.c.bf16 %v2550, %v2547
        %v2765 = vpack.c.bf16 %v2558, %v2555
        %v2766 = vpack.c.bf16 %v2566, %v2563
        %v2767 = vpack.c.bf16 %v2574, %v2571
        %v2768 = vpack.c.bf16 %v2582, %v2579
        %v2769 = vpack.c.bf16 %v2590, %v2587
        %s2770 = scalar_lea.vmem %s2, 96
        %v2771 = vld [vmem:[%s2770] sm:$0xf]
        %v2772 = vld [vmem:[%s2770 + $0x4] sm:$0xf]
        %v2773 = vld [vmem:[%s2770 + $0x8] sm:$0xf]
        %v2774 = vld [vmem:[%s2770 + $0xc] sm:$0xf]
        %v2775 = vld [vmem:[%s2770 + $0x10] sm:$0xf]
        %v2776 = vld [vmem:[%s2770 + $0x14] sm:$0xf]
        %v2777 = vld [vmem:[%s2770 + $0x18] sm:$0xf]
        %v2778 = vld [vmem:[%s2770 + $0x1c] sm:$0xf]
        %v2779 = vpack.c.bf16 %v2631, %v2628
        %v2780 = vpack.c.bf16 %v2639, %v2636
        %v2781 = vpack.c.bf16 %v2647, %v2644
        %v2782 = vpack.c.bf16 %v2655, %v2652
        %v2783 = vpack.c.bf16 %v2663, %v2660
        %v2784 = vpack.c.bf16 %v2671, %v2668
        %v2785 = vpack.c.bf16 %v2679, %v2676
        %v2786 = vpack.c.bf16 %v2687, %v2684
        %v2787 = vpack.c.bf16 %v2695, %v2692
        %v2788 = vpack.c.bf16 %v2703, %v2700
        %v2789 = vpack.c.bf16 %v2711, %v2708
        %v2790 = vpack.c.bf16 %v2719, %v2716
        %v2791 = vpack.c.bf16 %v2727, %v2724
        %v2792 = vpack.c.bf16 %v2735, %v2732
        %v2793 = vpack.c.bf16 %v2743, %v2740
        %v2794 = vpack.c.bf16 %v2751, %v2748
        %s2795 = scalar_lea.vmem %s2, 128
        %v2796 = vld [vmem:[%s2795] sm:$0xf]
        %v2797 = vld [vmem:[%s2795 + $0x4] sm:$0xf]
        %v2798 = vld [vmem:[%s2795 + $0x8] sm:$0xf]
        %v2799 = vld [vmem:[%s2795 + $0xc] sm:$0xf]
        %v2800 = vld [vmem:[%s2795 + $0x10] sm:$0xf]
        %v2801 = vld [vmem:[%s2795 + $0x14] sm:$0xf]
        %v2802 = vld [vmem:[%s2795 + $0x18] sm:$0xf]
        %v2803 = vld [vmem:[%s2795 + $0x1c] sm:$0xf]
        %v2812 = vunpack.c.l.b16 %v2796
        %v2813 = vunpack.c.l.b16 %v2797
        %v2814 = vunpack.c.l.b16 %v2798
        %v2815 = vunpack.c.l.b16 %v2799
        %v2816 = vunpack.c.l.b16 %v2800
        %v2817 = vunpack.c.l.b16 %v2801
        %v2818 = vunpack.c.l.b16 %v2802
        %v2819 = vunpack.c.l.b16 %v2803
        %v2820 = vpack.c.b16 %v2813, %v2812
        %v2821 = vpack.c.b16 %v2815, %v2814
        %v2822 = vpack.c.b16 %v2817, %v2816
        %v2823 = vpack.c.b16 %v2819, %v2818
        %v2829 = vsel %vm480, %v2779, 0
        %v2832 = vsel %vm480, %v2780, 0
        %v2835 = vsel %vm480, %v2781, 0
        %v2838 = vsel %vm480, %v2782, 0
        %v2841 = vsel %vm480, %v2783, 0
        %v2844 = vsel %vm480, %v2784, 0
        %v2847 = vsel %vm480, %v2785, 0
        %v2850 = vsel %vm480, %v2786, 0
        %v2853 = vsel %vm480, %v2787, 0
        %v2856 = vsel %vm480, %v2788, 0
        %v2859 = vsel %vm480, %v2789, 0
        %v2862 = vsel %vm480, %v2790, 0
        %v2865 = vsel %vm480, %v2791, 0
        %v2868 = vsel %vm480, %v2792, 0
        %v2871 = vsel %vm480, %v2793, 0
        %v2874 = vsel %vm480, %v2794, 0
        %2876 = vmatprep.subr.bf16.mxu0 0
        %2877 = vmatpush1.bf16.msra.mxu0 %v2820
        %2878 = vmatprep.subr.bf16.mxu0 0
        %2879 = vmatpush1.bf16.msra.mxu0 %v2821
        %2880 = vmatprep.subr.bf16.mxu0 0
        %2881 = vmatpush1.bf16.msra.mxu0 %v2822
        %2882 = vmatprep.subr.bf16.mxu0 0
        %2883 = vmatpush1.bf16.msra.mxu0 %v2823
        %2884 = vmatprep.subr.bf16.mxu0 0
        %2885 = vmatpush1.bf16.msra.mxu0 0
        %2886 = vmatprep.subr.bf16.mxu0 0
        %2887 = vmatpush1.bf16.msra.mxu0 0
        %2888 = vmatprep.subr.bf16.mxu0 0
        %2889 = vmatpush1.bf16.msra.mxu0 0
        %2890 = vmatprep.subr.bf16.mxu0 0
        %2891 = vmatpush1.bf16.msra.mxu0 0
        %2892 = vmatprep.subr.bf16.mxu0 0
        %2893 = vmatpush1.bf16.msra.mxu0 0
        %2894 = vmatprep.subr.bf16.mxu0 0
        %2895 = vmatpush1.bf16.msra.mxu0 0
        %2896 = vmatprep.subr.bf16.mxu0 0
        %2897 = vmatpush1.bf16.msra.mxu0 0
        %2898 = vmatprep.subr.bf16.mxu0 0
        %2899 = vmatpush1.bf16.msra.mxu0 0
        %2900 = vmatprep.subr.bf16.mxu0 0
        %2901 = vmatpush1.bf16.msra.mxu0 0
        %2902 = vmatprep.subr.bf16.mxu0 0
        %2903 = vmatpush1.bf16.msra.mxu0 0
        %2904 = vmatprep.subr.bf16.mxu0 0
        %2905 = vmatpush1.bf16.msra.mxu0 0
        %2906 = vmatprep.subr.bf16.mxu0 0
        %2907 = vmatpush1.bf16.msra.mxu0 0
        %2908 = vmatprep.mubr.bf16.mxu0 0
        %2909 = vmatmul.mubr.bf16.gmra.mrb[0].mxu0 %v2829
        %v2910 = vpop.f32.mrb[0].mxu0
        %v2911 = vadd.f32 0.0, %v2910
        %v2912 = vpop.f32.mrb[0].mxu0
        %v2913 = vpop.f32.mrb[0].mxu0
        %v2914 = vadd.f32 0.0, %v2913
        %v2915 = vpop.f32.mrb[0].mxu0
        %2916 = vmatprep.mubr.bf16.mxu0 0
        %2917 = vmatmul.mubr.bf16.gmra.mrb[0].mxu0 %v2832
        %v2918 = vpop.f32.mrb[0].mxu0
        %v2919 = vadd.f32 0.0, %v2918
        %v2920 = vpop.f32.mrb[0].mxu0
        %v2921 = vpop.f32.mrb[0].mxu0
        %v2922 = vadd.f32 0.0, %v2921
        %v2923 = vpop.f32.mrb[0].mxu0
        %2924 = vmatprep.mubr.bf16.mxu0 0
        %2925 = vmatmul.mubr.bf16.gmra.mrb[0].mxu0 %v2835
        %v2926 = vpop.f32.mrb[0].mxu0
        %v2927 = vadd.f32 0.0, %v2926
        %v2928 = vpop.f32.mrb[0].mxu0
        %v2929 = vpop.f32.mrb[0].mxu0
        %v2930 = vadd.f32 0.0, %v2929
        %v2931 = vpop.f32.mrb[0].mxu0
        %2932 = vmatprep.mubr.bf16.mxu0 0
        %2933 = vmatmul.mubr.bf16.gmra.mrb[0].mxu0 %v2838
        %v2934 = vpop.f32.mrb[0].mxu0
        %v2935 = vadd.f32 0.0, %v2934
        %v2936 = vpop.f32.mrb[0].mxu0
        %v2937 = vpop.f32.mrb[0].mxu0
        %v2938 = vadd.f32 0.0, %v2937
        %v2939 = vpop.f32.mrb[0].mxu0
        %2940 = vmatprep.mubr.bf16.mxu0 0
        %2941 = vmatmul.mubr.bf16.gmra.mrb[0].mxu0 %v2841
        %v2942 = vpop.f32.mrb[0].mxu0
        %v2943 = vadd.f32 0.0, %v2942
        %v2944 = vpop.f32.mrb[0].mxu0
        %v2945 = vpop.f32.mrb[0].mxu0
        %v2946 = vadd.f32 0.0, %v2945
        %v2947 = vpop.f32.mrb[0].mxu0
        %2948 = vmatprep.mubr.bf16.mxu0 0
        %2949 = vmatmul.mubr.bf16.gmra.mrb[0].mxu0 %v2844
        %v2950 = vpop.f32.mrb[0].mxu0
        %v2951 = vadd.f32 0.0, %v2950
        %v2952 = vpop.f32.mrb[0].mxu0
        %v2953 = vpop.f32.mrb[0].mxu0
        %v2954 = vadd.f32 0.0, %v2953
        %v2955 = vpop.f32.mrb[0].mxu0
        %2956 = vmatprep.mubr.bf16.mxu0 0
        %2957 = vmatmul.mubr.bf16.gmra.mrb[0].mxu0 %v2847
        %v2958 = vpop.f32.mrb[0].mxu0
        %v2959 = vadd.f32 0.0, %v2958
        %v2960 = vpop.f32.mrb[0].mxu0
        %v2961 = vpop.f32.mrb[0].mxu0
        %v2962 = vadd.f32 0.0, %v2961
        %v2963 = vpop.f32.mrb[0].mxu0
        %2964 = vmatprep.mubr.bf16.mxu0 0
        %2965 = vmatmul.mubr.bf16.gmra.mrb[0].mxu0 %v2850
        %v2966 = vpop.f32.mrb[0].mxu0
        %v2967 = vadd.f32 0.0, %v2966
        %v2968 = vpop.f32.mrb[0].mxu0
        %v2969 = vpop.f32.mrb[0].mxu0
        %v2970 = vadd.f32 0.0, %v2969
        %v2971 = vpop.f32.mrb[0].mxu0
        %2972 = vmatprep.mubr.bf16.mxu0 0
        %2973 = vmatmul.mubr.bf16.gmra.mrb[0].mxu0 %v2853
        %v2974 = vpop.f32.mrb[0].mxu0
        %v2975 = vadd.f32 0.0, %v2974
        %v2976 = vpop.f32.mrb[0].mxu0
        %v2977 = vpop.f32.mrb[0].mxu0
        %v2978 = vadd.f32 0.0, %v2977
        %v2979 = vpop.f32.mrb[0].mxu0
        %2980 = vmatprep.mubr.bf16.mxu0 0
        %2981 = vmatmul.mubr.bf16.gmra.mrb[0].mxu0 %v2856
        %v2982 = vpop.f32.mrb[0].mxu0
        %v2983 = vadd.f32 0.0, %v2982
        %v2984 = vpop.f32.mrb[0].mxu0
        %v2985 = vpop.f32.mrb[0].mxu0
        %v2986 = vadd.f32 0.0, %v2985
        %v2987 = vpop.f32.mrb[0].mxu0
        %2988 = vmatprep.mubr.bf16.mxu0 0
        %2989 = vmatmul.mubr.bf16.gmra.mrb[0].mxu0 %v2859
        %v2990 = vpop.f32.mrb[0].mxu0
        %v2991 = vadd.f32 0.0, %v2990
        %v2992 = vpop.f32.mrb[0].mxu0
        %v2993 = vpop.f32.mrb[0].mxu0
        %v2994 = vadd.f32 0.0, %v2993
        %v2995 = vpop.f32.mrb[0].mxu0
        %2996 = vmatprep.mubr.bf16.mxu0 0
        %2997 = vmatmul.mubr.bf16.gmra.mrb[0].mxu0 %v2862
        %v2998 = vpop.f32.mrb[0].mxu0
        %v2999 = vadd.f32 0.0, %v2998
        %v3000 = vpop.f32.mrb[0].mxu0
        %v3001 = vpop.f32.mrb[0].mxu0
        %v3002 = vadd.f32 0.0, %v3001
        %v3003 = vpop.f32.mrb[0].mxu0
        %3004 = vmatprep.mubr.bf16.mxu0 0
        %3005 = vmatmul.mubr.bf16.gmra.mrb[0].mxu0 %v2865
        %v3006 = vpop.f32.mrb[0].mxu0
        %v3007 = vadd.f32 0.0, %v3006
        %v3008 = vpop.f32.mrb[0].mxu0
        %v3009 = vpop.f32.mrb[0].mxu0
        %v3010 = vadd.f32 0.0, %v3009
        %v3011 = vpop.f32.mrb[0].mxu0
        %3012 = vmatprep.mubr.bf16.mxu0 0
        %3013 = vmatmul.mubr.bf16.gmra.mrb[0].mxu0 %v2868
        %v3014 = vpop.f32.mrb[0].mxu0
        %v3015 = vadd.f32 0.0, %v3014
        %v3016 = vpop.f32.mrb[0].mxu0
        %v3017 = vpop.f32.mrb[0].mxu0
        %v3018 = vadd.f32 0.0, %v3017
        %v3019 = vpop.f32.mrb[0].mxu0
        %3020 = vmatprep.mubr.bf16.mxu0 0
        %3021 = vmatmul.mubr.bf16.gmra.mrb[0].mxu0 %v2871
        %v3022 = vpop.f32.mrb[0].mxu0
        %v3023 = vadd.f32 0.0, %v3022
        %v3024 = vpop.f32.mrb[0].mxu0
        %v3025 = vpop.f32.mrb[0].mxu0
        %v3026 = vadd.f32 0.0, %v3025
        %v3027 = vpop.f32.mrb[0].mxu0
        %3028 = vmatprep.mubr.bf16.mxu0 0
        %3029 = vmatmul.mubr.bf16.gmra.mrb[0].mxu0 %v2874
        %v3030 = vpop.f32.mrb[0].mxu0
        %v3031 = vadd.f32 0.0, %v3030
        %v3032 = vpop.f32.mrb[0].mxu0
        %v3033 = vpop.f32.mrb[0].mxu0
        %v3034 = vadd.f32 0.0, %v3033
        %v3035 = vpop.f32.mrb[0].mxu0
        %3036 = vdwg.mxu0
        %v3045 = vunpack.c.l.b16 %v2771
        %v3046 = vunpack.c.l.b16 %v2772
        %v3047 = vunpack.c.l.b16 %v2773
        %v3048 = vunpack.c.l.b16 %v2774
        %v3049 = vunpack.c.l.b16 %v2775
        %v3050 = vunpack.c.l.b16 %v2776
        %v3051 = vunpack.c.l.b16 %v2777
        %v3052 = vunpack.c.l.b16 %v2778
        %v3053 = vpack.c.b16 %v3046, %v3045
        %v3054 = vpack.c.b16 %v3048, %v3047
        %v3055 = vpack.c.b16 %v3050, %v3049
        %v3056 = vpack.c.b16 %v3052, %v3051
        %v3062 = vsel %vm480, %v2754, 0
        %v3065 = vsel %vm480, %v2755, 0
        %v3068 = vsel %vm480, %v2756, 0
        %v3071 = vsel %vm480, %v2757, 0
        %v3074 = vsel %vm480, %v2758, 0
        %v3077 = vsel %vm480, %v2759, 0
        %v3080 = vsel %vm480, %v2760, 0
        %v3083 = vsel %vm480, %v2761, 0
        %v3086 = vsel %vm480, %v2762, 0
        %v3089 = vsel %vm480, %v2763, 0
        %v3092 = vsel %vm480, %v2764, 0
        %v3095 = vsel %vm480, %v2765, 0
        %v3098 = vsel %vm480, %v2766, 0
        %v3101 = vsel %vm480, %v2767, 0
        %v3104 = vsel %vm480, %v2768, 0
        %v3107 = vsel %vm480, %v2769, 0
        %3109 = vmatprep.subr.bf16.mxu0 0
        %3110 = vmatpush1.bf16.msra.mxu0 %v3053
        %3111 = vmatprep.subr.bf16.mxu0 0
        %3112 = vmatpush1.bf16.msra.mxu0 %v3054
        %3113 = vmatprep.subr.bf16.mxu0 0
        %3114 = vmatpush1.bf16.msra.mxu0 %v3055
        %3115 = vmatprep.subr.bf16.mxu0 0
        %3116 = vmatpush1.bf16.msra.mxu0 %v3056
        %3117 = vmatprep.subr.bf16.mxu0 0
        %3118 = vmatpush1.bf16.msra.mxu0 0
        %3119 = vmatprep.subr.bf16.mxu0 0
        %3120 = vmatpush1.bf16.msra.mxu0 0
        %3121 = vmatprep.subr.bf16.mxu0 0
        %3122 = vmatpush1.bf16.msra.mxu0 0
        %3123 = vmatprep.subr.bf16.mxu0 0
        %3124 = vmatpush1.bf16.msra.mxu0 0
        %3125 = vmatprep.subr.bf16.mxu0 0
        %3126 = vmatpush1.bf16.msra.mxu0 0
        %3127 = vmatprep.subr.bf16.mxu0 0
        %3128 = vmatpush1.bf16.msra.mxu0 0
        %3129 = vmatprep.subr.bf16.mxu0 0
        %3130 = vmatpush1.bf16.msra.mxu0 0
        %3131 = vmatprep.subr.bf16.mxu0 0
        %3132 = vmatpush1.bf16.msra.mxu0 0
        %3133 = vmatprep.subr.bf16.mxu0 0
        %3134 = vmatpush1.bf16.msra.mxu0 0
        %3135 = vmatprep.subr.bf16.mxu0 0
        %3136 = vmatpush1.bf16.msra.mxu0 0
        %3137 = vmatprep.subr.bf16.mxu0 0
        %3138 = vmatpush1.bf16.msra.mxu0 0
        %3139 = vmatprep.subr.bf16.mxu0 0
        %3140 = vmatpush1.bf16.msra.mxu0 0
        %3141 = vmatprep.mubr.bf16.mxu0 0
        %3142 = vmatmul.mubr.bf16.gmra.mrb[0].mxu0 %v3062
        %v3143 = vpop.f32.mrb[0].mxu0
        %v3144 = vadd.f32 %v2911, %v3143
        %v3145 = vpop.f32.mrb[0].mxu0
        %v3146 = vpop.f32.mrb[0].mxu0
        %v3147 = vadd.f32 %v2914, %v3146
        %v3148 = vpop.f32.mrb[0].mxu0
        %3149 = vmatprep.mubr.bf16.mxu0 0
        %3150 = vmatmul.mubr.bf16.gmra.mrb[0].mxu0 %v3065
        %v3151 = vpop.f32.mrb[0].mxu0
        %v3152 = vadd.f32 %v2919, %v3151
        %v3153 = vpop.f32.mrb[0].mxu0
        %v3154 = vpop.f32.mrb[0].mxu0
        %v3155 = vadd.f32 %v2922, %v3154
        %v3156 = vpop.f32.mrb[0].mxu0
        %3157 = vmatprep.mubr.bf16.mxu0 0
        %3158 = vmatmul.mubr.bf16.gmra.mrb[0].mxu0 %v3068
        %v3159 = vpop.f32.mrb[0].mxu0
        %v3160 = vadd.f32 %v2927, %v3159
        %v3161 = vpop.f32.mrb[0].mxu0
        %v3162 = vpop.f32.mrb[0].mxu0
        %v3163 = vadd.f32 %v2930, %v3162
        %v3164 = vpop.f32.mrb[0].mxu0
        %3165 = vmatprep.mubr.bf16.mxu0 0
        %3166 = vmatmul.mubr.bf16.gmra.mrb[0].mxu0 %v3071
        %v3167 = vpop.f32.mrb[0].mxu0
        %v3168 = vadd.f32 %v2935, %v3167
        %v3169 = vpop.f32.mrb[0].mxu0
        %v3170 = vpop.f32.mrb[0].mxu0
        %v3171 = vadd.f32 %v2938, %v3170
        %v3172 = vpop.f32.mrb[0].mxu0
        %3173 = vmatprep.mubr.bf16.mxu0 0
        %3174 = vmatmul.mubr.bf16.gmra.mrb[0].mxu0 %v3074
        %v3175 = vpop.f32.mrb[0].mxu0
        %v3176 = vadd.f32 %v2943, %v3175
        %v3177 = vpop.f32.mrb[0].mxu0
        %v3178 = vpop.f32.mrb[0].mxu0
        %v3179 = vadd.f32 %v2946, %v3178
        %v3180 = vpop.f32.mrb[0].mxu0
        %3181 = vmatprep.mubr.bf16.mxu0 0
        %3182 = vmatmul.mubr.bf16.gmra.mrb[0].mxu0 %v3077
        %v3183 = vpop.f32.mrb[0].mxu0
        %v3184 = vadd.f32 %v2951, %v3183
        %v3185 = vpop.f32.mrb[0].mxu0
        %v3186 = vpop.f32.mrb[0].mxu0
        %v3187 = vadd.f32 %v2954, %v3186
        %v3188 = vpop.f32.mrb[0].mxu0
        %3189 = vmatprep.mubr.bf16.mxu0 0
        %3190 = vmatmul.mubr.bf16.gmra.mrb[0].mxu0 %v3080
        %v3191 = vpop.f32.mrb[0].mxu0
        %v3192 = vadd.f32 %v2959, %v3191
        %v3193 = vpop.f32.mrb[0].mxu0
        %v3194 = vpop.f32.mrb[0].mxu0
        %v3195 = vadd.f32 %v2962, %v3194
        %v3196 = vpop.f32.mrb[0].mxu0
        %3197 = vmatprep.mubr.bf16.mxu0 0
        %3198 = vmatmul.mubr.bf16.gmra.mrb[0].mxu0 %v3083
        %v3199 = vpop.f32.mrb[0].mxu0
        %v3200 = vadd.f32 %v2967, %v3199
        %v3201 = vpop.f32.mrb[0].mxu0
        %v3202 = vpop.f32.mrb[0].mxu0
        %v3203 = vadd.f32 %v2970, %v3202
        %v3204 = vpop.f32.mrb[0].mxu0
        %3205 = vmatprep.mubr.bf16.mxu0 0
        %3206 = vmatmul.mubr.bf16.gmra.mrb[0].mxu0 %v3086
        %v3207 = vpop.f32.mrb[0].mxu0
        %v3208 = vadd.f32 %v2975, %v3207
        %v3209 = vpop.f32.mrb[0].mxu0
        %v3210 = vpop.f32.mrb[0].mxu0
        %v3211 = vadd.f32 %v2978, %v3210
        %v3212 = vpop.f32.mrb[0].mxu0
        %3213 = vmatprep.mubr.bf16.mxu0 0
        %3214 = vmatmul.mubr.bf16.gmra.mrb[0].mxu0 %v3089
        %v3215 = vpop.f32.mrb[0].mxu0
        %v3216 = vadd.f32 %v2983, %v3215
        %v3217 = vpop.f32.mrb[0].mxu0
        %v3218 = vpop.f32.mrb[0].mxu0
        %v3219 = vadd.f32 %v2986, %v3218
        %v3220 = vpop.f32.mrb[0].mxu0
        %3221 = vmatprep.mubr.bf16.mxu0 0
        %3222 = vmatmul.mubr.bf16.gmra.mrb[0].mxu0 %v3092
        %v3223 = vpop.f32.mrb[0].mxu0
        %v3224 = vadd.f32 %v2991, %v3223
        %v3225 = vpop.f32.mrb[0].mxu0
        %v3226 = vpop.f32.mrb[0].mxu0
        %v3227 = vadd.f32 %v2994, %v3226
        %v3228 = vpop.f32.mrb[0].mxu0
        %3229 = vmatprep.mubr.bf16.mxu0 0
        %3230 = vmatmul.mubr.bf16.gmra.mrb[0].mxu0 %v3095
        %v3231 = vpop.f32.mrb[0].mxu0
        %v3232 = vadd.f32 %v2999, %v3231
        %v3233 = vpop.f32.mrb[0].mxu0
        %v3234 = vpop.f32.mrb[0].mxu0
        %v3235 = vadd.f32 %v3002, %v3234
        %v3236 = vpop.f32.mrb[0].mxu0
        %3237 = vmatprep.mubr.bf16.mxu0 0
        %3238 = vmatmul.mubr.bf16.gmra.mrb[0].mxu0 %v3098
        %v3239 = vpop.f32.mrb[0].mxu0
        %v3240 = vadd.f32 %v3007, %v3239
        %v3241 = vpop.f32.mrb[0].mxu0
        %v3242 = vpop.f32.mrb[0].mxu0
        %v3243 = vadd.f32 %v3010, %v3242
        %v3244 = vpop.f32.mrb[0].mxu0
        %3245 = vmatprep.mubr.bf16.mxu0 0
        %3246 = vmatmul.mubr.bf16.gmra.mrb[0].mxu0 %v3101
        %v3247 = vpop.f32.mrb[0].mxu0
        %v3248 = vadd.f32 %v3015, %v3247
        %v3249 = vpop.f32.mrb[0].mxu0
        %v3250 = vpop.f32.mrb[0].mxu0
        %v3251 = vadd.f32 %v3018, %v3250
        %v3252 = vpop.f32.mrb[0].mxu0
        %3253 = vmatprep.mubr.bf16.mxu0 0
        %3254 = vmatmul.mubr.bf16.gmra.mrb[0].mxu0 %v3104
        %v3255 = vpop.f32.mrb[0].mxu0
        %v3256 = vadd.f32 %v3023, %v3255
        %v3257 = vpop.f32.mrb[0].mxu0
        %v3258 = vpop.f32.mrb[0].mxu0
        %v3259 = vadd.f32 %v3026, %v3258
        %v3260 = vpop.f32.mrb[0].mxu0
        %3261 = vmatprep.mubr.bf16.mxu0 0
        %3262 = vmatmul.mubr.bf16.gmra.mrb[0].mxu0 %v3107
        %v3263 = vpop.f32.mrb[0].mxu0
        %v3264 = vadd.f32 %v3031, %v3263
        %v3265 = vpop.f32.mrb[0].mxu0
        %v3266 = vpop.f32.mrb[0].mxu0
        %v3267 = vadd.f32 %v3034, %v3266
        %v3268 = vpop.f32.mrb[0].mxu0
        %3269 = vdwg.mxu0
        %v3270 = vld [vmem:[%s3 + $0x2] sm:$0x1]
        %v3271 = vlaneseq
        %v3272 = vshrl.u32 %v3271, 7
        %v3273 = vsub.s32 0, %v3272
        %v3274 = vrot.slane %v3270, %v3273
        %v3275 = vadd.f32 %v3144, %v3274
        %v3276 = vadd.f32 %v3147, %v3274
        %v3277 = vadd.f32 %v3152, %v3274
        %v3278 = vadd.f32 %v3155, %v3274
        %v3279 = vadd.f32 %v3160, %v3274
        %v3280 = vadd.f32 %v3163, %v3274
        %v3281 = vadd.f32 %v3168, %v3274
        %v3282 = vadd.f32 %v3171, %v3274
        %v3283 = vadd.f32 %v3176, %v3274
        %v3284 = vadd.f32 %v3179, %v3274
        %v3285 = vadd.f32 %v3184, %v3274
        %v3286 = vadd.f32 %v3187, %v3274
        %v3287 = vadd.f32 %v3192, %v3274
        %v3288 = vadd.f32 %v3195, %v3274
        %v3289 = vadd.f32 %v3200, %v3274
        %v3290 = vadd.f32 %v3203, %v3274
        %v3291 = vadd.f32 %v3208, %v3274
        %v3292 = vadd.f32 %v3211, %v3274
        %v3293 = vadd.f32 %v3216, %v3274
        %v3294 = vadd.f32 %v3219, %v3274
        %v3295 = vadd.f32 %v3224, %v3274
        %v3296 = vadd.f32 %v3227, %v3274
        %v3297 = vadd.f32 %v3232, %v3274
        %v3298 = vadd.f32 %v3235, %v3274
        %v3299 = vadd.f32 %v3240, %v3274
        %v3300 = vadd.f32 %v3243, %v3274
        %v3301 = vadd.f32 %v3248, %v3274
        %v3302 = vadd.f32 %v3251, %v3274
        %v3303 = vadd.f32 %v3256, %v3274
        %v3304 = vadd.f32 %v3259, %v3274
        %v3305 = vadd.f32 %v3264, %v3274
        %v3306 = vadd.f32 %v3267, %v3274
        %v3307 = vpack.c.bf16 %v3276, %v3275
        %v3308 = vpack.c.bf16 %v3278, %v3277
        %v3309 = vpack.c.bf16 %v3280, %v3279
        %v3310 = vpack.c.bf16 %v3282, %v3281
        %v3311 = vpack.c.bf16 %v3284, %v3283
        %v3312 = vpack.c.bf16 %v3286, %v3285
        %v3313 = vpack.c.bf16 %v3288, %v3287
        %v3314 = vpack.c.bf16 %v3290, %v3289
        %v3315 = vpack.c.bf16 %v3292, %v3291
        %v3316 = vpack.c.bf16 %v3294, %v3293
        %v3317 = vpack.c.bf16 %v3296, %v3295
        %v3318 = vpack.c.bf16 %v3298, %v3297
        %v3319 = vpack.c.bf16 %v3300, %v3299
        %v3320 = vpack.c.bf16 %v3302, %v3301
        %v3321 = vpack.c.bf16 %v3304, %v3303
        %v3322 = vpack.c.bf16 %v3306, %v3305
        %s3323 = scalar_lea.vmem %s4, 64
        %v3324 = vld [vmem:[%s3323] sm:$0xf]
        %v3325 = vld [vmem:[%s3323 + $0x4] sm:$0xf]
        %v3326 = vld [vmem:[%s3323 + $0x8] sm:$0xf]
        %v3327 = vld [vmem:[%s3323 + $0xc] sm:$0xf]
        %v3328 = vld [vmem:[%s3323 + $0x10] sm:$0xf]
        %v3329 = vld [vmem:[%s3323 + $0x14] sm:$0xf]
        %v3330 = vld [vmem:[%s3323 + $0x18] sm:$0xf]
        %v3331 = vld [vmem:[%s3323 + $0x1c] sm:$0xf]
        %v3340 = vunpack.c.l.b16 %v3324
        %v3341 = vunpack.c.l.b16 %v3325
        %v3342 = vunpack.c.l.b16 %v3326
        %v3343 = vunpack.c.l.b16 %v3327
        %v3344 = vunpack.c.l.b16 %v3328
        %v3345 = vunpack.c.l.b16 %v3329
        %v3346 = vunpack.c.l.b16 %v3330
        %v3347 = vunpack.c.l.b16 %v3331
        %v3348 = vpack.c.b16 %v3341, %v3340
        %v3349 = vpack.c.b16 %v3343, %v3342
        %v3350 = vpack.c.b16 %v3345, %v3344
        %v3351 = vpack.c.b16 %v3347, %v3346
        %v3357 = vsel %vm480, %v3307, 0
        %v3360 = vsel %vm480, %v3308, 0
        %v3363 = vsel %vm480, %v3309, 0
        %v3366 = vsel %vm480, %v3310, 0
        %v3369 = vsel %vm480, %v3311, 0
        %v3372 = vsel %vm480, %v3312, 0
        %v3375 = vsel %vm480, %v3313, 0
        %v3378 = vsel %vm480, %v3314, 0
        %v3381 = vsel %vm480, %v3315, 0
        %v3384 = vsel %vm480, %v3316, 0
        %v3387 = vsel %vm480, %v3317, 0
        %v3390 = vsel %vm480, %v3318, 0
        %v3393 = vsel %vm480, %v3319, 0
        %v3396 = vsel %vm480, %v3320, 0
        %v3399 = vsel %vm480, %v3321, 0
        %v3402 = vsel %vm480, %v3322, 0
        %3404 = vmatprep.subr.bf16.mxu0 0
        %3405 = vmatpush1.bf16.msra.mxu0 %v3348
        %3406 = vmatprep.subr.bf16.mxu0 0
        %3407 = vmatpush1.bf16.msra.mxu0 %v3349
        %3408 = vmatprep.subr.bf16.mxu0 0
        %3409 = vmatpush1.bf16.msra.mxu0 %v3350
        %3410 = vmatprep.subr.bf16.mxu0 0
        %3411 = vmatpush1.bf16.msra.mxu0 %v3351
        %3412 = vmatprep.subr.bf16.mxu0 0
        %3413 = vmatpush1.bf16.msra.mxu0 0
        %3414 = vmatprep.subr.bf16.mxu0 0
        %3415 = vmatpush1.bf16.msra.mxu0 0
        %3416 = vmatprep.subr.bf16.mxu0 0
        %3417 = vmatpush1.bf16.msra.mxu0 0
        %3418 = vmatprep.subr.bf16.mxu0 0
        %3419 = vmatpush1.bf16.msra.mxu0 0
        %3420 = vmatprep.subr.bf16.mxu0 0
        %3421 = vmatpush1.bf16.msra.mxu0 0
        %3422 = vmatprep.subr.bf16.mxu0 0
        %3423 = vmatpush1.bf16.msra.mxu0 0
        %3424 = vmatprep.subr.bf16.mxu0 0
        %3425 = vmatpush1.bf16.msra.mxu0 0
        %3426 = vmatprep.subr.bf16.mxu0 0
        %3427 = vmatpush1.bf16.msra.mxu0 0
        %3428 = vmatprep.subr.bf16.mxu0 0
        %3429 = vmatpush1.bf16.msra.mxu0 0
        %3430 = vmatprep.subr.bf16.mxu0 0
        %3431 = vmatpush1.bf16.msra.mxu0 0
        %3432 = vmatprep.subr.bf16.mxu0 0
        %3433 = vmatpush1.bf16.msra.mxu0 0
        %3434 = vmatprep.subr.bf16.mxu0 0
        %3435 = vmatpush1.bf16.msra.mxu0 0
        %3436 = vmatprep.mubr.bf16.mxu0 0
        %3437 = vmatmul.mubr.bf16.gmra.mrb[0].mxu0 %v3357
        %v3438 = vpop.f32.mrb[0].mxu0
        %v3439 = vadd.f32 0.0, %v3438
        %v3440 = vpop.f32.mrb[0].mxu0
        %v3441 = vpop.f32.mrb[0].mxu0
        %v3442 = vadd.f32 0.0, %v3441
        %v3443 = vpop.f32.mrb[0].mxu0
        %3444 = vmatprep.mubr.bf16.mxu0 0
        %3445 = vmatmul.mubr.bf16.gmra.mrb[0].mxu0 %v3360
        %v3446 = vpop.f32.mrb[0].mxu0
        %v3447 = vadd.f32 0.0, %v3446
        %v3448 = vpop.f32.mrb[0].mxu0
        %v3449 = vpop.f32.mrb[0].mxu0
        %v3450 = vadd.f32 0.0, %v3449
        %v3451 = vpop.f32.mrb[0].mxu0
        %3452 = vmatprep.mubr.bf16.mxu0 0
        %3453 = vmatmul.mubr.bf16.gmra.mrb[0].mxu0 %v3363
        %v3454 = vpop.f32.mrb[0].mxu0
        %v3455 = vadd.f32 0.0, %v3454
        %v3456 = vpop.f32.mrb[0].mxu0
        %v3457 = vpop.f32.mrb[0].mxu0
        %v3458 = vadd.f32 0.0, %v3457
        %v3459 = vpop.f32.mrb[0].mxu0
        %3460 = vmatprep.mubr.bf16.mxu0 0
        %3461 = vmatmul.mubr.bf16.gmra.mrb[0].mxu0 %v3366
        %v3462 = vpop.f32.mrb[0].mxu0
        %v3463 = vadd.f32 0.0, %v3462
        %v3464 = vpop.f32.mrb[0].mxu0
        %v3465 = vpop.f32.mrb[0].mxu0
        %v3466 = vadd.f32 0.0, %v3465
        %v3467 = vpop.f32.mrb[0].mxu0
        %3468 = vmatprep.mubr.bf16.mxu0 0
        %3469 = vmatmul.mubr.bf16.gmra.mrb[0].mxu0 %v3369
        %v3470 = vpop.f32.mrb[0].mxu0
        %v3471 = vadd.f32 0.0, %v3470
        %v3472 = vpop.f32.mrb[0].mxu0
        %v3473 = vpop.f32.mrb[0].mxu0
        %v3474 = vadd.f32 0.0, %v3473
        %v3475 = vpop.f32.mrb[0].mxu0
        %3476 = vmatprep.mubr.bf16.mxu0 0
        %3477 = vmatmul.mubr.bf16.gmra.mrb[0].mxu0 %v3372
        %v3478 = vpop.f32.mrb[0].mxu0
        %v3479 = vadd.f32 0.0, %v3478
        %v3480 = vpop.f32.mrb[0].mxu0
        %v3481 = vpop.f32.mrb[0].mxu0
        %v3482 = vadd.f32 0.0, %v3481
        %v3483 = vpop.f32.mrb[0].mxu0
        %3484 = vmatprep.mubr.bf16.mxu0 0
        %3485 = vmatmul.mubr.bf16.gmra.mrb[0].mxu0 %v3375
        %v3486 = vpop.f32.mrb[0].mxu0
        %v3487 = vadd.f32 0.0, %v3486
        %v3488 = vpop.f32.mrb[0].mxu0
        %v3489 = vpop.f32.mrb[0].mxu0
        %v3490 = vadd.f32 0.0, %v3489
        %v3491 = vpop.f32.mrb[0].mxu0
        %3492 = vmatprep.mubr.bf16.mxu0 0
        %3493 = vmatmul.mubr.bf16.gmra.mrb[0].mxu0 %v3378
        %v3494 = vpop.f32.mrb[0].mxu0
        %v3495 = vadd.f32 0.0, %v3494
        %v3496 = vpop.f32.mrb[0].mxu0
        %v3497 = vpop.f32.mrb[0].mxu0
        %v3498 = vadd.f32 0.0, %v3497
        %v3499 = vpop.f32.mrb[0].mxu0
        %3500 = vmatprep.mubr.bf16.mxu0 0
        %3501 = vmatmul.mubr.bf16.gmra.mrb[0].mxu0 %v3381
        %v3502 = vpop.f32.mrb[0].mxu0
        %v3503 = vadd.f32 0.0, %v3502
        %v3504 = vpop.f32.mrb[0].mxu0
        %v3505 = vpop.f32.mrb[0].mxu0
        %v3506 = vadd.f32 0.0, %v3505
        %v3507 = vpop.f32.mrb[0].mxu0
        %3508 = vmatprep.mubr.bf16.mxu0 0
        %3509 = vmatmul.mubr.bf16.gmra.mrb[0].mxu0 %v3384
        %v3510 = vpop.f32.mrb[0].mxu0
        %v3511 = vadd.f32 0.0, %v3510
        %v3512 = vpop.f32.mrb[0].mxu0
        %v3513 = vpop.f32.mrb[0].mxu0
        %v3514 = vadd.f32 0.0, %v3513
        %v3515 = vpop.f32.mrb[0].mxu0
        %3516 = vmatprep.mubr.bf16.mxu0 0
        %3517 = vmatmul.mubr.bf16.gmra.mrb[0].mxu0 %v3387
        %v3518 = vpop.f32.mrb[0].mxu0
        %v3519 = vadd.f32 0.0, %v3518
        %v3520 = vpop.f32.mrb[0].mxu0
        %v3521 = vpop.f32.mrb[0].mxu0
        %v3522 = vadd.f32 0.0, %v3521
        %v3523 = vpop.f32.mrb[0].mxu0
        %3524 = vmatprep.mubr.bf16.mxu0 0
        %3525 = vmatmul.mubr.bf16.gmra.mrb[0].mxu0 %v3390
        %v3526 = vpop.f32.mrb[0].mxu0
        %v3527 = vadd.f32 0.0, %v3526
        %v3528 = vpop.f32.mrb[0].mxu0
        %v3529 = vpop.f32.mrb[0].mxu0
        %v3530 = vadd.f32 0.0, %v3529
        %v3531 = vpop.f32.mrb[0].mxu0
        %3532 = vmatprep.mubr.bf16.mxu0 0
        %3533 = vmatmul.mubr.bf16.gmra.mrb[0].mxu0 %v3393
        %v3534 = vpop.f32.mrb[0].mxu0
        %v3535 = vadd.f32 0.0, %v3534
        %v3536 = vpop.f32.mrb[0].mxu0
        %v3537 = vpop.f32.mrb[0].mxu0
        %v3538 = vadd.f32 0.0, %v3537
        %v3539 = vpop.f32.mrb[0].mxu0
        %3540 = vmatprep.mubr.bf16.mxu0 0
        %3541 = vmatmul.mubr.bf16.gmra.mrb[0].mxu0 %v3396
        %v3542 = vpop.f32.mrb[0].mxu0
        %v3543 = vadd.f32 0.0, %v3542
        %v3544 = vpop.f32.mrb[0].mxu0
        %v3545 = vpop.f32.mrb[0].mxu0
        %v3546 = vadd.f32 0.0, %v3545
        %v3547 = vpop.f32.mrb[0].mxu0
        %3548 = vmatprep.mubr.bf16.mxu0 0
        %3549 = vmatmul.mubr.bf16.gmra.mrb[0].mxu0 %v3399
        %v3550 = vpop.f32.mrb[0].mxu0
        %v3551 = vadd.f32 0.0, %v3550
        %v3552 = vpop.f32.mrb[0].mxu0
        %v3553 = vpop.f32.mrb[0].mxu0
        %v3554 = vadd.f32 0.0, %v3553
        %v3555 = vpop.f32.mrb[0].mxu0
        %3556 = vmatprep.mubr.bf16.mxu0 0
        %3557 = vmatmul.mubr.bf16.gmra.mrb[0].mxu0 %v3402
        %v3558 = vpop.f32.mrb[0].mxu0
        %v3559 = vadd.f32 0.0, %v3558
        %v3560 = vpop.f32.mrb[0].mxu0
        %v3561 = vpop.f32.mrb[0].mxu0
        %v3562 = vadd.f32 0.0, %v3561
        %v3563 = vpop.f32.mrb[0].mxu0
        %3564 = vdwg.mxu0
        %v3565 = vadd.f32 %v2306, %v3439
        %v3566 = vadd.f32 %v2309, %v3442
        %v3567 = vadd.f32 %v2314, %v3447
        %v3568 = vadd.f32 %v2317, %v3450
        %v3569 = vadd.f32 %v2322, %v3455
        %v3570 = vadd.f32 %v2325, %v3458
        %v3571 = vadd.f32 %v2330, %v3463
        %v3572 = vadd.f32 %v2333, %v3466
        %v3573 = vadd.f32 %v2338, %v3471
        %v3574 = vadd.f32 %v2341, %v3474
        %v3575 = vadd.f32 %v2346, %v3479
        %v3576 = vadd.f32 %v2349, %v3482
        %v3577 = vadd.f32 %v2354, %v3487
        %v3578 = vadd.f32 %v2357, %v3490
        %v3579 = vadd.f32 %v2362, %v3495
        %v3580 = vadd.f32 %v2365, %v3498
        %v3581 = vadd.f32 %v2370, %v3503
        %v3582 = vadd.f32 %v2373, %v3506
        %v3583 = vadd.f32 %v2378, %v3511
        %v3584 = vadd.f32 %v2381, %v3514
        %v3585 = vadd.f32 %v2386, %v3519
        %v3586 = vadd.f32 %v2389, %v3522
        %v3587 = vadd.f32 %v2394, %v3527
        %v3588 = vadd.f32 %v2397, %v3530
        %v3589 = vadd.f32 %v2402, %v3535
        %v3590 = vadd.f32 %v2405, %v3538
        %v3591 = vadd.f32 %v2410, %v3543
        %v3592 = vadd.f32 %v2413, %v3546
        %v3593 = vadd.f32 %v2418, %v3551
        %v3594 = vadd.f32 %v2421, %v3554
        %v3595 = vadd.f32 %v2426, %v3559
        %v3596 = vadd.f32 %v2429, %v3562
        %3597 = vmatprep.subr.bf16.mxu0 0
        %3598 = vmatpush1.bf16.msra.mxu0 %v3307
        %3599 = vmatprep.subr.bf16.mxu0 0
        %3600 = vmatpush1.bf16.msra.mxu0 %v3308
        %3601 = vmatprep.subr.bf16.mxu0 0
        %3602 = vmatpush1.bf16.msra.mxu0 %v3309
        %3603 = vmatprep.subr.bf16.mxu0 0
        %3604 = vmatpush1.bf16.msra.mxu0 %v3310
        %3605 = vmatprep.subr.bf16.mxu0 0
        %3606 = vmatpush1.bf16.msra.mxu0 %v3311
        %3607 = vmatprep.subr.bf16.mxu0 0
        %3608 = vmatpush1.bf16.msra.mxu0 %v3312
        %3609 = vmatprep.subr.bf16.mxu0 0
        %3610 = vmatpush1.bf16.msra.mxu0 %v3313
        %3611 = vmatprep.subr.bf16.mxu0 0
        %3612 = vmatpush1.bf16.msra.mxu0 %v3314
        %3613 = vmatprep.subr.bf16.mxu0 0
        %3614 = vmatpush1.bf16.msra.mxu0 %v3315
        %3615 = vmatprep.subr.bf16.mxu0 0
        %3616 = vmatpush1.bf16.msra.mxu0 %v3316
        %3617 = vmatprep.subr.bf16.mxu0 0
        %3618 = vmatpush1.bf16.msra.mxu0 %v3317
        %3619 = vmatprep.subr.bf16.mxu0 0
        %3620 = vmatpush1.bf16.msra.mxu0 %v3318
        %3621 = vmatprep.subr.bf16.mxu0 0
        %3622 = vmatpush1.bf16.msra.mxu0 %v3319
        %3623 = vmatprep.subr.bf16.mxu0 0
        %3624 = vmatpush1.bf16.msra.mxu0 %v3320
        %3625 = vmatprep.subr.bf16.mxu0 0
        %3626 = vmatpush1.bf16.msra.mxu0 %v3321
        %3627 = vmatprep.subr.bf16.mxu0 0
        %3628 = vmatpush1.bf16.msra.mxu0 %v3322
        %3629 = vmatprep.mubr.bf16.mxu0 %v843
        %3630 = vmatmul.mubr.bf16.gmra.mrb[0].mxu0 %v842
        %v3631 = vpop.f32.mrb[0].mxu0
        %v3632 = vadd.f32 0.0, %v3631
        %v3633 = vpop.f32.mrb[0].mxu0
        %v3634 = vpop.f32.mrb[0].mxu0
        %v3635 = vadd.f32 0.0, %v3634
        %v3636 = vpop.f32.mrb[0].mxu0
        %3637 = vmatprep.mubr.bf16.mxu0 %v845
        %3638 = vmatmul.mubr.bf16.gmra.mrb[0].mxu0 %v844
        %v3639 = vpop.f32.mrb[0].mxu0
        %v3640 = vadd.f32 0.0, %v3639
        %v3641 = vpop.f32.mrb[0].mxu0
        %v3642 = vpop.f32.mrb[0].mxu0
        %v3643 = vadd.f32 0.0, %v3642
        %v3644 = vpop.f32.mrb[0].mxu0
        %3645 = vmatprep.mubr.bf16.mxu0 %v847
        %3646 = vmatmul.mubr.bf16.gmra.mrb[0].mxu0 %v846
        %v3647 = vpop.f32.mrb[0].mxu0
        %v3648 = vadd.f32 0.0, %v3647
        %v3649 = vpop.f32.mrb[0].mxu0
        %v3650 = vpop.f32.mrb[0].mxu0
        %v3651 = vadd.f32 0.0, %v3650
        %v3652 = vpop.f32.mrb[0].mxu0
        %3653 = vmatprep.mubr.bf16.mxu0 %v849
        %3654 = vmatmul.mubr.bf16.gmra.mrb[0].mxu0 %v848
        %v3655 = vpop.f32.mrb[0].mxu0
        %v3656 = vadd.f32 0.0, %v3655
        %v3657 = vpop.f32.mrb[0].mxu0
        %v3658 = vpop.f32.mrb[0].mxu0
        %v3659 = vadd.f32 0.0, %v3658
        %v3660 = vpop.f32.mrb[0].mxu0
        %3661 = vmatprep.mubr.bf16.mxu0 %v851
        %3662 = vmatmul.mubr.bf16.gmra.mrb[0].mxu0 %v850
        %v3663 = vpop.f32.mrb[0].mxu0
        %v3664 = vadd.f32 0.0, %v3663
        %v3665 = vpop.f32.mrb[0].mxu0
        %v3666 = vpop.f32.mrb[0].mxu0
        %v3667 = vadd.f32 0.0, %v3666
        %v3668 = vpop.f32.mrb[0].mxu0
        %3669 = vmatprep.mubr.bf16.mxu0 %v853
        %3670 = vmatmul.mubr.bf16.gmra.mrb[0].mxu0 %v852
        %v3671 = vpop.f32.mrb[0].mxu0
        %v3672 = vadd.f32 0.0, %v3671
        %v3673 = vpop.f32.mrb[0].mxu0
        %v3674 = vpop.f32.mrb[0].mxu0
        %v3675 = vadd.f32 0.0, %v3674
        %v3676 = vpop.f32.mrb[0].mxu0
        %3677 = vmatprep.mubr.bf16.mxu0 %v855
        %3678 = vmatmul.mubr.bf16.gmra.mrb[0].mxu0 %v854
        %v3679 = vpop.f32.mrb[0].mxu0
        %v3680 = vadd.f32 0.0, %v3679
        %v3681 = vpop.f32.mrb[0].mxu0
        %v3682 = vpop.f32.mrb[0].mxu0
        %v3683 = vadd.f32 0.0, %v3682
        %v3684 = vpop.f32.mrb[0].mxu0
        %3685 = vmatprep.mubr.bf16.mxu0 %v857
        %3686 = vmatmul.mubr.bf16.gmra.mrb[0].mxu0 %v856
        %v3687 = vpop.f32.mrb[0].mxu0
        %v3688 = vadd.f32 0.0, %v3687
        %v3689 = vpop.f32.mrb[0].mxu0
        %v3690 = vpop.f32.mrb[0].mxu0
        %v3691 = vadd.f32 0.0, %v3690
        %v3692 = vpop.f32.mrb[0].mxu0
        %3693 = vmatprep.mubr.bf16.mxu0 %v859
        %3694 = vmatmul.mubr.bf16.gmra.mrb[0].mxu0 %v858
        %v3695 = vpop.f32.mrb[0].mxu0
        %v3696 = vadd.f32 0.0, %v3695
        %v3697 = vpop.f32.mrb[0].mxu0
        %v3698 = vpop.f32.mrb[0].mxu0
        %v3699 = vadd.f32 0.0, %v3698
        %v3700 = vpop.f32.mrb[0].mxu0
        %3701 = vmatprep.mubr.bf16.mxu0 %v861
        %3702 = vmatmul.mubr.bf16.gmra.mrb[0].mxu0 %v860
        %v3703 = vpop.f32.mrb[0].mxu0
        %v3704 = vadd.f32 0.0, %v3703
        %v3705 = vpop.f32.mrb[0].mxu0
        %v3706 = vpop.f32.mrb[0].mxu0
        %v3707 = vadd.f32 0.0, %v3706
        %v3708 = vpop.f32.mrb[0].mxu0
        %3709 = vmatprep.mubr.bf16.mxu0 %v863
        %3710 = vmatmul.mubr.bf16.gmra.mrb[0].mxu0 %v862
        %v3711 = vpop.f32.mrb[0].mxu0
        %v3712 = vadd.f32 0.0, %v3711
        %v3713 = vpop.f32.mrb[0].mxu0
        %v3714 = vpop.f32.mrb[0].mxu0
        %v3715 = vadd.f32 0.0, %v3714
        %v3716 = vpop.f32.mrb[0].mxu0
        %3717 = vmatprep.mubr.bf16.mxu0 %v865
        %3718 = vmatmul.mubr.bf16.gmra.mrb[0].mxu0 %v864
        %v3719 = vpop.f32.mrb[0].mxu0
        %v3720 = vadd.f32 0.0, %v3719
        %v3721 = vpop.f32.mrb[0].mxu0
        %v3722 = vpop.f32.mrb[0].mxu0
        %v3723 = vadd.f32 0.0, %v3722
        %v3724 = vpop.f32.mrb[0].mxu0
        %3725 = vmatprep.mubr.bf16.mxu0 %v867
        %3726 = vmatmul.mubr.bf16.gmra.mrb[0].mxu0 %v866
        %v3727 = vpop.f32.mrb[0].mxu0
        %v3728 = vadd.f32 0.0, %v3727
        %v3729 = vpop.f32.mrb[0].mxu0
        %v3730 = vpop.f32.mrb[0].mxu0
        %v3731 = vadd.f32 0.0, %v3730
        %v3732 = vpop.f32.mrb[0].mxu0
        %3733 = vmatprep.mubr.bf16.mxu0 %v869
        %3734 = vmatmul.mubr.bf16.gmra.mrb[0].mxu0 %v868
        %v3735 = vpop.f32.mrb[0].mxu0
        %v3736 = vadd.f32 0.0, %v3735
        %v3737 = vpop.f32.mrb[0].mxu0
        %v3738 = vpop.f32.mrb[0].mxu0
        %v3739 = vadd.f32 0.0, %v3738
        %v3740 = vpop.f32.mrb[0].mxu0
        %3741 = vmatprep.mubr.bf16.mxu0 %v871
        %3742 = vmatmul.mubr.bf16.gmra.mrb[0].mxu0 %v870
        %v3743 = vpop.f32.mrb[0].mxu0
        %v3744 = vadd.f32 0.0, %v3743
        %v3745 = vpop.f32.mrb[0].mxu0
        %v3746 = vpop.f32.mrb[0].mxu0
        %v3747 = vadd.f32 0.0, %v3746
        %v3748 = vpop.f32.mrb[0].mxu0
        %3749 = vmatprep.mubr.bf16.mxu0 %v873
        %3750 = vmatmul.mubr.bf16.gmra.mrb[0].mxu0 %v872
        %v3751 = vpop.f32.mrb[0].mxu0
        %v3752 = vadd.f32 0.0, %v3751
        %v3753 = vpop.f32.mrb[0].mxu0
        %v3754 = vpop.f32.mrb[0].mxu0
        %v3755 = vadd.f32 0.0, %v3754
        %v3756 = vpop.f32.mrb[0].mxu0
        %3757 = vdwg.mxu0
        %3758 = vmatprep.subr.bf16.mxu0 0
        %3759 = vmatpush1.bf16.msra.mxu0 %v3307
        %3760 = vmatprep.subr.bf16.mxu0 0
        %3761 = vmatpush1.bf16.msra.mxu0 %v3308
        %3762 = vmatprep.subr.bf16.mxu0 0
        %3763 = vmatpush1.bf16.msra.mxu0 %v3309
        %3764 = vmatprep.subr.bf16.mxu0 0
        %3765 = vmatpush1.bf16.msra.mxu0 %v3310
        %3766 = vmatprep.subr.bf16.mxu0 0
        %3767 = vmatpush1.bf16.msra.mxu0 %v3311
        %3768 = vmatprep.subr.bf16.mxu0 0
        %3769 = vmatpush1.bf16.msra.mxu0 %v3312
        %3770 = vmatprep.subr.bf16.mxu0 0
        %3771 = vmatpush1.bf16.msra.mxu0 %v3313
        %3772 = vmatprep.subr.bf16.mxu0 0
        %3773 = vmatpush1.bf16.msra.mxu0 %v3314
        %3774 = vmatprep.subr.bf16.mxu0 0
        %3775 = vmatpush1.bf16.msra.mxu0 %v3315
        %3776 = vmatprep.subr.bf16.mxu0 0
        %3777 = vmatpush1.bf16.msra.mxu0 %v3316
        %3778 = vmatprep.subr.bf16.mxu0 0
        %3779 = vmatpush1.bf16.msra.mxu0 %v3317
        %3780 = vmatprep.subr.bf16.mxu0 0
        %3781 = vmatpush1.bf16.msra.mxu0 %v3318
        %3782 = vmatprep.subr.bf16.mxu0 0
        %3783 = vmatpush1.bf16.msra.mxu0 %v3319
        %3784 = vmatprep.subr.bf16.mxu0 0
        %3785 = vmatpush1.bf16.msra.mxu0 %v3320
        %3786 = vmatprep.subr.bf16.mxu0 0
        %3787 = vmatpush1.bf16.msra.mxu0 %v3321
        %3788 = vmatprep.subr.bf16.mxu0 0
        %3789 = vmatpush1.bf16.msra.mxu0 %v3322
        %3790 = vmatprep.mubr.bf16.mxu0 %v1164
        %3791 = vmatmul.mubr.bf16.gmra.mrb[0].mxu0 %v1163
        %v3792 = vpop.f32.mrb[0].mxu0
        %v3793 = vadd.f32 0.0, %v3792
        %v3794 = vpop.f32.mrb[0].mxu0
        %v3795 = vpop.f32.mrb[0].mxu0
        %v3796 = vadd.f32 0.0, %v3795
        %v3797 = vpop.f32.mrb[0].mxu0
        %3798 = vmatprep.mubr.bf16.mxu0 %v1166
        %3799 = vmatmul.mubr.bf16.gmra.mrb[0].mxu0 %v1165
        %v3800 = vpop.f32.mrb[0].mxu0
        %v3801 = vadd.f32 0.0, %v3800
        %v3802 = vpop.f32.mrb[0].mxu0
        %v3803 = vpop.f32.mrb[0].mxu0
        %v3804 = vadd.f32 0.0, %v3803
        %v3805 = vpop.f32.mrb[0].mxu0
        %3806 = vmatprep.mubr.bf16.mxu0 %v1168
        %3807 = vmatmul.mubr.bf16.gmra.mrb[0].mxu0 %v1167
        %v3808 = vpop.f32.mrb[0].mxu0
        %v3809 = vadd.f32 0.0, %v3808
        %v3810 = vpop.f32.mrb[0].mxu0
        %v3811 = vpop.f32.mrb[0].mxu0
        %v3812 = vadd.f32 0.0, %v3811
        %v3813 = vpop.f32.mrb[0].mxu0
        %3814 = vmatprep.mubr.bf16.mxu0 %v1170
        %3815 = vmatmul.mubr.bf16.gmra.mrb[0].mxu0 %v1169
        %v3816 = vpop.f32.mrb[0].mxu0
        %v3817 = vadd.f32 0.0, %v3816
        %v3818 = vpop.f32.mrb[0].mxu0
        %v3819 = vpop.f32.mrb[0].mxu0
        %v3820 = vadd.f32 0.0, %v3819
        %v3821 = vpop.f32.mrb[0].mxu0
        %3822 = vmatprep.mubr.bf16.mxu0 %v1172
        %3823 = vmatmul.mubr.bf16.gmra.mrb[0].mxu0 %v1171
        %v3824 = vpop.f32.mrb[0].mxu0
        %v3825 = vadd.f32 0.0, %v3824
        %v3826 = vpop.f32.mrb[0].mxu0
        %v3827 = vpop.f32.mrb[0].mxu0
        %v3828 = vadd.f32 0.0, %v3827
        %v3829 = vpop.f32.mrb[0].mxu0
        %3830 = vmatprep.mubr.bf16.mxu0 %v1174
        %3831 = vmatmul.mubr.bf16.gmra.mrb[0].mxu0 %v1173
        %v3832 = vpop.f32.mrb[0].mxu0
        %v3833 = vadd.f32 0.0, %v3832
        %v3834 = vpop.f32.mrb[0].mxu0
        %v3835 = vpop.f32.mrb[0].mxu0
        %v3836 = vadd.f32 0.0, %v3835
        %v3837 = vpop.f32.mrb[0].mxu0
        %3838 = vmatprep.mubr.bf16.mxu0 %v1176
        %3839 = vmatmul.mubr.bf16.gmra.mrb[0].mxu0 %v1175
        %v3840 = vpop.f32.mrb[0].mxu0
        %v3841 = vadd.f32 0.0, %v3840
        %v3842 = vpop.f32.mrb[0].mxu0
        %v3843 = vpop.f32.mrb[0].mxu0
        %v3844 = vadd.f32 0.0, %v3843
        %v3845 = vpop.f32.mrb[0].mxu0
        %3846 = vmatprep.mubr.bf16.mxu0 %v1178
        %3847 = vmatmul.mubr.bf16.gmra.mrb[0].mxu0 %v1177
        %v3848 = vpop.f32.mrb[0].mxu0
        %v3849 = vadd.f32 0.0, %v3848
        %v3850 = vpop.f32.mrb[0].mxu0
        %v3851 = vpop.f32.mrb[0].mxu0
        %v3852 = vadd.f32 0.0, %v3851
        %v3853 = vpop.f32.mrb[0].mxu0
        %3854 = vmatprep.mubr.bf16.mxu0 %v1180
        %3855 = vmatmul.mubr.bf16.gmra.mrb[0].mxu0 %v1179
        %v3856 = vpop.f32.mrb[0].mxu0
        %v3857 = vadd.f32 0.0, %v3856
        %v3858 = vpop.f32.mrb[0].mxu0
        %v3859 = vpop.f32.mrb[0].mxu0
        %v3860 = vadd.f32 0.0, %v3859
        %v3861 = vpop.f32.mrb[0].mxu0
        %3862 = vmatprep.mubr.bf16.mxu0 %v1182
        %3863 = vmatmul.mubr.bf16.gmra.mrb[0].mxu0 %v1181
        %v3864 = vpop.f32.mrb[0].mxu0
        %v3865 = vadd.f32 0.0, %v3864
        %v3866 = vpop.f32.mrb[0].mxu0
        %v3867 = vpop.f32.mrb[0].mxu0
        %v3868 = vadd.f32 0.0, %v3867
        %v3869 = vpop.f32.mrb[0].mxu0
        %3870 = vmatprep.mubr.bf16.mxu0 %v1184
        %3871 = vmatmul.mubr.bf16.gmra.mrb[0].mxu0 %v1183
        %v3872 = vpop.f32.mrb[0].mxu0
        %v3873 = vadd.f32 0.0, %v3872
        %v3874 = vpop.f32.mrb[0].mxu0
        %v3875 = vpop.f32.mrb[0].mxu0
        %v3876 = vadd.f32 0.0, %v3875
        %v3877 = vpop.f32.mrb[0].mxu0
        %3878 = vmatprep.mubr.bf16.mxu0 %v1186
        %3879 = vmatmul.mubr.bf16.gmra.mrb[0].mxu0 %v1185
        %v3880 = vpop.f32.mrb[0].mxu0
        %v3881 = vadd.f32 0.0, %v3880
        %v3882 = vpop.f32.mrb[0].mxu0
        %v3883 = vpop.f32.mrb[0].mxu0
        %v3884 = vadd.f32 0.0, %v3883
        %v3885 = vpop.f32.mrb[0].mxu0
        %3886 = vmatprep.mubr.bf16.mxu0 %v1188
        %3887 = vmatmul.mubr.bf16.gmra.mrb[0].mxu0 %v1187
        %v3888 = vpop.f32.mrb[0].mxu0
        %v3889 = vadd.f32 0.0, %v3888
        %v3890 = vpop.f32.mrb[0].mxu0
        %v3891 = vpop.f32.mrb[0].mxu0
        %v3892 = vadd.f32 0.0, %v3891
        %v3893 = vpop.f32.mrb[0].mxu0
        %3894 = vmatprep.mubr.bf16.mxu0 %v1190
        %3895 = vmatmul.mubr.bf16.gmra.mrb[0].mxu0 %v1189
        %v3896 = vpop.f32.mrb[0].mxu0
        %v3897 = vadd.f32 0.0, %v3896
        %v3898 = vpop.f32.mrb[0].mxu0
        %v3899 = vpop.f32.mrb[0].mxu0
        %v3900 = vadd.f32 0.0, %v3899
        %v3901 = vpop.f32.mrb[0].mxu0
        %3902 = vmatprep.mubr.bf16.mxu0 %v1192
        %3903 = vmatmul.mubr.bf16.gmra.mrb[0].mxu0 %v1191
        %v3904 = vpop.f32.mrb[0].mxu0
        %v3905 = vadd.f32 0.0, %v3904
        %v3906 = vpop.f32.mrb[0].mxu0
        %v3907 = vpop.f32.mrb[0].mxu0
        %v3908 = vadd.f32 0.0, %v3907
        %v3909 = vpop.f32.mrb[0].mxu0
        %3910 = vmatprep.mubr.bf16.mxu0 %v1194
        %3911 = vmatmul.mubr.bf16.gmra.mrb[0].mxu0 %v1193
        %v3912 = vpop.f32.mrb[0].mxu0
        %v3913 = vadd.f32 0.0, %v3912
        %v3914 = vpop.f32.mrb[0].mxu0
        %v3915 = vpop.f32.mrb[0].mxu0
        %v3916 = vadd.f32 0.0, %v3915
        %v3917 = vpop.f32.mrb[0].mxu0
        %3918 = vdwg.mxu0
        %v3919 = vpack.c.bf16 %v3635, %v3632
        %v3920 = vpack.c.bf16 %v3643, %v3640
        %v3921 = vpack.c.bf16 %v3651, %v3648
        %v3922 = vpack.c.bf16 %v3659, %v3656
        %v3923 = vpack.c.bf16 %v3667, %v3664
        %v3924 = vpack.c.bf16 %v3675, %v3672
        %v3925 = vpack.c.bf16 %v3683, %v3680
        %v3926 = vpack.c.bf16 %v3691, %v3688
        %v3927 = vpack.c.bf16 %v3699, %v3696
        %v3928 = vpack.c.bf16 %v3707, %v3704
        %v3929 = vpack.c.bf16 %v3715, %v3712
        %v3930 = vpack.c.bf16 %v3723, %v3720
        %v3931 = vpack.c.bf16 %v3731, %v3728
        %v3932 = vpack.c.bf16 %v3739, %v3736
        %v3933 = vpack.c.bf16 %v3747, %v3744
        %v3934 = vpack.c.bf16 %v3755, %v3752
        %s3935 = scalar_lea.vmem %s2, 160
        %v3936 = vld [vmem:[%s3935] sm:$0xf]
        %v3937 = vld [vmem:[%s3935 + $0x4] sm:$0xf]
        %v3938 = vld [vmem:[%s3935 + $0x8] sm:$0xf]
        %v3939 = vld [vmem:[%s3935 + $0xc] sm:$0xf]
        %v3940 = vld [vmem:[%s3935 + $0x10] sm:$0xf]
        %v3941 = vld [vmem:[%s3935 + $0x14] sm:$0xf]
        %v3942 = vld [vmem:[%s3935 + $0x18] sm:$0xf]
        %v3943 = vld [vmem:[%s3935 + $0x1c] sm:$0xf]
        %v3944 = vpack.c.bf16 %v3796, %v3793
        %v3945 = vpack.c.bf16 %v3804, %v3801
        %v3946 = vpack.c.bf16 %v3812, %v3809
        %v3947 = vpack.c.bf16 %v3820, %v3817
        %v3948 = vpack.c.bf16 %v3828, %v3825
        %v3949 = vpack.c.bf16 %v3836, %v3833
        %v3950 = vpack.c.bf16 %v3844, %v3841
        %v3951 = vpack.c.bf16 %v3852, %v3849
        %v3952 = vpack.c.bf16 %v3860, %v3857
        %v3953 = vpack.c.bf16 %v3868, %v3865
        %v3954 = vpack.c.bf16 %v3876, %v3873
        %v3955 = vpack.c.bf16 %v3884, %v3881
        %v3956 = vpack.c.bf16 %v3892, %v3889
        %v3957 = vpack.c.bf16 %v3900, %v3897
        %v3958 = vpack.c.bf16 %v3908, %v3905
        %v3959 = vpack.c.bf16 %v3916, %v3913
        %s3960 = scalar_lea.vmem %s2, 192
        %v3961 = vld [vmem:[%s3960] sm:$0xf]
        %v3962 = vld [vmem:[%s3960 + $0x4] sm:$0xf]
        %v3963 = vld [vmem:[%s3960 + $0x8] sm:$0xf]
        %v3964 = vld [vmem:[%s3960 + $0xc] sm:$0xf]
        %v3965 = vld [vmem:[%s3960 + $0x10] sm:$0xf]
        %v3966 = vld [vmem:[%s3960 + $0x14] sm:$0xf]
        %v3967 = vld [vmem:[%s3960 + $0x18] sm:$0xf]
        %v3968 = vld [vmem:[%s3960 + $0x1c] sm:$0xf]
        %v3977 = vunpack.c.l.b16 %v3961
        %v3978 = vunpack.c.l.b16 %v3962
        %v3979 = vunpack.c.l.b16 %v3963
        %v3980 = vunpack.c.l.b16 %v3964
        %v3981 = vunpack.c.l.b16 %v3965
        %v3982 = vunpack.c.l.b16 %v3966
        %v3983 = vunpack.c.l.b16 %v3967
        %v3984 = vunpack.c.l.b16 %v3968
        %v3985 = vpack.c.b16 %v3978, %v3977
        %v3986 = vpack.c.b16 %v3980, %v3979
        %v3987 = vpack.c.b16 %v3982, %v3981
        %v3988 = vpack.c.b16 %v3984, %v3983
        %v3994 = vsel %vm480, %v3944, 0
        %v3997 = vsel %vm480, %v3945, 0
        %v4000 = vsel %vm480, %v3946, 0
        %v4003 = vsel %vm480, %v3947, 0
        %v4006 = vsel %vm480, %v3948, 0
        %v4009 = vsel %vm480, %v3949, 0
        %v4012 = vsel %vm480, %v3950, 0
        %v4015 = vsel %vm480, %v3951, 0
        %v4018 = vsel %vm480, %v3952, 0
        %v4021 = vsel %vm480, %v3953, 0
        %v4024 = vsel %vm480, %v3954, 0
        %v4027 = vsel %vm480, %v3955, 0
        %v4030 = vsel %vm480, %v3956, 0
        %v4033 = vsel %vm480, %v3957, 0
        %v4036 = vsel %vm480, %v3958, 0
        %v4039 = vsel %vm480, %v3959, 0
        %4041 = vmatprep.subr.bf16.mxu0 0
        %4042 = vmatpush1.bf16.msra.mxu0 %v3985
        %4043 = vmatprep.subr.bf16.mxu0 0
        %4044 = vmatpush1.bf16.msra.mxu0 %v3986
        %4045 = vmatprep.subr.bf16.mxu0 0
        %4046 = vmatpush1.bf16.msra.mxu0 %v3987
        %4047 = vmatprep.subr.bf16.mxu0 0
        %4048 = vmatpush1.bf16.msra.mxu0 %v3988
        %4049 = vmatprep.subr.bf16.mxu0 0
        %4050 = vmatpush1.bf16.msra.mxu0 0
        %4051 = vmatprep.subr.bf16.mxu0 0
        %4052 = vmatpush1.bf16.msra.mxu0 0
        %4053 = vmatprep.subr.bf16.mxu0 0
        %4054 = vmatpush1.bf16.msra.mxu0 0
        %4055 = vmatprep.subr.bf16.mxu0 0
        %4056 = vmatpush1.bf16.msra.mxu0 0
        %4057 = vmatprep.subr.bf16.mxu0 0
        %4058 = vmatpush1.bf16.msra.mxu0 0
        %4059 = vmatprep.subr.bf16.mxu0 0
        %4060 = vmatpush1.bf16.msra.mxu0 0
        %4061 = vmatprep.subr.bf16.mxu0 0
        %4062 = vmatpush1.bf16.msra.mxu0 0
        %4063 = vmatprep.subr.bf16.mxu0 0
        %4064 = vmatpush1.bf16.msra.mxu0 0
        %4065 = vmatprep.subr.bf16.mxu0 0
        %4066 = vmatpush1.bf16.msra.mxu0 0
        %4067 = vmatprep.subr.bf16.mxu0 0
        %4068 = vmatpush1.bf16.msra.mxu0 0
        %4069 = vmatprep.subr.bf16.mxu0 0
        %4070 = vmatpush1.bf16.msra.mxu0 0
        %4071 = vmatprep.subr.bf16.mxu0 0
        %4072 = vmatpush1.bf16.msra.mxu0 0
        %4073 = vmatprep.mubr.bf16.mxu0 0
        %4074 = vmatmul.mubr.bf16.gmra.mrb[0].mxu0 %v3994
        %v4075 = vpop.f32.mrb[0].mxu0
        %v4076 = vadd.f32 0.0, %v4075
        %v4077 = vpop.f32.mrb[0].mxu0
        %v4078 = vpop.f32.mrb[0].mxu0
        %v4079 = vadd.f32 0.0, %v4078
        %v4080 = vpop.f32.mrb[0].mxu0
        %4081 = vmatprep.mubr.bf16.mxu0 0
        %4082 = vmatmul.mubr.bf16.gmra.mrb[0].mxu0 %v3997
        %v4083 = vpop.f32.mrb[0].mxu0
        %v4084 = vadd.f32 0.0, %v4083
        %v4085 = vpop.f32.mrb[0].mxu0
        %v4086 = vpop.f32.mrb[0].mxu0
        %v4087 = vadd.f32 0.0, %v4086
        %v4088 = vpop.f32.mrb[0].mxu0
        %4089 = vmatprep.mubr.bf16.mxu0 0
        %4090 = vmatmul.mubr.bf16.gmra.mrb[0].mxu0 %v4000
        %v4091 = vpop.f32.mrb[0].mxu0
        %v4092 = vadd.f32 0.0, %v4091
        %v4093 = vpop.f32.mrb[0].mxu0
        %v4094 = vpop.f32.mrb[0].mxu0
        %v4095 = vadd.f32 0.0, %v4094
        %v4096 = vpop.f32.mrb[0].mxu0
        %4097 = vmatprep.mubr.bf16.mxu0 0
        %4098 = vmatmul.mubr.bf16.gmra.mrb[0].mxu0 %v4003
        %v4099 = vpop.f32.mrb[0].mxu0
        %v4100 = vadd.f32 0.0, %v4099
        %v4101 = vpop.f32.mrb[0].mxu0
        %v4102 = vpop.f32.mrb[0].mxu0
        %v4103 = vadd.f32 0.0, %v4102
        %v4104 = vpop.f32.mrb[0].mxu0
        %4105 = vmatprep.mubr.bf16.mxu0 0
        %4106 = vmatmul.mubr.bf16.gmra.mrb[0].mxu0 %v4006
        %v4107 = vpop.f32.mrb[0].mxu0
        %v4108 = vadd.f32 0.0, %v4107
        %v4109 = vpop.f32.mrb[0].mxu0
        %v4110 = vpop.f32.mrb[0].mxu0
        %v4111 = vadd.f32 0.0, %v4110
        %v4112 = vpop.f32.mrb[0].mxu0
        %4113 = vmatprep.mubr.bf16.mxu0 0
        %4114 = vmatmul.mubr.bf16.gmra.mrb[0].mxu0 %v4009
        %v4115 = vpop.f32.mrb[0].mxu0
        %v4116 = vadd.f32 0.0, %v4115
        %v4117 = vpop.f32.mrb[0].mxu0
        %v4118 = vpop.f32.mrb[0].mxu0
        %v4119 = vadd.f32 0.0, %v4118
        %v4120 = vpop.f32.mrb[0].mxu0
        %4121 = vmatprep.mubr.bf16.mxu0 0
        %4122 = vmatmul.mubr.bf16.gmra.mrb[0].mxu0 %v4012
        %v4123 = vpop.f32.mrb[0].mxu0
        %v4124 = vadd.f32 0.0, %v4123
        %v4125 = vpop.f32.mrb[0].mxu0
        %v4126 = vpop.f32.mrb[0].mxu0
        %v4127 = vadd.f32 0.0, %v4126
        %v4128 = vpop.f32.mrb[0].mxu0
        %4129 = vmatprep.mubr.bf16.mxu0 0
        %4130 = vmatmul.mubr.bf16.gmra.mrb[0].mxu0 %v4015
        %v4131 = vpop.f32.mrb[0].mxu0
        %v4132 = vadd.f32 0.0, %v4131
        %v4133 = vpop.f32.mrb[0].mxu0
        %v4134 = vpop.f32.mrb[0].mxu0
        %v4135 = vadd.f32 0.0, %v4134
        %v4136 = vpop.f32.mrb[0].mxu0
        %4137 = vmatprep.mubr.bf16.mxu0 0
        %4138 = vmatmul.mubr.bf16.gmra.mrb[0].mxu0 %v4018
        %v4139 = vpop.f32.mrb[0].mxu0
        %v4140 = vadd.f32 0.0, %v4139
        %v4141 = vpop.f32.mrb[0].mxu0
        %v4142 = vpop.f32.mrb[0].mxu0
        %v4143 = vadd.f32 0.0, %v4142
        %v4144 = vpop.f32.mrb[0].mxu0
        %4145 = vmatprep.mubr.bf16.mxu0 0
        %4146 = vmatmul.mubr.bf16.gmra.mrb[0].mxu0 %v4021
        %v4147 = vpop.f32.mrb[0].mxu0
        %v4148 = vadd.f32 0.0, %v4147
        %v4149 = vpop.f32.mrb[0].mxu0
        %v4150 = vpop.f32.mrb[0].mxu0
        %v4151 = vadd.f32 0.0, %v4150
        %v4152 = vpop.f32.mrb[0].mxu0
        %4153 = vmatprep.mubr.bf16.mxu0 0
        %4154 = vmatmul.mubr.bf16.gmra.mrb[0].mxu0 %v4024
        %v4155 = vpop.f32.mrb[0].mxu0
        %v4156 = vadd.f32 0.0, %v4155
        %v4157 = vpop.f32.mrb[0].mxu0
        %v4158 = vpop.f32.mrb[0].mxu0
        %v4159 = vadd.f32 0.0, %v4158
        %v4160 = vpop.f32.mrb[0].mxu0
        %4161 = vmatprep.mubr.bf16.mxu0 0
        %4162 = vmatmul.mubr.bf16.gmra.mrb[0].mxu0 %v4027
        %v4163 = vpop.f32.mrb[0].mxu0
        %v4164 = vadd.f32 0.0, %v4163
        %v4165 = vpop.f32.mrb[0].mxu0
        %v4166 = vpop.f32.mrb[0].mxu0
        %v4167 = vadd.f32 0.0, %v4166
        %v4168 = vpop.f32.mrb[0].mxu0
        %4169 = vmatprep.mubr.bf16.mxu0 0
        %4170 = vmatmul.mubr.bf16.gmra.mrb[0].mxu0 %v4030
        %v4171 = vpop.f32.mrb[0].mxu0
        %v4172 = vadd.f32 0.0, %v4171
        %v4173 = vpop.f32.mrb[0].mxu0
        %v4174 = vpop.f32.mrb[0].mxu0
        %v4175 = vadd.f32 0.0, %v4174
        %v4176 = vpop.f32.mrb[0].mxu0
        %4177 = vmatprep.mubr.bf16.mxu0 0
        %4178 = vmatmul.mubr.bf16.gmra.mrb[0].mxu0 %v4033
        %v4179 = vpop.f32.mrb[0].mxu0
        %v4180 = vadd.f32 0.0, %v4179
        %v4181 = vpop.f32.mrb[0].mxu0
        %v4182 = vpop.f32.mrb[0].mxu0
        %v4183 = vadd.f32 0.0, %v4182
        %v4184 = vpop.f32.mrb[0].mxu0
        %4185 = vmatprep.mubr.bf16.mxu0 0
        %4186 = vmatmul.mubr.bf16.gmra.mrb[0].mxu0 %v4036
        %v4187 = vpop.f32.mrb[0].mxu0
        %v4188 = vadd.f32 0.0, %v4187
        %v4189 = vpop.f32.mrb[0].mxu0
        %v4190 = vpop.f32.mrb[0].mxu0
        %v4191 = vadd.f32 0.0, %v4190
        %v4192 = vpop.f32.mrb[0].mxu0
        %4193 = vmatprep.mubr.bf16.mxu0 0
        %4194 = vmatmul.mubr.bf16.gmra.mrb[0].mxu0 %v4039
        %v4195 = vpop.f32.mrb[0].mxu0
        %v4196 = vadd.f32 0.0, %v4195
        %v4197 = vpop.f32.mrb[0].mxu0
        %v4198 = vpop.f32.mrb[0].mxu0
        %v4199 = vadd.f32 0.0, %v4198
        %v4200 = vpop.f32.mrb[0].mxu0
        %4201 = vdwg.mxu0
        %v4210 = vunpack.c.l.b16 %v3936
        %v4211 = vunpack.c.l.b16 %v3937
        %v4212 = vunpack.c.l.b16 %v3938
        %v4213 = vunpack.c.l.b16 %v3939
        %v4214 = vunpack.c.l.b16 %v3940
        %v4215 = vunpack.c.l.b16 %v3941
        %v4216 = vunpack.c.l.b16 %v3942
        %v4217 = vunpack.c.l.b16 %v3943
        %v4218 = vpack.c.b16 %v4211, %v4210
        %v4219 = vpack.c.b16 %v4213, %v4212
        %v4220 = vpack.c.b16 %v4215, %v4214
        %v4221 = vpack.c.b16 %v4217, %v4216
        %v4227 = vsel %vm480, %v3919, 0
        %v4230 = vsel %vm480, %v3920, 0
        %v4233 = vsel %vm480, %v3921, 0
        %v4236 = vsel %vm480, %v3922, 0
        %v4239 = vsel %vm480, %v3923, 0
        %v4242 = vsel %vm480, %v3924, 0
        %v4245 = vsel %vm480, %v3925, 0
        %v4248 = vsel %vm480, %v3926, 0
        %v4251 = vsel %vm480, %v3927, 0
        %v4254 = vsel %vm480, %v3928, 0
        %v4257 = vsel %vm480, %v3929, 0
        %v4260 = vsel %vm480, %v3930, 0
        %v4263 = vsel %vm480, %v3931, 0
        %v4266 = vsel %vm480, %v3932, 0
        %v4269 = vsel %vm480, %v3933, 0
        %v4272 = vsel %vm480, %v3934, 0
        %4274 = vmatprep.subr.bf16.mxu0 0
        %4275 = vmatpush1.bf16.msra.mxu0 %v4218
        %4276 = vmatprep.subr.bf16.mxu0 0
        %4277 = vmatpush1.bf16.msra.mxu0 %v4219
        %4278 = vmatprep.subr.bf16.mxu0 0
        %4279 = vmatpush1.bf16.msra.mxu0 %v4220
        %4280 = vmatprep.subr.bf16.mxu0 0
        %4281 = vmatpush1.bf16.msra.mxu0 %v4221
        %4282 = vmatprep.subr.bf16.mxu0 0
        %4283 = vmatpush1.bf16.msra.mxu0 0
        %4284 = vmatprep.subr.bf16.mxu0 0
        %4285 = vmatpush1.bf16.msra.mxu0 0
        %4286 = vmatprep.subr.bf16.mxu0 0
        %4287 = vmatpush1.bf16.msra.mxu0 0
        %4288 = vmatprep.subr.bf16.mxu0 0
        %4289 = vmatpush1.bf16.msra.mxu0 0
        %4290 = vmatprep.subr.bf16.mxu0 0
        %4291 = vmatpush1.bf16.msra.mxu0 0
        %4292 = vmatprep.subr.bf16.mxu0 0
        %4293 = vmatpush1.bf16.msra.mxu0 0
        %4294 = vmatprep.subr.bf16.mxu0 0
        %4295 = vmatpush1.bf16.msra.mxu0 0
        %4296 = vmatprep.subr.bf16.mxu0 0
        %4297 = vmatpush1.bf16.msra.mxu0 0
        %4298 = vmatprep.subr.bf16.mxu0 0
        %4299 = vmatpush1.bf16.msra.mxu0 0
        %4300 = vmatprep.subr.bf16.mxu0 0
        %4301 = vmatpush1.bf16.msra.mxu0 0
        %4302 = vmatprep.subr.bf16.mxu0 0
        %4303 = vmatpush1.bf16.msra.mxu0 0
        %4304 = vmatprep.subr.bf16.mxu0 0
        %4305 = vmatpush1.bf16.msra.mxu0 0
        %4306 = vmatprep.mubr.bf16.mxu0 0
        %4307 = vmatmul.mubr.bf16.gmra.mrb[0].mxu0 %v4227
        %v4308 = vpop.f32.mrb[0].mxu0
        %v4309 = vadd.f32 %v4076, %v4308
        %v4310 = vpop.f32.mrb[0].mxu0
        %v4311 = vpop.f32.mrb[0].mxu0
        %v4312 = vadd.f32 %v4079, %v4311
        %v4313 = vpop.f32.mrb[0].mxu0
        %4314 = vmatprep.mubr.bf16.mxu0 0
        %4315 = vmatmul.mubr.bf16.gmra.mrb[0].mxu0 %v4230
        %v4316 = vpop.f32.mrb[0].mxu0
        %v4317 = vadd.f32 %v4084, %v4316
        %v4318 = vpop.f32.mrb[0].mxu0
        %v4319 = vpop.f32.mrb[0].mxu0
        %v4320 = vadd.f32 %v4087, %v4319
        %v4321 = vpop.f32.mrb[0].mxu0
        %4322 = vmatprep.mubr.bf16.mxu0 0
        %4323 = vmatmul.mubr.bf16.gmra.mrb[0].mxu0 %v4233
        %v4324 = vpop.f32.mrb[0].mxu0
        %v4325 = vadd.f32 %v4092, %v4324
        %v4326 = vpop.f32.mrb[0].mxu0
        %v4327 = vpop.f32.mrb[0].mxu0
        %v4328 = vadd.f32 %v4095, %v4327
        %v4329 = vpop.f32.mrb[0].mxu0
        %4330 = vmatprep.mubr.bf16.mxu0 0
        %4331 = vmatmul.mubr.bf16.gmra.mrb[0].mxu0 %v4236
        %v4332 = vpop.f32.mrb[0].mxu0
        %v4333 = vadd.f32 %v4100, %v4332
        %v4334 = vpop.f32.mrb[0].mxu0
        %v4335 = vpop.f32.mrb[0].mxu0
        %v4336 = vadd.f32 %v4103, %v4335
        %v4337 = vpop.f32.mrb[0].mxu0
        %4338 = vmatprep.mubr.bf16.mxu0 0
        %4339 = vmatmul.mubr.bf16.gmra.mrb[0].mxu0 %v4239
        %v4340 = vpop.f32.mrb[0].mxu0
        %v4341 = vadd.f32 %v4108, %v4340
        %v4342 = vpop.f32.mrb[0].mxu0
        %v4343 = vpop.f32.mrb[0].mxu0
        %v4344 = vadd.f32 %v4111, %v4343
        %v4345 = vpop.f32.mrb[0].mxu0
        %4346 = vmatprep.mubr.bf16.mxu0 0
        %4347 = vmatmul.mubr.bf16.gmra.mrb[0].mxu0 %v4242
        %v4348 = vpop.f32.mrb[0].mxu0
        %v4349 = vadd.f32 %v4116, %v4348
        %v4350 = vpop.f32.mrb[0].mxu0
        %v4351 = vpop.f32.mrb[0].mxu0
        %v4352 = vadd.f32 %v4119, %v4351
        %v4353 = vpop.f32.mrb[0].mxu0
        %4354 = vmatprep.mubr.bf16.mxu0 0
        %4355 = vmatmul.mubr.bf16.gmra.mrb[0].mxu0 %v4245
        %v4356 = vpop.f32.mrb[0].mxu0
        %v4357 = vadd.f32 %v4124, %v4356
        %v4358 = vpop.f32.mrb[0].mxu0
        %v4359 = vpop.f32.mrb[0].mxu0
        %v4360 = vadd.f32 %v4127, %v4359
        %v4361 = vpop.f32.mrb[0].mxu0
        %4362 = vmatprep.mubr.bf16.mxu0 0
        %4363 = vmatmul.mubr.bf16.gmra.mrb[0].mxu0 %v4248
        %v4364 = vpop.f32.mrb[0].mxu0
        %v4365 = vadd.f32 %v4132, %v4364
        %v4366 = vpop.f32.mrb[0].mxu0
        %v4367 = vpop.f32.mrb[0].mxu0
        %v4368 = vadd.f32 %v4135, %v4367
        %v4369 = vpop.f32.mrb[0].mxu0
        %4370 = vmatprep.mubr.bf16.mxu0 0
        %4371 = vmatmul.mubr.bf16.gmra.mrb[0].mxu0 %v4251
        %v4372 = vpop.f32.mrb[0].mxu0
        %v4373 = vadd.f32 %v4140, %v4372
        %v4374 = vpop.f32.mrb[0].mxu0
        %v4375 = vpop.f32.mrb[0].mxu0
        %v4376 = vadd.f32 %v4143, %v4375
        %v4377 = vpop.f32.mrb[0].mxu0
        %4378 = vmatprep.mubr.bf16.mxu0 0
        %4379 = vmatmul.mubr.bf16.gmra.mrb[0].mxu0 %v4254
        %v4380 = vpop.f32.mrb[0].mxu0
        %v4381 = vadd.f32 %v4148, %v4380
        %v4382 = vpop.f32.mrb[0].mxu0
        %v4383 = vpop.f32.mrb[0].mxu0
        %v4384 = vadd.f32 %v4151, %v4383
        %v4385 = vpop.f32.mrb[0].mxu0
        %4386 = vmatprep.mubr.bf16.mxu0 0
        %4387 = vmatmul.mubr.bf16.gmra.mrb[0].mxu0 %v4257
        %v4388 = vpop.f32.mrb[0].mxu0
        %v4389 = vadd.f32 %v4156, %v4388
        %v4390 = vpop.f32.mrb[0].mxu0
        %v4391 = vpop.f32.mrb[0].mxu0
        %v4392 = vadd.f32 %v4159, %v4391
        %v4393 = vpop.f32.mrb[0].mxu0
        %4394 = vmatprep.mubr.bf16.mxu0 0
        %4395 = vmatmul.mubr.bf16.gmra.mrb[0].mxu0 %v4260
        %v4396 = vpop.f32.mrb[0].mxu0
        %v4397 = vadd.f32 %v4164, %v4396
        %v4398 = vpop.f32.mrb[0].mxu0
        %v4399 = vpop.f32.mrb[0].mxu0
        %v4400 = vadd.f32 %v4167, %v4399
        %v4401 = vpop.f32.mrb[0].mxu0
        %4402 = vmatprep.mubr.bf16.mxu0 0
        %4403 = vmatmul.mubr.bf16.gmra.mrb[0].mxu0 %v4263
        %v4404 = vpop.f32.mrb[0].mxu0
        %v4405 = vadd.f32 %v4172, %v4404
        %v4406 = vpop.f32.mrb[0].mxu0
        %v4407 = vpop.f32.mrb[0].mxu0
        %v4408 = vadd.f32 %v4175, %v4407
        %v4409 = vpop.f32.mrb[0].mxu0
        %4410 = vmatprep.mubr.bf16.mxu0 0
        %4411 = vmatmul.mubr.bf16.gmra.mrb[0].mxu0 %v4266
        %v4412 = vpop.f32.mrb[0].mxu0
        %v4413 = vadd.f32 %v4180, %v4412
        %v4414 = vpop.f32.mrb[0].mxu0
        %v4415 = vpop.f32.mrb[0].mxu0
        %v4416 = vadd.f32 %v4183, %v4415
        %v4417 = vpop.f32.mrb[0].mxu0
        %4418 = vmatprep.mubr.bf16.mxu0 0
        %4419 = vmatmul.mubr.bf16.gmra.mrb[0].mxu0 %v4269
        %v4420 = vpop.f32.mrb[0].mxu0
        %v4421 = vadd.f32 %v4188, %v4420
        %v4422 = vpop.f32.mrb[0].mxu0
        %v4423 = vpop.f32.mrb[0].mxu0
        %v4424 = vadd.f32 %v4191, %v4423
        %v4425 = vpop.f32.mrb[0].mxu0
        %4426 = vmatprep.mubr.bf16.mxu0 0
        %4427 = vmatmul.mubr.bf16.gmra.mrb[0].mxu0 %v4272
        %v4428 = vpop.f32.mrb[0].mxu0
        %v4429 = vadd.f32 %v4196, %v4428
        %v4430 = vpop.f32.mrb[0].mxu0
        %v4431 = vpop.f32.mrb[0].mxu0
        %v4432 = vadd.f32 %v4199, %v4431
        %v4433 = vpop.f32.mrb[0].mxu0
        %4434 = vdwg.mxu0
        %v4435 = vld [vmem:[%s3 + $0x3] sm:$0x1]
        %v4436 = vlaneseq
        %v4437 = vshrl.u32 %v4436, 7
        %v4438 = vsub.s32 0, %v4437
        %v4439 = vrot.slane %v4435, %v4438
        %v4440 = vadd.f32 %v4309, %v4439
        %v4441 = vadd.f32 %v4312, %v4439
        %v4442 = vadd.f32 %v4317, %v4439
        %v4443 = vadd.f32 %v4320, %v4439
        %v4444 = vadd.f32 %v4325, %v4439
        %v4445 = vadd.f32 %v4328, %v4439
        %v4446 = vadd.f32 %v4333, %v4439
        %v4447 = vadd.f32 %v4336, %v4439
        %v4448 = vadd.f32 %v4341, %v4439
        %v4449 = vadd.f32 %v4344, %v4439
        %v4450 = vadd.f32 %v4349, %v4439
        %v4451 = vadd.f32 %v4352, %v4439
        %v4452 = vadd.f32 %v4357, %v4439
        %v4453 = vadd.f32 %v4360, %v4439
        %v4454 = vadd.f32 %v4365, %v4439
        %v4455 = vadd.f32 %v4368, %v4439
        %v4456 = vadd.f32 %v4373, %v4439
        %v4457 = vadd.f32 %v4376, %v4439
        %v4458 = vadd.f32 %v4381, %v4439
        %v4459 = vadd.f32 %v4384, %v4439
        %v4460 = vadd.f32 %v4389, %v4439
        %v4461 = vadd.f32 %v4392, %v4439
        %v4462 = vadd.f32 %v4397, %v4439
        %v4463 = vadd.f32 %v4400, %v4439
        %v4464 = vadd.f32 %v4405, %v4439
        %v4465 = vadd.f32 %v4408, %v4439
        %v4466 = vadd.f32 %v4413, %v4439
        %v4467 = vadd.f32 %v4416, %v4439
        %v4468 = vadd.f32 %v4421, %v4439
        %v4469 = vadd.f32 %v4424, %v4439
        %v4470 = vadd.f32 %v4429, %v4439
        %v4471 = vadd.f32 %v4432, %v4439
        %v4472 = vpack.c.bf16 %v4441, %v4440
        %v4473 = vpack.c.bf16 %v4443, %v4442
        %v4474 = vpack.c.bf16 %v4445, %v4444
        %v4475 = vpack.c.bf16 %v4447, %v4446
        %v4476 = vpack.c.bf16 %v4449, %v4448
        %v4477 = vpack.c.bf16 %v4451, %v4450
        %v4478 = vpack.c.bf16 %v4453, %v4452
        %v4479 = vpack.c.bf16 %v4455, %v4454
        %v4480 = vpack.c.bf16 %v4457, %v4456
        %v4481 = vpack.c.bf16 %v4459, %v4458
        %v4482 = vpack.c.bf16 %v4461, %v4460
        %v4483 = vpack.c.bf16 %v4463, %v4462
        %v4484 = vpack.c.bf16 %v4465, %v4464
        %v4485 = vpack.c.bf16 %v4467, %v4466
        %v4486 = vpack.c.bf16 %v4469, %v4468
        %v4487 = vpack.c.bf16 %v4471, %v4470
        %s4488 = scalar_lea.vmem %s4, 96
        %v4489 = vld [vmem:[%s4488] sm:$0xf]
        %v4490 = vld [vmem:[%s4488 + $0x4] sm:$0xf]
        %v4491 = vld [vmem:[%s4488 + $0x8] sm:$0xf]
        %v4492 = vld [vmem:[%s4488 + $0xc] sm:$0xf]
        %v4493 = vld [vmem:[%s4488 + $0x10] sm:$0xf]
        %v4494 = vld [vmem:[%s4488 + $0x14] sm:$0xf]
        %v4495 = vld [vmem:[%s4488 + $0x18] sm:$0xf]
        %v4496 = vld [vmem:[%s4488 + $0x1c] sm:$0xf]
        %v4505 = vunpack.c.l.b16 %v4489
        %v4506 = vunpack.c.l.b16 %v4490
        %v4507 = vunpack.c.l.b16 %v4491
        %v4508 = vunpack.c.l.b16 %v4492
        %v4509 = vunpack.c.l.b16 %v4493
        %v4510 = vunpack.c.l.b16 %v4494
        %v4511 = vunpack.c.l.b16 %v4495
        %v4512 = vunpack.c.l.b16 %v4496
        %v4513 = vpack.c.b16 %v4506, %v4505
        %v4514 = vpack.c.b16 %v4508, %v4507
        %v4515 = vpack.c.b16 %v4510, %v4509
        %v4516 = vpack.c.b16 %v4512, %v4511
        %v4522 = vsel %vm480, %v4472, 0
        %v4525 = vsel %vm480, %v4473, 0
        %v4528 = vsel %vm480, %v4474, 0
        %v4531 = vsel %vm480, %v4475, 0
        %v4534 = vsel %vm480, %v4476, 0
        %v4537 = vsel %vm480, %v4477, 0
        %v4540 = vsel %vm480, %v4478, 0
        %v4543 = vsel %vm480, %v4479, 0
        %v4546 = vsel %vm480, %v4480, 0
        %v4549 = vsel %vm480, %v4481, 0
        %v4552 = vsel %vm480, %v4482, 0
        %v4555 = vsel %vm480, %v4483, 0
        %v4558 = vsel %vm480, %v4484, 0
        %v4561 = vsel %vm480, %v4485, 0
        %v4564 = vsel %vm480, %v4486, 0
        %v4567 = vsel %vm480, %v4487, 0
        %4569 = vmatprep.subr.bf16.mxu0 0
        %4570 = vmatpush1.bf16.msra.mxu0 %v4513
        %4571 = vmatprep.subr.bf16.mxu0 0
        %4572 = vmatpush1.bf16.msra.mxu0 %v4514
        %4573 = vmatprep.subr.bf16.mxu0 0
        %4574 = vmatpush1.bf16.msra.mxu0 %v4515
        %4575 = vmatprep.subr.bf16.mxu0 0
        %4576 = vmatpush1.bf16.msra.mxu0 %v4516
        %4577 = vmatprep.subr.bf16.mxu0 0
        %4578 = vmatpush1.bf16.msra.mxu0 0
        %4579 = vmatprep.subr.bf16.mxu0 0
        %4580 = vmatpush1.bf16.msra.mxu0 0
        %4581 = vmatprep.subr.bf16.mxu0 0
        %4582 = vmatpush1.bf16.msra.mxu0 0
        %4583 = vmatprep.subr.bf16.mxu0 0
        %4584 = vmatpush1.bf16.msra.mxu0 0
        %4585 = vmatprep.subr.bf16.mxu0 0
        %4586 = vmatpush1.bf16.msra.mxu0 0
        %4587 = vmatprep.subr.bf16.mxu0 0
        %4588 = vmatpush1.bf16.msra.mxu0 0
        %4589 = vmatprep.subr.bf16.mxu0 0
        %4590 = vmatpush1.bf16.msra.mxu0 0
        %4591 = vmatprep.subr.bf16.mxu0 0
        %4592 = vmatpush1.bf16.msra.mxu0 0
        %4593 = vmatprep.subr.bf16.mxu0 0
        %4594 = vmatpush1.bf16.msra.mxu0 0
        %4595 = vmatprep.subr.bf16.mxu0 0
        %4596 = vmatpush1.bf16.msra.mxu0 0
        %4597 = vmatprep.subr.bf16.mxu0 0
        %4598 = vmatpush1.bf16.msra.mxu0 0
        %4599 = vmatprep.subr.bf16.mxu0 0
        %4600 = vmatpush1.bf16.msra.mxu0 0
        %4601 = vmatprep.mubr.bf16.mxu0 0
        %4602 = vmatmul.mubr.bf16.gmra.mrb[0].mxu0 %v4522
        %v4603 = vpop.f32.mrb[0].mxu0
        %v4604 = vadd.f32 0.0, %v4603
        %v4605 = vpop.f32.mrb[0].mxu0
        %v4606 = vpop.f32.mrb[0].mxu0
        %v4607 = vadd.f32 0.0, %v4606
        %v4608 = vpop.f32.mrb[0].mxu0
        %4609 = vmatprep.mubr.bf16.mxu0 0
        %4610 = vmatmul.mubr.bf16.gmra.mrb[0].mxu0 %v4525
        %v4611 = vpop.f32.mrb[0].mxu0
        %v4612 = vadd.f32 0.0, %v4611
        %v4613 = vpop.f32.mrb[0].mxu0
        %v4614 = vpop.f32.mrb[0].mxu0
        %v4615 = vadd.f32 0.0, %v4614
        %v4616 = vpop.f32.mrb[0].mxu0
        %4617 = vmatprep.mubr.bf16.mxu0 0
        %4618 = vmatmul.mubr.bf16.gmra.mrb[0].mxu0 %v4528
        %v4619 = vpop.f32.mrb[0].mxu0
        %v4620 = vadd.f32 0.0, %v4619
        %v4621 = vpop.f32.mrb[0].mxu0
        %v4622 = vpop.f32.mrb[0].mxu0
        %v4623 = vadd.f32 0.0, %v4622
        %v4624 = vpop.f32.mrb[0].mxu0
        %4625 = vmatprep.mubr.bf16.mxu0 0
        %4626 = vmatmul.mubr.bf16.gmra.mrb[0].mxu0 %v4531
        %v4627 = vpop.f32.mrb[0].mxu0
        %v4628 = vadd.f32 0.0, %v4627
        %v4629 = vpop.f32.mrb[0].mxu0
        %v4630 = vpop.f32.mrb[0].mxu0
        %v4631 = vadd.f32 0.0, %v4630
        %v4632 = vpop.f32.mrb[0].mxu0
        %4633 = vmatprep.mubr.bf16.mxu0 0
        %4634 = vmatmul.mubr.bf16.gmra.mrb[0].mxu0 %v4534
        %v4635 = vpop.f32.mrb[0].mxu0
        %v4636 = vadd.f32 0.0, %v4635
        %v4637 = vpop.f32.mrb[0].mxu0
        %v4638 = vpop.f32.mrb[0].mxu0
        %v4639 = vadd.f32 0.0, %v4638
        %v4640 = vpop.f32.mrb[0].mxu0
        %4641 = vmatprep.mubr.bf16.mxu0 0
        %4642 = vmatmul.mubr.bf16.gmra.mrb[0].mxu0 %v4537
        %v4643 = vpop.f32.mrb[0].mxu0
        %v4644 = vadd.f32 0.0, %v4643
        %v4645 = vpop.f32.mrb[0].mxu0
        %v4646 = vpop.f32.mrb[0].mxu0
        %v4647 = vadd.f32 0.0, %v4646
        %v4648 = vpop.f32.mrb[0].mxu0
        %4649 = vmatprep.mubr.bf16.mxu0 0
        %4650 = vmatmul.mubr.bf16.gmra.mrb[0].mxu0 %v4540
        %v4651 = vpop.f32.mrb[0].mxu0
        %v4652 = vadd.f32 0.0, %v4651
        %v4653 = vpop.f32.mrb[0].mxu0
        %v4654 = vpop.f32.mrb[0].mxu0
        %v4655 = vadd.f32 0.0, %v4654
        %v4656 = vpop.f32.mrb[0].mxu0
        %4657 = vmatprep.mubr.bf16.mxu0 0
        %4658 = vmatmul.mubr.bf16.gmra.mrb[0].mxu0 %v4543
        %v4659 = vpop.f32.mrb[0].mxu0
        %v4660 = vadd.f32 0.0, %v4659
        %v4661 = vpop.f32.mrb[0].mxu0
        %v4662 = vpop.f32.mrb[0].mxu0
        %v4663 = vadd.f32 0.0, %v4662
        %v4664 = vpop.f32.mrb[0].mxu0
        %4665 = vmatprep.mubr.bf16.mxu0 0
        %4666 = vmatmul.mubr.bf16.gmra.mrb[0].mxu0 %v4546
        %v4667 = vpop.f32.mrb[0].mxu0
        %v4668 = vadd.f32 0.0, %v4667
        %v4669 = vpop.f32.mrb[0].mxu0
        %v4670 = vpop.f32.mrb[0].mxu0
        %v4671 = vadd.f32 0.0, %v4670
        %v4672 = vpop.f32.mrb[0].mxu0
        %4673 = vmatprep.mubr.bf16.mxu0 0
        %4674 = vmatmul.mubr.bf16.gmra.mrb[0].mxu0 %v4549
        %v4675 = vpop.f32.mrb[0].mxu0
        %v4676 = vadd.f32 0.0, %v4675
        %v4677 = vpop.f32.mrb[0].mxu0
        %v4678 = vpop.f32.mrb[0].mxu0
        %v4679 = vadd.f32 0.0, %v4678
        %v4680 = vpop.f32.mrb[0].mxu0
        %4681 = vmatprep.mubr.bf16.mxu0 0
        %4682 = vmatmul.mubr.bf16.gmra.mrb[0].mxu0 %v4552
        %v4683 = vpop.f32.mrb[0].mxu0
        %v4684 = vadd.f32 0.0, %v4683
        %v4685 = vpop.f32.mrb[0].mxu0
        %v4686 = vpop.f32.mrb[0].mxu0
        %v4687 = vadd.f32 0.0, %v4686
        %v4688 = vpop.f32.mrb[0].mxu0
        %4689 = vmatprep.mubr.bf16.mxu0 0
        %4690 = vmatmul.mubr.bf16.gmra.mrb[0].mxu0 %v4555
        %v4691 = vpop.f32.mrb[0].mxu0
        %v4692 = vadd.f32 0.0, %v4691
        %v4693 = vpop.f32.mrb[0].mxu0
        %v4694 = vpop.f32.mrb[0].mxu0
        %v4695 = vadd.f32 0.0, %v4694
        %v4696 = vpop.f32.mrb[0].mxu0
        %4697 = vmatprep.mubr.bf16.mxu0 0
        %4698 = vmatmul.mubr.bf16.gmra.mrb[0].mxu0 %v4558
        %v4699 = vpop.f32.mrb[0].mxu0
        %v4700 = vadd.f32 0.0, %v4699
        %v4701 = vpop.f32.mrb[0].mxu0
        %v4702 = vpop.f32.mrb[0].mxu0
        %v4703 = vadd.f32 0.0, %v4702
        %v4704 = vpop.f32.mrb[0].mxu0
        %4705 = vmatprep.mubr.bf16.mxu0 0
        %4706 = vmatmul.mubr.bf16.gmra.mrb[0].mxu0 %v4561
        %v4707 = vpop.f32.mrb[0].mxu0
        %v4708 = vadd.f32 0.0, %v4707
        %v4709 = vpop.f32.mrb[0].mxu0
        %v4710 = vpop.f32.mrb[0].mxu0
        %v4711 = vadd.f32 0.0, %v4710
        %v4712 = vpop.f32.mrb[0].mxu0
        %4713 = vmatprep.mubr.bf16.mxu0 0
        %4714 = vmatmul.mubr.bf16.gmra.mrb[0].mxu0 %v4564
        %v4715 = vpop.f32.mrb[0].mxu0
        %v4716 = vadd.f32 0.0, %v4715
        %v4717 = vpop.f32.mrb[0].mxu0
        %v4718 = vpop.f32.mrb[0].mxu0
        %v4719 = vadd.f32 0.0, %v4718
        %v4720 = vpop.f32.mrb[0].mxu0
        %4721 = vmatprep.mubr.bf16.mxu0 0
        %4722 = vmatmul.mubr.bf16.gmra.mrb[0].mxu0 %v4567
        %v4723 = vpop.f32.mrb[0].mxu0
        %v4724 = vadd.f32 0.0, %v4723
        %v4725 = vpop.f32.mrb[0].mxu0
        %v4726 = vpop.f32.mrb[0].mxu0
        %v4727 = vadd.f32 0.0, %v4726
        %v4728 = vpop.f32.mrb[0].mxu0
        %4729 = vdwg.mxu0
        %v4730 = vadd.f32 %v3565, %v4604
        %v4731 = vadd.f32 %v3566, %v4607
        %v4732 = vadd.f32 %v3567, %v4612
        %v4733 = vadd.f32 %v3568, %v4615
        %v4734 = vadd.f32 %v3569, %v4620
        %v4735 = vadd.f32 %v3570, %v4623
        %v4736 = vadd.f32 %v3571, %v4628
        %v4737 = vadd.f32 %v3572, %v4631
        %v4738 = vadd.f32 %v3573, %v4636
        %v4739 = vadd.f32 %v3574, %v4639
        %v4740 = vadd.f32 %v3575, %v4644
        %v4741 = vadd.f32 %v3576, %v4647
        %v4742 = vadd.f32 %v3577, %v4652
        %v4743 = vadd.f32 %v3578, %v4655
        %v4744 = vadd.f32 %v3579, %v4660
        %v4745 = vadd.f32 %v3580, %v4663
        %v4746 = vadd.f32 %v3581, %v4668
        %v4747 = vadd.f32 %v3582, %v4671
        %v4748 = vadd.f32 %v3583, %v4676
        %v4749 = vadd.f32 %v3584, %v4679
        %v4750 = vadd.f32 %v3585, %v4684
        %v4751 = vadd.f32 %v3586, %v4687
        %v4752 = vadd.f32 %v3587, %v4692
        %v4753 = vadd.f32 %v3588, %v4695
        %v4754 = vadd.f32 %v3589, %v4700
        %v4755 = vadd.f32 %v3590, %v4703
        %v4756 = vadd.f32 %v3591, %v4708
        %v4757 = vadd.f32 %v3592, %v4711
        %v4758 = vadd.f32 %v3593, %v4716
        %v4759 = vadd.f32 %v3594, %v4719
        %v4760 = vadd.f32 %v3595, %v4724
        %v4761 = vadd.f32 %v3596, %v4727
        %v4762 = vld [vmem:[%s3 + $0x4] sm:$0x1]
        %v4763 = vlaneseq
        %v4764 = vshrl.u32 %v4763, 7
        %v4765 = vsub.s32 0, %v4764
        %v4766 = vrot.slane %v4762, %v4765
        %v4767 = vadd.f32 %v4730, %v4766
        %v4768 = vadd.f32 %v4731, %v4766
        %v4769 = vadd.f32 %v4732, %v4766
        %v4770 = vadd.f32 %v4733, %v4766
        %v4771 = vadd.f32 %v4734, %v4766
        %v4772 = vadd.f32 %v4735, %v4766
        %v4773 = vadd.f32 %v4736, %v4766
        %v4774 = vadd.f32 %v4737, %v4766
        %v4775 = vadd.f32 %v4738, %v4766
        %v4776 = vadd.f32 %v4739, %v4766
        %v4777 = vadd.f32 %v4740, %v4766
        %v4778 = vadd.f32 %v4741, %v4766
        %v4779 = vadd.f32 %v4742, %v4766
        %v4780 = vadd.f32 %v4743, %v4766
        %v4781 = vadd.f32 %v4744, %v4766
        %v4782 = vadd.f32 %v4745, %v4766
        %v4783 = vadd.f32 %v4746, %v4766
        %v4784 = vadd.f32 %v4747, %v4766
        %v4785 = vadd.f32 %v4748, %v4766
        %v4786 = vadd.f32 %v4749, %v4766
        %v4787 = vadd.f32 %v4750, %v4766
        %v4788 = vadd.f32 %v4751, %v4766
        %v4789 = vadd.f32 %v4752, %v4766
        %v4790 = vadd.f32 %v4753, %v4766
        %v4791 = vadd.f32 %v4754, %v4766
        %v4792 = vadd.f32 %v4755, %v4766
        %v4793 = vadd.f32 %v4756, %v4766
        %v4794 = vadd.f32 %v4757, %v4766
        %v4795 = vadd.f32 %v4758, %v4766
        %v4796 = vadd.f32 %v4759, %v4766
        %v4797 = vadd.f32 %v4760, %v4766
        %v4798 = vadd.f32 %v4761, %v4766
        %vm4799 = vcmask 7168
        %4800 = vst.msk [vmem:[%s264] sm:$0xff] %vm4799, %v4767
        %4801 = vst.msk [vmem:[%s264 + $0x8] sm:$0xff] %vm4799, %v4768
        %4802 = vst.msk [vmem:[%s264 + $0x10] sm:$0xff] %vm4799, %v4769
        %4803 = vst.msk [vmem:[%s264 + $0x18] sm:$0xff] %vm4799, %v4770
        %4804 = vst.msk [vmem:[%s264 + $0x20] sm:$0xff] %vm4799, %v4771
        %4805 = vst.msk [vmem:[%s264 + $0x28] sm:$0xff] %vm4799, %v4772
        %4806 = vst.msk [vmem:[%s264 + $0x30] sm:$0xff] %vm4799, %v4773
        %4807 = vst.msk [vmem:[%s264 + $0x38] sm:$0xff] %vm4799, %v4774
        %4808 = vst.msk [vmem:[%s264 + $0x40] sm:$0xff] %vm4799, %v4775
        %4809 = vst.msk [vmem:[%s264 + $0x48] sm:$0xff] %vm4799, %v4776
        %4810 = vst.msk [vmem:[%s264 + $0x50] sm:$0xff] %vm4799, %v4777
        %4811 = vst.msk [vmem:[%s264 + $0x58] sm:$0xff] %vm4799, %v4778
        %4812 = vst.msk [vmem:[%s264 + $0x60] sm:$0xff] %vm4799, %v4779
        %4813 = vst.msk [vmem:[%s264 + $0x68] sm:$0xff] %vm4799, %v4780
        %4814 = vst.msk [vmem:[%s264 + $0x70] sm:$0xff] %vm4799, %v4781
        %4815 = vst.msk [vmem:[%s264 + $0x78] sm:$0xff] %vm4799, %v4782
        %4816 = vst.msk [vmem:[%s264 + $0x80] sm:$0xff] %vm4799, %v4783
        %4817 = vst.msk [vmem:[%s264 + $0x88] sm:$0xff] %vm4799, %v4784
        %4818 = vst.msk [vmem:[%s264 + $0x90] sm:$0xff] %vm4799, %v4785
        %4819 = vst.msk [vmem:[%s264 + $0x98] sm:$0xff] %vm4799, %v4786
        %4820 = vst.msk [vmem:[%s264 + $0xa0] sm:$0xff] %vm4799, %v4787
        %4821 = vst.msk [vmem:[%s264 + $0xa8] sm:$0xff] %vm4799, %v4788
        %4822 = vst.msk [vmem:[%s264 + $0xb0] sm:$0xff] %vm4799, %v4789
        %4823 = vst.msk [vmem:[%s264 + $0xb8] sm:$0xff] %vm4799, %v4790
        %4824 = vst.msk [vmem:[%s264 + $0xc0] sm:$0xff] %vm4799, %v4791
        %4825 = vst.msk [vmem:[%s264 + $0xc8] sm:$0xff] %vm4799, %v4792
        %4826 = vst.msk [vmem:[%s264 + $0xd0] sm:$0xff] %vm4799, %v4793
        %4827 = vst.msk [vmem:[%s264 + $0xd8] sm:$0xff] %vm4799, %v4794
        %4828 = vst.msk [vmem:[%s264 + $0xe0] sm:$0xff] %vm4799, %v4795
        %4829 = vst.msk [vmem:[%s264 + $0xe8] sm:$0xff] %vm4799, %v4796
        %4830 = vst.msk [vmem:[%s264 + $0xf0] sm:$0xff] %vm4799, %v4797
        %4831 = vst.msk [vmem:[%s264 + $0xf8] sm:$0xff] %vm4799, %v4798
        %p4832 = scmp.lt.s32.totalorder %s19, 1
        %s4833 = scalar_select %p4832, %s19, 1
        %s4834 = smul.addr %s4833, 32
        %s4835 = smul.addr %s4834, 8
        %s4836 = scalar_lea.vmem %s5, %s4835
        // Predicated region
        $region45: #{tpu_custom_call.1} parent=39 // pred_check
          %p4837 = pneg %p152
        $region46: #{tpu_custom_call.1} parent=39 // pred_check_branch
          %4839 = sbr.rel (%p4837) target = $region48
        $region47: #{tpu_custom_call.1} parent=39 // pred_region
          _
        $region48: #{tpu_custom_call.1} parent=39 // pred_fallthru
          _
      $region40: #{tpu_custom_call.1} parent=5 // pred_fallthru
        _
      %p4840 = scmp.le.s32.totalorder 2, %s14
      // Predicated region
      $region49: #{tpu_custom_call.1} parent=5 // pred_check
        %p4841 = pneg %p4840
      $region50: #{tpu_custom_call.1} parent=5 // pred_check_branch
        %4843 = sbr.rel (%p4841) target = $region52
      $region51: #{tpu_custom_call.1} parent=5 // pred_region
        %s4844 = ssub.s32 %s14, 2
        // Predicated region
        $region53: #{tpu_custom_call.1} parent=51 // pred_check
          %p4845 = pneg %p158
        $region54: #{tpu_custom_call.1} parent=51 // pred_check_branch
          %4847 = sbr.rel (%p4845) target = $region56
        $region55: #{tpu_custom_call.1} parent=51 // pred_region
          %p4848 = scmp.lt.s32.totalorder %s20, 1
          %s4849 = scalar_select %p4848, %s20, 1
          %s4850 = smul.addr %s4849, 32
          %s4851 = smul.addr %s4850, 8
          %s4852 = scalar_lea.vmem %s5, %s4851
        $region56: #{tpu_custom_call.1} parent=51 // pred_fallthru
          _
      $region52: #{tpu_custom_call.1} parent=5 // pred_fallthru
        _
    $region6: #{tpu_custom_call.1} parent=1 // loop_footer
      %s18 = sadd.s32 1, %s14
    $region7: #{tpu_custom_call.1} parent=1 // loop_footer_branch
      %13 = sbr.rel target = $region3
    $region8: #{tpu_custom_call.1} parent=1 // loop_exit
      _
    %4853 = vsyncpa [#allocation3], 1
    %s4854 = scalar_lea.sflag [#allocation3], 1
    %4855 = vsyncpa %s4854, 1

</llo_original>
